<compile_context>
chip_gen: v6e
topology: v6e:2x2x1
jax: 0.10.0
libtpu: 0.0.40
codegen_flags: <defaults>
</compile_context>

<pallas_src>
import numpy as np
import jax
import jax.numpy as jnp
from jax import lax
from jax.experimental import pallas as pl
from jax.experimental.pallas import tpu as pltpu

BN_EPS = 1e-5

# ---------------------------- static geometry ------------------------------
N = 2                                   # batch
C0_IN, C0_OUT, H0, W0 = 3, 8, 16, 16    # layers[0..2]: conv 3->8 on 16x16
HP0, WP0 = H0 + 2, W0 + 2
NPQ0 = N * HP0 * WP0                    # 648

C1_IN, C1_OUT, H1, W1 = 8, 16, 8, 8     # layers[4..5]: conv 8->16 on 8x8
HP1, WP1 = H1 + 2, W1 + 2
NPQ1 = N * HP1 * WP1                    # 200

C2, H2, W2 = 16, 4, 4                   # layer 7 block: 3x conv 16->16 on 4x4
HP2, WP2 = H2 + 2, W2 + 2
NPQ2 = N * HP2 * WP2                    # 72

MARG = 128                              # lane-aligned margin (>= wp+1 everywhere)
K0 = 32                                 # 9*C0_IN = 27, padded to 8-sublane multiple
K1 = 9 * C1_IN                          # 72
K2 = 9 * C2                             # 144
NPIX = H2 * W2                          # 16
NFLAT = C2 * NPIX                       # 256
NCLS = 10
# NOTE: N=2 leaves the deepest stage at only 72 active lanes of each vreg;
# larger batch would be near-free throughput (and would justify a "parallel"
# batch grid axis for v7x's second TensorCore). Kept at grid=(1,) here.


# ------------------------- host-built constant helpers ---------------------
def _pool_selection_matrix(n_batch, hp, wp, hp2, wp2):
    """0/1 matrix: picks the 2x2-block anchors out of the shifted-max map and
    scatters them into the next layer's padded flat layout (borders -> 0)."""
    ho, wo = (hp - 2) // 2, (wp - 2) // 2
    lh = n_batch * hp * wp - wp - 1
    npq2 = n_batch * hp2 * wp2
    sel = np.zeros((lh, npq2), np.float32)
    for n in range(n_batch):
        for yo in range(ho):
            for xo in range(wo):
                src = n * hp * wp + (2 * yo + 1) * wp + (2 * xo + 1)
                dst = n * hp2 * wp2 + (yo + 1) * wp2 + (xo + 1)
                sel[src, dst] = 1.0
    return sel


def _interior_mask(n_batch, hp, wp):
    m = np.zeros((n_batch, hp, wp), np.float32)
    m[:, 1:hp - 1, 1:wp - 1] = 1.0
    return m.reshape(1, n_batch * hp * wp)


def _gather_interior_matrix(n_batch, hp, wp, h, w):
    """(n*hp*wp, n*h*w) 0/1 matrix: outc @ G == interior pixels in (n,y,x) order."""
    g = np.zeros((n_batch * hp * wp, n_batch * h * w), np.float32)
    for n in range(n_batch):
        for y in range(h):
            for x in range(w):
                g[n * hp * wp + (y + 1) * wp + (x + 1), n * h * w + y * w + x] = 1.0
    return g


def _flatten_constants(n_batch, c, hw):
    """Constants that implement torch.flatten(x,1) purely with matmuls:
       rows = S1 @ conv  (replicate each channel row hw times)
       sel  = rows * PMASK (keep only the matching spatial lane per row)
       flatT = sel @ ONESB (per-sample lane sum) -> flatT[c*hw+p, n]."""
    s1 = np.zeros((c * hw, c), np.float32)
    pm = np.zeros((c * hw, n_batch * hw), np.float32)
    ob = np.zeros((n_batch * hw, n_batch), np.float32)
    for cc in range(c):
        s1[cc * hw:(cc + 1) * hw, cc] = 1.0
        for p in range(hw):
            for n in range(n_batch):
                pm[cc * hw + p, n * hw + p] = 1.0
    for n in range(n_batch):
        ob[n * hw:(n + 1) * hw, n] = 1.0
    return s1, pm, ob


# 0/1 matrices are exact in bf16 -> halve the constant DMA, zero accuracy cost.
_SEL1 = jnp.asarray(_pool_selection_matrix(N, HP0, WP0, HP1, WP1)).astype(jnp.bfloat16)
_SEL2 = jnp.asarray(_pool_selection_matrix(N, HP1, WP1, HP2, WP2)).astype(jnp.bfloat16)
_MASK66 = jnp.asarray(_interior_mask(N, HP2, WP2))                       # (1, 72)
_GMAT = jnp.asarray(_gather_interior_matrix(N, HP2, WP2, H2, W2))        # (72, 32)
_s1_np, _pm_np, _ob_np = _flatten_constants(N, C2, NPIX)
_S1M = jnp.asarray(_s1_np)                                               # (256, 16)
_PMASK = jnp.asarray(_pm_np)                                             # (256, 32)
_ONESB = jnp.asarray(_ob_np)                                             # (32, 2)


# ----------------------------- fused Pallas kernel -------------------------
def _fused_forward_kernel(x_ref, w0_ref, s0_ref, sel1_ref, w4_ref, s4_ref,
                          sel2_ref, w7a_ref, s7a_ref, w7b_ref, s7b_ref,
                          w7c_ref, s7c_ref, mask_ref, g_ref, s1_ref,
                          pmask_ref, onesb_ref, wlint_ref, blint_ref,
                          logitsT_ref, convout_ref,
                          stk0, stk1, stk2, apad1, apad2a, apad2b, apad2c):
    f32 = jnp.float32

    # One-time zeroing of regions that are never otherwise written:
    #   * weight-padding rows of the conv-0 tap stack (their weight cols are 0,
    #     but uninitialized VMEM could hold NaN),
    #   * the margin lanes of the padded activation buffers (the [MARG:MARG+NPQ]
    #     interiors are fully overwritten each time; SEL/MASK give zero borders).
    stk0[9 * C0_IN:K0, :] = jnp.zeros((K0 - 9 * C0_IN, NPQ0), f32)
    apad1[:, :MARG] = jnp.zeros((C1_IN, MARG), f32)
    apad1[:, MARG + NPQ1:] = jnp.zeros((C1_IN, MARG), f32)
    for buf in (apad2a, apad2b, apad2c):
        buf[:, :MARG] = jnp.zeros((C2, MARG), f32)
        buf[:, MARG + NPQ2:] = jnp.zeros((C2, MARG), f32)

    def conv(src_ref, stk_ref, cin, wp, npq, w_ref, s_ref):
        """3x3 "same" conv: stack the 9 shifted tap views on sublanes, then one
        fat-K MXU matmul + bias + ReLU. Border lanes of the result are garbage
        (wrapped reads) and must only be consumed through SEL/MASK/G."""
        for t in range(9):
            dh, dw = divmod(t, 3)
            off = MARG + (dh - 1) * wp + (dw - 1)
            stk_ref[t * cin:(t + 1) * cin, :] = src_ref[:, off:off + npq]
        acc = jnp.dot(w_ref[...], stk_ref[...],
                      preferred_element_type=jnp.float32)          # (Cout, npq)
        return jnp.maximum(acc + s_ref[...], 0.0)

    def pool_pack(out_val, sel_ref, wp, npq):
        """2x2/stride-2 max-pool + repack into next padded layout (one matmul).
        SEL is stored bf16 (exact 0/1); promote to f32 for the matmul."""
        v = jnp.maximum(out_val[:, :npq - wp], out_val[:, wp:])
        h = jnp.maximum(v[:, :npq - wp - 1], v[:, 1:])
        return jnp.dot(h, sel_ref[...].astype(f32),
                       preferred_element_type=jnp.float32)

    # layers[0..2]: Conv(3->8) + eval-BN + ReLU (BN folded into w0/s0)
    out0 = conv(x_ref, stk0, C0_IN, WP0, NPQ0, w0_ref, s0_ref)      # (8, 648)

    # layer 3: maxpool 2x2 -> padded input of conv4
    apad1[:, MARG:MARG + NPQ1] = pool_pack(out0, sel1_ref, WP0, NPQ0)

    # layers[4..5]: Conv(8->16) + ReLU
    out4 = conv(apad1, stk1, C1_IN, WP1, NPQ1, w4_ref, s4_ref)      # (16, 200)

    # layer 6: maxpool 2x2 -> padded input of the layer-7 block
    apad2a[:, MARG:MARG + NPQ2] = pool_pack(out4, sel2_ref, WP1, NPQ1)

    # layer 7 block: Conv+ReLU, Conv+ReLU, Conv+ReLU (all 16->16 on 4x4)
    outa = conv(apad2a, stk2, C2, WP2, NPQ2, w7a_ref, s7a_ref)
    apad2b[:, MARG:MARG + NPQ2] = outa * mask_ref[...]
    outb = conv(apad2b, stk2, C2, WP2, NPQ2, w7b_ref, s7b_ref)
    apad2c[:, MARG:MARG + NPQ2] = outb * mask_ref[...]
    outc = conv(apad2c, stk2, C2, WP2, NPQ2, w7c_ref, s7c_ref)      # (16, 72)

    # conv_layer_output: single 0/1-gather matmul (replaces the scalar copy loop)
    conv_feat = jnp.dot(outc, g_ref[...],
                        preferred_element_type=jnp.float32)         # (16, N*16)
    convout_ref[...] = conv_feat

    # torch.flatten(x, 1) + fused Linear(256->32)->Linear(32->10), matmul-only:
    rows = jnp.dot(s1_ref[...], conv_feat,
                   preferred_element_type=jnp.float32)              # (256, 32)
    flatT = jnp.dot(rows * pmask_ref[...], onesb_ref[...],
                    preferred_element_type=jnp.float32)             # (256, N)
    logitsT_ref[...] = (jnp.dot(wlint_ref[...], flatT,
                                preferred_element_type=jnp.float32)
                        + blint_ref[...])                           # (10, N)


# ------------------------------- host wrapper -------------------------------
def _prep_conv_w(w, scale, pad_to=None):
    """OIHW (Cout,Cin,3,3) * per-out-channel scale -> (Cout, 9*Cin) packed so
    column (kh*3+kw)*Cin + c matches the in-kernel tap stack; optionally
    zero-pad the K dim to a multiple of 8 sublanes."""
    cout, cin = w.shape[0], w.shape[1]
    ws = w * scale[:, None, None, None]
    wpk = jnp.transpose(ws, (0, 2, 3, 1)).reshape(cout, 9 * cin)
    if pad_to is not None and pad_to > 9 * cin:
        wpk = jnp.pad(wpk, ((0, 0), (0, pad_to - 9 * cin)))
    return wpk.astype(jnp.float32)


def forward(x, p):
    """Mirrors LastConvLayerModel.forward. Returns (logits, conv_layer_output)."""
    f = jnp.float32
    assert x.shape == (N, C0_IN, H0, W0)

    # Fold eval-mode BatchNorm into conv0: (conv+b)*s+t == conv*s + (b*s+t)
    s_bn = p['bn_gamma'] / jnp.sqrt(p['bn_var'] + BN_EPS)
    t_bn = p['bn_beta'] - p['bn_mean'] * s_bn
    one16 = jnp.ones((16,), f)

    w0 = _prep_conv_w(p['w0'], s_bn, pad_to=K0)                      # (8, 32)
    s0 = (p['b0'] * s_bn + t_bn).reshape(C0_OUT, 1).astype(f)
    w4 = _prep_conv_w(p['w4'], one16)                                # (16, 72)
    s4 = p['b4'].reshape(16, 1).astype(f)
    w7a = _prep_conv_w(p['w7a'], one16); s7a = p['b7a'].reshape(16, 1).astype(f)
    w7b = _prep_conv_w(p['w7b'], one16); s7b = p['b7b'].reshape(16, 1).astype(f)
    w7c = _prep_conv_w(p['w7c'], one16); s7c = p['b7c'].reshape(16, 1).astype(f)

    # Fuse Linear(256->32) and Linear(32->10): no nonlinearity between them.
    wlint = (p['w11'] @ p['w10']).astype(f)                          # (10, 256)
    blint = (p['w11'] @ p['b10'] + p['b11']).reshape(NCLS, 1).astype(f)

    # Input: NCHW -> (C, N, Hp, Wp) zero-padded -> flat with 128-lane margins.
    xt = jnp.transpose(x, (1, 0, 2, 3)).astype(f)
    xt = jnp.pad(xt, ((0, 0), (0, 0), (1, 1), (1, 1)))
    x_lin = jnp.pad(xt.reshape(C0_IN, NPQ0), ((0, 0), (MARG, MARG)))  # (3, 904)

    ins = (x_lin, w0, s0, _SEL1, w4, s4, _SEL2,
           w7a, s7a, w7b, s7b, w7c, s7c, _MASK66,
           _GMAT, _S1M, _PMASK, _ONESB, wlint, blint)

    logitsT, conv_flat = pl.pallas_call(
        _fused_forward_kernel,
        out_shape=(jax.ShapeDtypeStruct((NCLS, N), f),
                   jax.ShapeDtypeStruct((C2, N * H2 * W2), f)),
        grid=(1,),
        in_specs=[pl.BlockSpec(a.shape, lambda i: (0, 0)) for a in ins],
        out_specs=(pl.BlockSpec((NCLS, N), lambda i: (0, 0)),
                   pl.BlockSpec((C2, N * H2 * W2), lambda i: (0, 0))),
        scratch_shapes=[
            pltpu.VMEM((K0, NPQ0), f),               # conv0 tap stack (32, 648)
            pltpu.VMEM((K1, NPQ1), f),               # conv4 tap stack (72, 200)
            pltpu.VMEM((K2, NPQ2), f),               # conv7x tap stack (144, 72)
            pltpu.VMEM((C1_IN, NPQ1 + 2 * MARG), f),  # padded input of conv4
            pltpu.VMEM((C2, NPQ2 + 2 * MARG), f),     # padded input of conv7a
            pltpu.VMEM((C2, NPQ2 + 2 * MARG), f),     # padded input of conv7b
            pltpu.VMEM((C2, NPQ2 + 2 * MARG), f),     # padded input of conv7c
        ],
    )(*ins)

    logits = logitsT.T                                               # (N, 10)
    conv_layer_output = conv_flat.reshape(C2, N, H2, W2).transpose(1, 0, 2, 3)
    return logits, conv_layer_output


# ------------------------------- Parameters --------------------------------
def init_params(key):
    ks = jax.random.split(key, 18)
    f = jnp.float32

    def nrm(k, shape, s=0.1):
        return (s * jax.random.normal(k, shape)).astype(f)

    p = {}
    p['w0'] = nrm(ks[0], (8, 3, 3, 3));       p['b0'] = nrm(ks[1], (8,))
    p['bn_gamma'] = (1.0 + 0.1 * jax.random.normal(ks[2], (8,))).astype(f)
    p['bn_beta'] = nrm(ks[3], (8,))
    p['bn_mean'] = nrm(ks[4], (8,))
    p['bn_var'] = (0.5 + jax.random.uniform(ks[5], (8,))).astype(f)
    p['w4'] = nrm(ks[6], (16, 8, 3, 3));      p['b4'] = nrm(ks[7], (16,))
    p['w7a'] = nrm(ks[8], (16, 16, 3, 3));    p['b7a'] = nrm(ks[9], (16,))
    p['w7b'] = nrm(ks[10], (16, 16, 3, 3));   p['b7b'] = nrm(ks[11], (16,))
    p['w7c'] = nrm(ks[12], (16, 16, 3, 3));   p['b7c'] = nrm(ks[13], (16,))
    p['w10'] = nrm(ks[14], (32, 16 * 4 * 4)); p['b10'] = nrm(ks[15], (32,))
    p['w11'] = nrm(ks[16], (10, 32));         p['b11'] = nrm(ks[17], (10,))
    return p


# ------------------------------- Pure-JAX reference ------------------------
def _ref_maxpool(x):
    return lax.reduce_window(x, -jnp.inf, lax.max, (1, 1, 2, 2), (1, 1, 2, 2), 'VALID')


def ref_forward(x, p):
    def conv(x, w, b):
        y = lax.conv_general_dilated(
            x, w, (1, 1), ((1, 1), (1, 1)),
            dimension_numbers=('NCHW', 'OIHW', 'NCHW'),
            precision=lax.Precision.HIGHEST)
        return y + b[None, :, None, None]

    x = conv(x, p['w0'], p['b0'])
    x = ((x - p['bn_mean'][None, :, None, None])
         / jnp.sqrt(p['bn_var'][None, :, None, None] + BN_EPS)
         * p['bn_gamma'][None, :, None, None] + p['bn_beta'][None, :, None, None])
    x = jnp.maximum(x, 0.0)
    x = _ref_maxpool(x)
    x = jnp.maximum(conv(x, p['w4'], p['b4']), 0.0)
    x = _ref_maxpool(x)
    x = jnp.maximum(conv(x, p['w7a'], p['b7a']), 0.0)
    x = jnp.maximum(conv(x, p['w7b'], p['b7b']), 0.0)
    x = jnp.maximum(conv(x, p['w7c'], p['b7c']), 0.0)
    conv_out = x
    xf = x.reshape(x.shape[0], -1)
    xf = jnp.dot(xf, p['w10'].T, precision=lax.Precision.HIGHEST) + p['b10']
    xf = jnp.dot(xf, p['w11'].T, precision=lax.Precision.HIGHEST) + p['b11']
    return xf, conv_out


# ----------------------------------- Main -----------------------------------
if __name__ == "__main__":
    key = jax.random.PRNGKey(0)
    kx, kp = jax.random.split(key)
    x = jax.random.normal(kx, (2, 3, 16, 16), dtype=jnp.float32)
    params = init_params(kp)

    logits, conv_out = jax.jit(forward)(x, params)
    jax.block_until_ready(logits)
    jax.block_until_ready(conv_out)

    ref_logits, ref_conv = ref_forward(x, params)
    np.testing.assert_allclose(np.asarray(logits), np.asarray(ref_logits),
                               rtol=1e-2, atol=1e-2)
    np.testing.assert_allclose(np.asarray(conv_out), np.asarray(ref_conv),
                               rtol=1e-2, atol=1e-2)
    print("KERNEL_OK")
</pallas_src>

<mosaic_0001>
module attributes {stable_mosaic.version = 11 : i64} {
  func.func @_fused_forward_kernel(%arg0: i32, %arg1: memref<3x904xf32, #tpu.memory_space<vmem>>, %arg2: memref<8x32xf32, #tpu.memory_space<vmem>>, %arg3: memref<8x1xf32, #tpu.memory_space<vmem>>, %arg4: memref<629x200xbf16, #tpu.memory_space<vmem>>, %arg5: memref<16x72xf32, #tpu.memory_space<vmem>>, %arg6: memref<16x1xf32, #tpu.memory_space<vmem>>, %arg7: memref<189x72xbf16, #tpu.memory_space<vmem>>, %arg8: memref<16x144xf32, #tpu.memory_space<vmem>>, %arg9: memref<16x1xf32, #tpu.memory_space<vmem>>, %arg10: memref<16x144xf32, #tpu.memory_space<vmem>>, %arg11: memref<16x1xf32, #tpu.memory_space<vmem>>, %arg12: memref<16x144xf32, #tpu.memory_space<vmem>>, %arg13: memref<16x1xf32, #tpu.memory_space<vmem>>, %arg14: memref<1x72xf32, #tpu.memory_space<vmem>>, %arg15: memref<72x32xf32, #tpu.memory_space<vmem>>, %arg16: memref<256x16xf32, #tpu.memory_space<vmem>>, %arg17: memref<256x32xf32, #tpu.memory_space<vmem>>, %arg18: memref<32x2xf32, #tpu.memory_space<vmem>>, %arg19: memref<10x256xf32, #tpu.memory_space<vmem>>, %arg20: memref<10x1xf32, #tpu.memory_space<vmem>>, %arg21: memref<10x2xf32, #tpu.memory_space<vmem>>, %arg22: memref<16x32xf32, #tpu.memory_space<vmem>>, %arg23: memref<32x648xf32, #tpu.memory_space<vmem>>, %arg24: memref<72x200xf32, #tpu.memory_space<vmem>>, %arg25: memref<144x72xf32, #tpu.memory_space<vmem>>, %arg26: memref<8x456xf32, #tpu.memory_space<vmem>>, %arg27: memref<16x328xf32, #tpu.memory_space<vmem>>, %arg28: memref<16x328xf32, #tpu.memory_space<vmem>>, %arg29: memref<16x328xf32, #tpu.memory_space<vmem>>) attributes {dimension_semantics = [#tpu.dimension_semantics<arbitrary>], iteration_bounds = array<i64: 1>, scalar_prefetch = 0 : i64, scratch_operands = 7 : i64, tpu.core_type = #tpu.core_type<tc>, window_params = [{pipeline_mode = #tpu.pipeline_mode<synchronous>, transform_indices = @transform_0, window_bounds = array<i64: 3, 904>}, {pipeline_mode = #tpu.pipeline_mode<synchronous>, transform_indices = @transform_1, window_bounds = array<i64: 8, 32>}, {pipeline_mode = #tpu.pipeline_mode<synchronous>, transform_indices = @transform_2, window_bounds = array<i64: 8, 1>}, {pipeline_mode = #tpu.pipeline_mode<synchronous>, transform_indices = @transform_3, window_bounds = array<i64: 629, 200>}, {pipeline_mode = #tpu.pipeline_mode<synchronous>, transform_indices = @transform_4, window_bounds = array<i64: 16, 72>}, {pipeline_mode = #tpu.pipeline_mode<synchronous>, transform_indices = @transform_5, window_bounds = array<i64: 16, 1>}, {pipeline_mode = #tpu.pipeline_mode<synchronous>, transform_indices = @transform_6, window_bounds = array<i64: 189, 72>}, {pipeline_mode = #tpu.pipeline_mode<synchronous>, transform_indices = @transform_7, window_bounds = array<i64: 16, 144>}, {pipeline_mode = #tpu.pipeline_mode<synchronous>, transform_indices = @transform_8, window_bounds = array<i64: 16, 1>}, {pipeline_mode = #tpu.pipeline_mode<synchronous>, transform_indices = @transform_9, window_bounds = array<i64: 16, 144>}, {pipeline_mode = #tpu.pipeline_mode<synchronous>, transform_indices = @transform_10, window_bounds = array<i64: 16, 1>}, {pipeline_mode = #tpu.pipeline_mode<synchronous>, transform_indices = @transform_11, window_bounds = array<i64: 16, 144>}, {pipeline_mode = #tpu.pipeline_mode<synchronous>, transform_indices = @transform_12, window_bounds = array<i64: 16, 1>}, {pipeline_mode = #tpu.pipeline_mode<synchronous>, transform_indices = @transform_13, window_bounds = array<i64: 1, 72>}, {pipeline_mode = #tpu.pipeline_mode<synchronous>, transform_indices = @transform_14, window_bounds = array<i64: 72, 32>}, {pipeline_mode = #tpu.pipeline_mode<synchronous>, transform_indices = @transform_15, window_bounds = array<i64: 256, 16>}, {pipeline_mode = #tpu.pipeline_mode<synchronous>, transform_indices = @transform_16, window_bounds = array<i64: 256, 32>}, {pipeline_mode = #tpu.pipeline_mode<synchronous>, transform_indices = @transform_17, window_bounds = array<i64: 32, 2>}, {pipeline_mode = #tpu.pipeline_mode<synchronous>, transform_indices = @transform_18, window_bounds = array<i64: 10, 256>}, {pipeline_mode = #tpu.pipeline_mode<synchronous>, transform_indices = @transform_19, window_bounds = array<i64: 10, 1>}, {pipeline_mode = #tpu.pipeline_mode<synchronous>, transform_indices = @transform_20, window_bounds = array<i64: 10, 2>}, {pipeline_mode = #tpu.pipeline_mode<synchronous>, transform_indices = @transform_21, window_bounds = array<i64: 16, 32>}]} {
    %cst = arith.constant 0.000000e+00 : f32
    %0 = vector.broadcast %cst : f32 to vector<5x648xf32>
    %c27 = arith.constant 27 : index
    %c0 = arith.constant 0 : index
    %1 = vector.load %arg23[%c27, %c0] : memref<32x648xf32, #tpu.memory_space<vmem>>, vector<5x648xf32>
    tpu.vector_store %arg23[%c27, %c0], %0 {strides = array<i32>} : memref<32x648xf32, #tpu.memory_space<vmem>>, vector<5x648xf32>,
    %cst_0 = arith.constant 0.000000e+00 : f32
    %2 = vector.broadcast %cst_0 : f32 to vector<8x128xf32>
    %c0_1 = arith.constant 0 : index
    %c0_2 = arith.constant 0 : index
    %3 = vector.load %arg26[%c0_1, %c0_2] : memref<8x456xf32, #tpu.memory_space<vmem>>, vector<8x128xf32>
    tpu.vector_store %arg26[%c0_1, %c0_2], %2 {strides = array<i32>} : memref<8x456xf32, #tpu.memory_space<vmem>>, vector<8x128xf32>,
    %cst_3 = arith.constant 0.000000e+00 : f32
    %4 = vector.broadcast %cst_3 : f32 to vector<8x128xf32>
    %c0_4 = arith.constant 0 : index
    %c328 = arith.constant 328 : index
    %5 = vector.load %arg26[%c0_4, %c328] : memref<8x456xf32, #tpu.memory_space<vmem>>, vector<8x128xf32>
    tpu.vector_store %arg26[%c0_4, %c328], %4 {strides = array<i32>} : memref<8x456xf32, #tpu.memory_space<vmem>>, vector<8x128xf32>,
    %cst_5 = arith.constant 0.000000e+00 : f32
    %6 = vector.broadcast %cst_5 : f32 to vector<16x128xf32>
    %c0_6 = arith.constant 0 : index
    %c0_7 = arith.constant 0 : index
    %7 = vector.load %arg27[%c0_6, %c0_7] : memref<16x328xf32, #tpu.memory_space<vmem>>, vector<16x128xf32>
    tpu.vector_store %arg27[%c0_6, %c0_7], %6 {strides = array<i32>} : memref<16x328xf32, #tpu.memory_space<vmem>>, vector<16x128xf32>,
    %cst_8 = arith.constant 0.000000e+00 : f32
    %8 = vector.broadcast %cst_8 : f32 to vector<16x128xf32>
    %c0_9 = arith.constant 0 : index
    %c200 = arith.constant 200 : index
    %9 = vector.load %arg27[%c0_9, %c200] : memref<16x328xf32, #tpu.memory_space<vmem>>, vector<16x128xf32>
    tpu.vector_store %arg27[%c0_9, %c200], %8 {strides = array<i32>} : memref<16x328xf32, #tpu.memory_space<vmem>>, vector<16x128xf32>,
    %cst_10 = arith.constant 0.000000e+00 : f32
    %10 = vector.broadcast %cst_10 : f32 to vector<16x128xf32>
    %c0_11 = arith.constant 0 : index
    %c0_12 = arith.constant 0 : index
    %11 = vector.load %arg28[%c0_11, %c0_12] : memref<16x328xf32, #tpu.memory_space<vmem>>, vector<16x128xf32>
    tpu.vector_store %arg28[%c0_11, %c0_12], %10 {strides = array<i32>} : memref<16x328xf32, #tpu.memory_space<vmem>>, vector<16x128xf32>,
    %cst_13 = arith.constant 0.000000e+00 : f32
    %12 = vector.broadcast %cst_13 : f32 to vector<16x128xf32>
    %c0_14 = arith.constant 0 : index
    %c200_15 = arith.constant 200 : index
    %13 = vector.load %arg28[%c0_14, %c200_15] : memref<16x328xf32, #tpu.memory_space<vmem>>, vector<16x128xf32>
    tpu.vector_store %arg28[%c0_14, %c200_15], %12 {strides = array<i32>} : memref<16x328xf32, #tpu.memory_space<vmem>>, vector<16x128xf32>,
    %cst_16 = arith.constant 0.000000e+00 : f32
    %14 = vector.broadcast %cst_16 : f32 to vector<16x128xf32>
    %c0_17 = arith.constant 0 : index
    %c0_18 = arith.constant 0 : index
    %15 = vector.load %arg29[%c0_17, %c0_18] : memref<16x328xf32, #tpu.memory_space<vmem>>, vector<16x128xf32>
    tpu.vector_store %arg29[%c0_17, %c0_18], %14 {strides = array<i32>} : memref<16x328xf32, #tpu.memory_space<vmem>>, vector<16x128xf32>,
    %cst_19 = arith.constant 0.000000e+00 : f32
    %16 = vector.broadcast %cst_19 : f32 to vector<16x128xf32>
    %c0_20 = arith.constant 0 : index
    %c200_21 = arith.constant 200 : index
    %17 = vector.load %arg29[%c0_20, %c200_21] : memref<16x328xf32, #tpu.memory_space<vmem>>, vector<16x128xf32>
    tpu.vector_store %arg29[%c0_20, %c200_21], %16 {strides = array<i32>} : memref<16x328xf32, #tpu.memory_space<vmem>>, vector<16x128xf32>,
    %c0_22 = arith.constant 0 : index
    %c109 = arith.constant 109 : index
    %18 = vector.load %arg1[%c0_22, %c109] : memref<3x904xf32, #tpu.memory_space<vmem>>, vector<3x648xf32>
    %c0_23 = arith.constant 0 : index
    %c0_24 = arith.constant 0 : index
    %19 = vector.load %arg23[%c0_23, %c0_24] : memref<32x648xf32, #tpu.memory_space<vmem>>, vector<3x648xf32>
    tpu.vector_store %arg23[%c0_23, %c0_24], %18 {strides = array<i32>} : memref<32x648xf32, #tpu.memory_space<vmem>>, vector<3x648xf32>,
    %c0_25 = arith.constant 0 : index
    %c110 = arith.constant 110 : index
    %20 = vector.load %arg1[%c0_25, %c110] : memref<3x904xf32, #tpu.memory_space<vmem>>, vector<3x648xf32>
    %c3 = arith.constant 3 : index
    %c0_26 = arith.constant 0 : index
    %21 = vector.load %arg23[%c3, %c0_26] : memref<32x648xf32, #tpu.memory_space<vmem>>, vector<3x648xf32>
    tpu.vector_store %arg23[%c3, %c0_26], %20 {strides = array<i32>} : memref<32x648xf32, #tpu.memory_space<vmem>>, vector<3x648xf32>,
    %c0_27 = arith.constant 0 : index
    %c111 = arith.constant 111 : index
    %22 = vector.load %arg1[%c0_27, %c111] : memref<3x904xf32, #tpu.memory_space<vmem>>, vector<3x648xf32>
    %c6 = arith.constant 6 : index
    %c0_28 = arith.constant 0 : index
    %23 = vector.load %arg23[%c6, %c0_28] : memref<32x648xf32, #tpu.memory_space<vmem>>, vector<3x648xf32>
    tpu.vector_store %arg23[%c6, %c0_28], %22 {strides = array<i32>} : memref<32x648xf32, #tpu.memory_space<vmem>>, vector<3x648xf32>,
    %c0_29 = arith.constant 0 : index
    %c127 = arith.constant 127 : index
    %24 = vector.load %arg1[%c0_29, %c127] : memref<3x904xf32, #tpu.memory_space<vmem>>, vector<3x648xf32>
    %c9 = arith.constant 9 : index
    %c0_30 = arith.constant 0 : index
    %25 = vector.load %arg23[%c9, %c0_30] : memref<32x648xf32, #tpu.memory_space<vmem>>, vector<3x648xf32>
    tpu.vector_store %arg23[%c9, %c0_30], %24 {strides = array<i32>} : memref<32x648xf32, #tpu.memory_space<vmem>>, vector<3x648xf32>,
    %c0_31 = arith.constant 0 : index
    %c128 = arith.constant 128 : index
    %26 = vector.load %arg1[%c0_31, %c128] : memref<3x904xf32, #tpu.memory_space<vmem>>, vector<3x648xf32>
    %c12 = arith.constant 12 : index
    %c0_32 = arith.constant 0 : index
    %27 = vector.load %arg23[%c12, %c0_32] : memref<32x648xf32, #tpu.memory_space<vmem>>, vector<3x648xf32>
    tpu.vector_store %arg23[%c12, %c0_32], %26 {strides = array<i32>} : memref<32x648xf32, #tpu.memory_space<vmem>>, vector<3x648xf32>,
    %c0_33 = arith.constant 0 : index
    %c129 = arith.constant 129 : index
    %28 = vector.load %arg1[%c0_33, %c129] : memref<3x904xf32, #tpu.memory_space<vmem>>, vector<3x648xf32>
    %c15 = arith.constant 15 : index
    %c0_34 = arith.constant 0 : index
    %29 = vector.load %arg23[%c15, %c0_34] : memref<32x648xf32, #tpu.memory_space<vmem>>, vector<3x648xf32>
    tpu.vector_store %arg23[%c15, %c0_34], %28 {strides = array<i32>} : memref<32x648xf32, #tpu.memory_space<vmem>>, vector<3x648xf32>,
    %c0_35 = arith.constant 0 : index
    %c145 = arith.constant 145 : index
    %30 = vector.load %arg1[%c0_35, %c145] : memref<3x904xf32, #tpu.memory_space<vmem>>, vector<3x648xf32>
    %c18 = arith.constant 18 : index
    %c0_36 = arith.constant 0 : index
    %31 = vector.load %arg23[%c18, %c0_36] : memref<32x648xf32, #tpu.memory_space<vmem>>, vector<3x648xf32>
    tpu.vector_store %arg23[%c18, %c0_36], %30 {strides = array<i32>} : memref<32x648xf32, #tpu.memory_space<vmem>>, vector<3x648xf32>,
    %c0_37 = arith.constant 0 : index
    %c146 = arith.constant 146 : index
    %32 = vector.load %arg1[%c0_37, %c146] : memref<3x904xf32, #tpu.memory_space<vmem>>, vector<3x648xf32>
    %c21 = arith.constant 21 : index
    %c0_38 = arith.constant 0 : index
    %33 = vector.load %arg23[%c21, %c0_38] : memref<32x648xf32, #tpu.memory_space<vmem>>, vector<3x648xf32>
    tpu.vector_store %arg23[%c21, %c0_38], %32 {strides = array<i32>} : memref<32x648xf32, #tpu.memory_space<vmem>>, vector<3x648xf32>,
    %c0_39 = arith.constant 0 : index
    %c147 = arith.constant 147 : index
    %34 = vector.load %arg1[%c0_39, %c147] : memref<3x904xf32, #tpu.memory_space<vmem>>, vector<3x648xf32>
    %c24 = arith.constant 24 : index
    %c0_40 = arith.constant 0 : index
    %35 = vector.load %arg23[%c24, %c0_40] : memref<32x648xf32, #tpu.memory_space<vmem>>, vector<3x648xf32>
    tpu.vector_store %arg23[%c24, %c0_40], %34 {strides = array<i32>} : memref<32x648xf32, #tpu.memory_space<vmem>>, vector<3x648xf32>,
    %c0_41 = arith.constant 0 : index
    %c0_42 = arith.constant 0 : index
    %36 = vector.load %arg2[%c0_41, %c0_42] : memref<8x32xf32, #tpu.memory_space<vmem>>, vector<8x32xf32>
    %c0_43 = arith.constant 0 : index
    %c0_44 = arith.constant 0 : index
    %37 = vector.load %arg23[%c0_43, %c0_44] : memref<32x648xf32, #tpu.memory_space<vmem>>, vector<32x648xf32>
    %cst_45 = arith.constant dense<0.000000e+00> : vector<8x648xf32>
    %38 = tpu.matmul %36, %37, %cst_45 {dimension_numbers = #tpu.dot_dimension_numbers<[1], [0], [0], [1], [0, 0, 1, 1], [], []>} : vector<8x32xf32>, vector<32x648xf32>, vector<8x648xf32> -> vector<8x648xf32>
    %c0_46 = arith.constant 0 : index
    %c0_47 = arith.constant 0 : index
    %39 = vector.load %arg3[%c0_46, %c0_47] : memref<8x1xf32, #tpu.memory_space<vmem>>, vector<8x1xf32>
    %40 = vector.broadcast %39 : vector<8x1xf32> to vector<8x648xf32>
    %41 = arith.addf %38, %40 : vector<8x648xf32>
    %cst_48 = arith.constant 0.000000e+00 : f32
    %42 = vector.broadcast %cst_48 : f32 to vector<8x648xf32>
    %43 = arith.maximumf %41, %42 : vector<8x648xf32>
    %44 = vector.extract_strided_slice %43 {offsets = [0, 0], sizes = [8, 630], strides = [1, 1]} : vector<8x648xf32> to vector<8x630xf32>
    %45 = vector.extract_strided_slice %43 {offsets = [0, 18], sizes = [8, 630], strides = [1, 1]} : vector<8x648xf32> to vector<8x630xf32>
    %46 = arith.maximumf %44, %45 : vector<8x630xf32>
    %47 = vector.extract_strided_slice %46 {offsets = [0, 0], sizes = [8, 629], strides = [1, 1]} : vector<8x630xf32> to vector<8x629xf32>
    %48 = vector.extract_strided_slice %46 {offsets = [0, 1], sizes = [8, 629], strides = [1, 1]} : vector<8x630xf32> to vector<8x629xf32>
    %49 = arith.maximumf %47, %48 : vector<8x629xf32>
    %c0_49 = arith.constant 0 : index
    %c0_50 = arith.constant 0 : index
    %50 = vector.load %arg4[%c0_49, %c0_50] : memref<629x200xbf16, #tpu.memory_space<vmem>>, vector<629x200xbf16>
    %51 = arith.extf %50 : vector<629x200xbf16> to vector<629x200xf32>
    %cst_51 = arith.constant dense<0.000000e+00> : vector<8x200xf32>
    %52 = tpu.matmul %49, %51, %cst_51 {dimension_numbers = #tpu.dot_dimension_numbers<[1], [0], [0], [1], [0, 0, 1, 1], [], []>} : vector<8x629xf32>, vector<629x200xf32>, vector<8x200xf32> -> vector<8x200xf32>
    %c0_52 = arith.constant 0 : index
    %c128_53 = arith.constant 128 : index
    %53 = vector.load %arg26[%c0_52, %c128_53] : memref<8x456xf32, #tpu.memory_space<vmem>>, vector<8x200xf32>
    tpu.vector_store %arg26[%c0_52, %c128_53], %52 {strides = array<i32>} : memref<8x456xf32, #tpu.memory_space<vmem>>, vector<8x200xf32>,
    %c0_54 = arith.constant 0 : index
    %c117 = arith.constant 117 : index
    %54 = vector.load %arg26[%c0_54, %c117] : memref<8x456xf32, #tpu.memory_space<vmem>>, vector<8x200xf32>
    %c0_55 = arith.constant 0 : index
    %c0_56 = arith.constant 0 : index
    %55 = vector.load %arg24[%c0_55, %c0_56] : memref<72x200xf32, #tpu.memory_space<vmem>>, vector<8x200xf32>
    tpu.vector_store %arg24[%c0_55, %c0_56], %54 {strides = array<i32>} : memref<72x200xf32, #tpu.memory_space<vmem>>, vector<8x200xf32>,
    %c0_57 = arith.constant 0 : index
    %c118 = arith.constant 118 : index
    %56 = vector.load %arg26[%c0_57, %c118] : memref<8x456xf32, #tpu.memory_space<vmem>>, vector<8x200xf32>
    %c8 = arith.constant 8 : index
    %c0_58 = arith.constant 0 : index
    %57 = vector.load %arg24[%c8, %c0_58] : memref<72x200xf32, #tpu.memory_space<vmem>>, vector<8x200xf32>
    tpu.vector_store %arg24[%c8, %c0_58], %56 {strides = array<i32>} : memref<72x200xf32, #tpu.memory_space<vmem>>, vector<8x200xf32>,
    %c0_59 = arith.constant 0 : index
    %c119 = arith.constant 119 : index
    %58 = vector.load %arg26[%c0_59, %c119] : memref<8x456xf32, #tpu.memory_space<vmem>>, vector<8x200xf32>
    %c16 = arith.constant 16 : index
    %c0_60 = arith.constant 0 : index
    %59 = vector.load %arg24[%c16, %c0_60] : memref<72x200xf32, #tpu.memory_space<vmem>>, vector<8x200xf32>
    tpu.vector_store %arg24[%c16, %c0_60], %58 {strides = array<i32>} : memref<72x200xf32, #tpu.memory_space<vmem>>, vector<8x200xf32>,
    %c0_61 = arith.constant 0 : index
    %c127_62 = arith.constant 127 : index
    %60 = vector.load %arg26[%c0_61, %c127_62] : memref<8x456xf32, #tpu.memory_space<vmem>>, vector<8x200xf32>
    %c24_63 = arith.constant 24 : index
    %c0_64 = arith.constant 0 : index
    %61 = vector.load %arg24[%c24_63, %c0_64] : memref<72x200xf32, #tpu.memory_space<vmem>>, vector<8x200xf32>
    tpu.vector_store %arg24[%c24_63, %c0_64], %60 {strides = array<i32>} : memref<72x200xf32, #tpu.memory_space<vmem>>, vector<8x200xf32>,
    %c0_65 = arith.constant 0 : index
    %c128_66 = arith.constant 128 : index
    %62 = vector.load %arg26[%c0_65, %c128_66] : memref<8x456xf32, #tpu.memory_space<vmem>>, vector<8x200xf32>
    %c32 = arith.constant 32 : index
    %c0_67 = arith.constant 0 : index
    %63 = vector.load %arg24[%c32, %c0_67] : memref<72x200xf32, #tpu.memory_space<vmem>>, vector<8x200xf32>
    tpu.vector_store %arg24[%c32, %c0_67], %62 {strides = array<i32>} : memref<72x200xf32, #tpu.memory_space<vmem>>, vector<8x200xf32>,
    %c0_68 = arith.constant 0 : index
    %c129_69 = arith.constant 129 : index
    %64 = vector.load %arg26[%c0_68, %c129_69] : memref<8x456xf32, #tpu.memory_space<vmem>>, vector<8x200xf32>
    %c40 = arith.constant 40 : index
    %c0_70 = arith.constant 0 : index
    %65 = vector.load %arg24[%c40, %c0_70] : memref<72x200xf32, #tpu.memory_space<vmem>>, vector<8x200xf32>
    tpu.vector_store %arg24[%c40, %c0_70], %64 {strides = array<i32>} : memref<72x200xf32, #tpu.memory_space<vmem>>, vector<8x200xf32>,
    %c0_71 = arith.constant 0 : index
    %c137 = arith.constant 137 : index
    %66 = vector.load %arg26[%c0_71, %c137] : memref<8x456xf32, #tpu.memory_space<vmem>>, vector<8x200xf32>
    %c48 = arith.constant 48 : index
    %c0_72 = arith.constant 0 : index
    %67 = vector.load %arg24[%c48, %c0_72] : memref<72x200xf32, #tpu.memory_space<vmem>>, vector<8x200xf32>
    tpu.vector_store %arg24[%c48, %c0_72], %66 {strides = array<i32>} : memref<72x200xf32, #tpu.memory_space<vmem>>, vector<8x200xf32>,
    %c0_73 = arith.constant 0 : index
    %c138 = arith.constant 138 : index
    %68 = vector.load %arg26[%c0_73, %c138] : memref<8x456xf32, #tpu.memory_space<vmem>>, vector<8x200xf32>
    %c56 = arith.constant 56 : index
    %c0_74 = arith.constant 0 : index
    %69 = vector.load %arg24[%c56, %c0_74] : memref<72x200xf32, #tpu.memory_space<vmem>>, vector<8x200xf32>
    tpu.vector_store %arg24[%c56, %c0_74], %68 {strides = array<i32>} : memref<72x200xf32, #tpu.memory_space<vmem>>, vector<8x200xf32>,
    %c0_75 = arith.constant 0 : index
    %c139 = arith.constant 139 : index
    %70 = vector.load %arg26[%c0_75, %c139] : memref<8x456xf32, #tpu.memory_space<vmem>>, vector<8x200xf32>
    %c64 = arith.constant 64 : index
    %c0_76 = arith.constant 0 : index
    %71 = vector.load %arg24[%c64, %c0_76] : memref<72x200xf32, #tpu.memory_space<vmem>>, vector<8x200xf32>
    tpu.vector_store %arg24[%c64, %c0_76], %70 {strides = array<i32>} : memref<72x200xf32, #tpu.memory_space<vmem>>, vector<8x200xf32>,
    %c0_77 = arith.constant 0 : index
    %c0_78 = arith.constant 0 : index
    %72 = vector.load %arg5[%c0_77, %c0_78] : memref<16x72xf32, #tpu.memory_space<vmem>>, vector<16x72xf32>
    %c0_79 = arith.constant 0 : index
    %c0_80 = arith.constant 0 : index
    %73 = vector.load %arg24[%c0_79, %c0_80] : memref<72x200xf32, #tpu.memory_space<vmem>>, vector<72x200xf32>
    %cst_81 = arith.constant dense<0.000000e+00> : vector<16x200xf32>
    %74 = tpu.matmul %72, %73, %cst_81 {dimension_numbers = #tpu.dot_dimension_numbers<[1], [0], [0], [1], [0, 0, 1, 1], [], []>} : vector<16x72xf32>, vector<72x200xf32>, vector<16x200xf32> -> vector<16x200xf32>
    %c0_82 = arith.constant 0 : index
    %c0_83 = arith.constant 0 : index
    %75 = vector.load %arg6[%c0_82, %c0_83] : memref<16x1xf32, #tpu.memory_space<vmem>>, vector<16x1xf32>
    %76 = vector.broadcast %75 : vector<16x1xf32> to vector<16x200xf32>
    %77 = arith.addf %74, %76 : vector<16x200xf32>
    %cst_84 = arith.constant 0.000000e+00 : f32
    %78 = vector.broadcast %cst_84 : f32 to vector<16x200xf32>
    %79 = arith.maximumf %77, %78 : vector<16x200xf32>
    %80 = vector.extract_strided_slice %79 {offsets = [0, 0], sizes = [16, 190], strides = [1, 1]} : vector<16x200xf32> to vector<16x190xf32>
    %81 = vector.extract_strided_slice %79 {offsets = [0, 10], sizes = [16, 190], strides = [1, 1]} : vector<16x200xf32> to vector<16x190xf32>
    %82 = arith.maximumf %80, %81 : vector<16x190xf32>
    %83 = vector.extract_strided_slice %82 {offsets = [0, 0], sizes = [16, 189], strides = [1, 1]} : vector<16x190xf32> to vector<16x189xf32>
    %84 = vector.extract_strided_slice %82 {offsets = [0, 1], sizes = [16, 189], strides = [1, 1]} : vector<16x190xf32> to vector<16x189xf32>
    %85 = arith.maximumf %83, %84 : vector<16x189xf32>
    %c0_85 = arith.constant 0 : index
    %c0_86 = arith.constant 0 : index
    %86 = vector.load %arg7[%c0_85, %c0_86] : memref<189x72xbf16, #tpu.memory_space<vmem>>, vector<189x72xbf16>
    %87 = arith.extf %86 : vector<189x72xbf16> to vector<189x72xf32>
    %cst_87 = arith.constant dense<0.000000e+00> : vector<16x72xf32>
    %88 = tpu.matmul %85, %87, %cst_87 {dimension_numbers = #tpu.dot_dimension_numbers<[1], [0], [0], [1], [0, 0, 1, 1], [], []>} : vector<16x189xf32>, vector<189x72xf32>, vector<16x72xf32> -> vector<16x72xf32>
    %c0_88 = arith.constant 0 : index
    %c128_89 = arith.constant 128 : index
    %89 = vector.load %arg27[%c0_88, %c128_89] : memref<16x328xf32, #tpu.memory_space<vmem>>, vector<16x72xf32>
    tpu.vector_store %arg27[%c0_88, %c128_89], %88 {strides = array<i32>} : memref<16x328xf32, #tpu.memory_space<vmem>>, vector<16x72xf32>,
    %c0_90 = arith.constant 0 : index
    %c121 = arith.constant 121 : index
    %90 = vector.load %arg27[%c0_90, %c121] : memref<16x328xf32, #tpu.memory_space<vmem>>, vector<16x72xf32>
    %c0_91 = arith.constant 0 : index
    %c0_92 = arith.constant 0 : index
    %91 = vector.load %arg25[%c0_91, %c0_92] : memref<144x72xf32, #tpu.memory_space<vmem>>, vector<16x72xf32>
    tpu.vector_store %arg25[%c0_91, %c0_92], %90 {strides = array<i32>} : memref<144x72xf32, #tpu.memory_space<vmem>>, vector<16x72xf32>,
    %c0_93 = arith.constant 0 : index
    %c122 = arith.constant 122 : index
    %92 = vector.load %arg27[%c0_93, %c122] : memref<16x328xf32, #tpu.memory_space<vmem>>, vector<16x72xf32>
    %c16_94 = arith.constant 16 : index
    %c0_95 = arith.constant 0 : index
    %93 = vector.load %arg25[%c16_94, %c0_95] : memref<144x72xf32, #tpu.memory_space<vmem>>, vector<16x72xf32>
    tpu.vector_store %arg25[%c16_94, %c0_95], %92 {strides = array<i32>} : memref<144x72xf32, #tpu.memory_space<vmem>>, vector<16x72xf32>,
    %c0_96 = arith.constant 0 : index
    %c123 = arith.constant 123 : index
    %94 = vector.load %arg27[%c0_96, %c123] : memref<16x328xf32, #tpu.memory_space<vmem>>, vector<16x72xf32>
    %c32_97 = arith.constant 32 : index
    %c0_98 = arith.constant 0 : index
    %95 = vector.load %arg25[%c32_97, %c0_98] : memref<144x72xf32, #tpu.memory_space<vmem>>, vector<16x72xf32>
    tpu.vector_store %arg25[%c32_97, %c0_98], %94 {strides = array<i32>} : memref<144x72xf32, #tpu.memory_space<vmem>>, vector<16x72xf32>,
    %c0_99 = arith.constant 0 : index
    %c127_100 = arith.constant 127 : index
    %96 = vector.load %arg27[%c0_99, %c127_100] : memref<16x328xf32, #tpu.memory_space<vmem>>, vector<16x72xf32>
    %c48_101 = arith.constant 48 : index
    %c0_102 = arith.constant 0 : index
    %97 = vector.load %arg25[%c48_101, %c0_102] : memref<144x72xf32, #tpu.memory_space<vmem>>, vector<16x72xf32>
    tpu.vector_store %arg25[%c48_101, %c0_102], %96 {strides = array<i32>} : memref<144x72xf32, #tpu.memory_space<vmem>>, vector<16x72xf32>,
    %c0_103 = arith.constant 0 : index
    %c128_104 = arith.constant 128 : index
    %98 = vector.load %arg27[%c0_103, %c128_104] : memref<16x328xf32, #tpu.memory_space<vmem>>, vector<16x72xf32>
    %c64_105 = arith.constant 64 : index
    %c0_106 = arith.constant 0 : index
    %99 = vector.load %arg25[%c64_105, %c0_106] : memref<144x72xf32, #tpu.memory_space<vmem>>, vector<16x72xf32>
    tpu.vector_store %arg25[%c64_105, %c0_106], %98 {strides = array<i32>} : memref<144x72xf32, #tpu.memory_space<vmem>>, vector<16x72xf32>,
    %c0_107 = arith.constant 0 : index
    %c129_108 = arith.constant 129 : index
    %100 = vector.load %arg27[%c0_107, %c129_108] : memref<16x328xf32, #tpu.memory_space<vmem>>, vector<16x72xf32>
    %c80 = arith.constant 80 : index
    %c0_109 = arith.constant 0 : index
    %101 = vector.load %arg25[%c80, %c0_109] : memref<144x72xf32, #tpu.memory_space<vmem>>, vector<16x72xf32>
    tpu.vector_store %arg25[%c80, %c0_109], %100 {strides = array<i32>} : memref<144x72xf32, #tpu.memory_space<vmem>>, vector<16x72xf32>,
    %c0_110 = arith.constant 0 : index
    %c133 = arith.constant 133 : index
    %102 = vector.load %arg27[%c0_110, %c133] : memref<16x328xf32, #tpu.memory_space<vmem>>, vector<16x72xf32>
    %c96 = arith.constant 96 : index
    %c0_111 = arith.constant 0 : index
    %103 = vector.load %arg25[%c96, %c0_111] : memref<144x72xf32, #tpu.memory_space<vmem>>, vector<16x72xf32>
    tpu.vector_store %arg25[%c96, %c0_111], %102 {strides = array<i32>} : memref<144x72xf32, #tpu.memory_space<vmem>>, vector<16x72xf32>,
    %c0_112 = arith.constant 0 : index
    %c134 = arith.constant 134 : index
    %104 = vector.load %arg27[%c0_112, %c134] : memref<16x328xf32, #tpu.memory_space<vmem>>, vector<16x72xf32>
    %c112 = arith.constant 112 : index
    %c0_113 = arith.constant 0 : index
    %105 = vector.load %arg25[%c112, %c0_113] : memref<144x72xf32, #tpu.memory_space<vmem>>, vector<16x72xf32>
    tpu.vector_store %arg25[%c112, %c0_113], %104 {strides = array<i32>} : memref<144x72xf32, #tpu.memory_space<vmem>>, vector<16x72xf32>,
    %c0_114 = arith.constant 0 : index
    %c135 = arith.constant 135 : index
    %106 = vector.load %arg27[%c0_114, %c135] : memref<16x328xf32, #tpu.memory_space<vmem>>, vector<16x72xf32>
    %c128_115 = arith.constant 128 : index
    %c0_116 = arith.constant 0 : index
    %107 = vector.load %arg25[%c128_115, %c0_116] : memref<144x72xf32, #tpu.memory_space<vmem>>, vector<16x72xf32>
    tpu.vector_store %arg25[%c128_115, %c0_116], %106 {strides = array<i32>} : memref<144x72xf32, #tpu.memory_space<vmem>>, vector<16x72xf32>,
    %c0_117 = arith.constant 0 : index
    %c0_118 = arith.constant 0 : index
    %108 = vector.load %arg8[%c0_117, %c0_118] : memref<16x144xf32, #tpu.memory_space<vmem>>, vector<16x144xf32>
    %c0_119 = arith.constant 0 : index
    %c0_120 = arith.constant 0 : index
    %109 = vector.load %arg25[%c0_119, %c0_120] : memref<144x72xf32, #tpu.memory_space<vmem>>, vector<144x72xf32>
    %cst_121 = arith.constant dense<0.000000e+00> : vector<16x72xf32>
    %110 = tpu.matmul %108, %109, %cst_121 {dimension_numbers = #tpu.dot_dimension_numbers<[1], [0], [0], [1], [0, 0, 1, 1], [], []>} : vector<16x144xf32>, vector<144x72xf32>, vector<16x72xf32> -> vector<16x72xf32>
    %c0_122 = arith.constant 0 : index
    %c0_123 = arith.constant 0 : index
    %111 = vector.load %arg9[%c0_122, %c0_123] : memref<16x1xf32, #tpu.memory_space<vmem>>, vector<16x1xf32>
    %112 = vector.broadcast %111 : vector<16x1xf32> to vector<16x72xf32>
    %113 = arith.addf %110, %112 : vector<16x72xf32>
    %cst_124 = arith.constant 0.000000e+00 : f32
    %114 = vector.broadcast %cst_124 : f32 to vector<16x72xf32>
    %115 = arith.maximumf %113, %114 : vector<16x72xf32>
    %c0_125 = arith.constant 0 : index
    %c0_126 = arith.constant 0 : index
    %116 = vector.load %arg14[%c0_125, %c0_126] : memref<1x72xf32, #tpu.memory_space<vmem>>, vector<1x72xf32>
    %117 = vector.broadcast %116 : vector<1x72xf32> to vector<16x72xf32>
    %118 = arith.mulf %115, %117 : vector<16x72xf32>
    %c0_127 = arith.constant 0 : index
    %c128_128 = arith.constant 128 : index
    %119 = vector.load %arg28[%c0_127, %c128_128] : memref<16x328xf32, #tpu.memory_space<vmem>>, vector<16x72xf32>
    tpu.vector_store %arg28[%c0_127, %c128_128], %118 {strides = array<i32>} : memref<16x328xf32, #tpu.memory_space<vmem>>, vector<16x72xf32>,
    %c0_129 = arith.constant 0 : index
    %c121_130 = arith.constant 121 : index
    %120 = vector.load %arg28[%c0_129, %c121_130] : memref<16x328xf32, #tpu.memory_space<vmem>>, vector<16x72xf32>
    %c0_131 = arith.constant 0 : index
    %c0_132 = arith.constant 0 : index
    %121 = vector.load %arg25[%c0_131, %c0_132] : memref<144x72xf32, #tpu.memory_space<vmem>>, vector<16x72xf32>
    tpu.vector_store %arg25[%c0_131, %c0_132], %120 {strides = array<i32>} : memref<144x72xf32, #tpu.memory_space<vmem>>, vector<16x72xf32>,
    %c0_133 = arith.constant 0 : index
    %c122_134 = arith.constant 122 : index
    %122 = vector.load %arg28[%c0_133, %c122_134] : memref<16x328xf32, #tpu.memory_space<vmem>>, vector<16x72xf32>
    %c16_135 = arith.constant 16 : index
    %c0_136 = arith.constant 0 : index
    %123 = vector.load %arg25[%c16_135, %c0_136] : memref<144x72xf32, #tpu.memory_space<vmem>>, vector<16x72xf32>
    tpu.vector_store %arg25[%c16_135, %c0_136], %122 {strides = array<i32>} : memref<144x72xf32, #tpu.memory_space<vmem>>, vector<16x72xf32>,
    %c0_137 = arith.constant 0 : index
    %c123_138 = arith.constant 123 : index
    %124 = vector.load %arg28[%c0_137, %c123_138] : memref<16x328xf32, #tpu.memory_space<vmem>>, vector<16x72xf32>
    %c32_139 = arith.constant 32 : index
    %c0_140 = arith.constant 0 : index
    %125 = vector.load %arg25[%c32_139, %c0_140] : memref<144x72xf32, #tpu.memory_space<vmem>>, vector<16x72xf32>
    tpu.vector_store %arg25[%c32_139, %c0_140], %124 {strides = array<i32>} : memref<144x72xf32, #tpu.memory_space<vmem>>, vector<16x72xf32>,
    %c0_141 = arith.constant 0 : index
    %c127_142 = arith.constant 127 : index
    %126 = vector.load %arg28[%c0_141, %c127_142] : memref<16x328xf32, #tpu.memory_space<vmem>>, vector<16x72xf32>
    %c48_143 = arith.constant 48 : index
    %c0_144 = arith.constant 0 : index
    %127 = vector.load %arg25[%c48_143, %c0_144] : memref<144x72xf32, #tpu.memory_space<vmem>>, vector<16x72xf32>
    tpu.vector_store %arg25[%c48_143, %c0_144], %126 {strides = array<i32>} : memref<144x72xf32, #tpu.memory_space<vmem>>, vector<16x72xf32>,
    %c0_145 = arith.constant 0 : index
    %c128_146 = arith.constant 128 : index
    %128 = vector.load %arg28[%c0_145, %c128_146] : memref<16x328xf32, #tpu.memory_space<vmem>>, vector<16x72xf32>
    %c64_147 = arith.constant 64 : index
    %c0_148 = arith.constant 0 : index
    %129 = vector.load %arg25[%c64_147, %c0_148] : memref<144x72xf32, #tpu.memory_space<vmem>>, vector<16x72xf32>
    tpu.vector_store %arg25[%c64_147, %c0_148], %128 {strides = array<i32>} : memref<144x72xf32, #tpu.memory_space<vmem>>, vector<16x72xf32>,
    %c0_149 = arith.constant 0 : index
    %c129_150 = arith.constant 129 : index
    %130 = vector.load %arg28[%c0_149, %c129_150] : memref<16x328xf32, #tpu.memory_space<vmem>>, vector<16x72xf32>
    %c80_151 = arith.constant 80 : index
    %c0_152 = arith.constant 0 : index
    %131 = vector.load %arg25[%c80_151, %c0_152] : memref<144x72xf32, #tpu.memory_space<vmem>>, vector<16x72xf32>
    tpu.vector_store %arg25[%c80_151, %c0_152], %130 {strides = array<i32>} : memref<144x72xf32, #tpu.memory_space<vmem>>, vector<16x72xf32>,
    %c0_153 = arith.constant 0 : index
    %c133_154 = arith.constant 133 : index
    %132 = vector.load %arg28[%c0_153, %c133_154] : memref<16x328xf32, #tpu.memory_space<vmem>>, vector<16x72xf32>
    %c96_155 = arith.constant 96 : index
    %c0_156 = arith.constant 0 : index
    %133 = vector.load %arg25[%c96_155, %c0_156] : memref<144x72xf32, #tpu.memory_space<vmem>>, vector<16x72xf32>
    tpu.vector_store %arg25[%c96_155, %c0_156], %132 {strides = array<i32>} : memref<144x72xf32, #tpu.memory_space<vmem>>, vector<16x72xf32>,
    %c0_157 = arith.constant 0 : index
    %c134_158 = arith.constant 134 : index
    %134 = vector.load %arg28[%c0_157, %c134_158] : memref<16x328xf32, #tpu.memory_space<vmem>>, vector<16x72xf32>
    %c112_159 = arith.constant 112 : index
    %c0_160 = arith.constant 0 : index
    %135 = vector.load %arg25[%c112_159, %c0_160] : memref<144x72xf32, #tpu.memory_space<vmem>>, vector<16x72xf32>
    tpu.vector_store %arg25[%c112_159, %c0_160], %134 {strides = array<i32>} : memref<144x72xf32, #tpu.memory_space<vmem>>, vector<16x72xf32>,
    %c0_161 = arith.constant 0 : index
    %c135_162 = arith.constant 135 : index
    %136 = vector.load %arg28[%c0_161, %c135_162] : memref<16x328xf32, #tpu.memory_space<vmem>>, vector<16x72xf32>
    %c128_163 = arith.constant 128 : index
    %c0_164 = arith.constant 0 : index
    %137 = vector.load %arg25[%c128_163, %c0_164] : memref<144x72xf32, #tpu.memory_space<vmem>>, vector<16x72xf32>
    tpu.vector_store %arg25[%c128_163, %c0_164], %136 {strides = array<i32>} : memref<144x72xf32, #tpu.memory_space<vmem>>, vector<16x72xf32>,
    %c0_165 = arith.constant 0 : index
    %c0_166 = arith.constant 0 : index
    %138 = vector.load %arg10[%c0_165, %c0_166] : memref<16x144xf32, #tpu.memory_space<vmem>>, vector<16x144xf32>
    %c0_167 = arith.constant 0 : index
    %c0_168 = arith.constant 0 : index
    %139 = vector.load %arg25[%c0_167, %c0_168] : memref<144x72xf32, #tpu.memory_space<vmem>>, vector<144x72xf32>
    %cst_169 = arith.constant dense<0.000000e+00> : vector<16x72xf32>
    %140 = tpu.matmul %138, %139, %cst_169 {dimension_numbers = #tpu.dot_dimension_numbers<[1], [0], [0], [1], [0, 0, 1, 1], [], []>} : vector<16x144xf32>, vector<144x72xf32>, vector<16x72xf32> -> vector<16x72xf32>
    %c0_170 = arith.constant 0 : index
    %c0_171 = arith.constant 0 : index
    %141 = vector.load %arg11[%c0_170, %c0_171] : memref<16x1xf32, #tpu.memory_space<vmem>>, vector<16x1xf32>
    %142 = vector.broadcast %141 : vector<16x1xf32> to vector<16x72xf32>
    %143 = arith.addf %140, %142 : vector<16x72xf32>
    %cst_172 = arith.constant 0.000000e+00 : f32
    %144 = vector.broadcast %cst_172 : f32 to vector<16x72xf32>
    %145 = arith.maximumf %143, %144 : vector<16x72xf32>
    %c0_173 = arith.constant 0 : index
    %c0_174 = arith.constant 0 : index
    %146 = vector.load %arg14[%c0_173, %c0_174] : memref<1x72xf32, #tpu.memory_space<vmem>>, vector<1x72xf32>
    %147 = vector.broadcast %146 : vector<1x72xf32> to vector<16x72xf32>
    %148 = arith.mulf %145, %147 : vector<16x72xf32>
    %c0_175 = arith.constant 0 : index
    %c128_176 = arith.constant 128 : index
    %149 = vector.load %arg29[%c0_175, %c128_176] : memref<16x328xf32, #tpu.memory_space<vmem>>, vector<16x72xf32>
    tpu.vector_store %arg29[%c0_175, %c128_176], %148 {strides = array<i32>} : memref<16x328xf32, #tpu.memory_space<vmem>>, vector<16x72xf32>,
    %c0_177 = arith.constant 0 : index
    %c121_178 = arith.constant 121 : index
    %150 = vector.load %arg29[%c0_177, %c121_178] : memref<16x328xf32, #tpu.memory_space<vmem>>, vector<16x72xf32>
    %c0_179 = arith.constant 0 : index
    %c0_180 = arith.constant 0 : index
    %151 = vector.load %arg25[%c0_179, %c0_180] : memref<144x72xf32, #tpu.memory_space<vmem>>, vector<16x72xf32>
    tpu.vector_store %arg25[%c0_179, %c0_180], %150 {strides = array<i32>} : memref<144x72xf32, #tpu.memory_space<vmem>>, vector<16x72xf32>,
    %c0_181 = arith.constant 0 : index
    %c122_182 = arith.constant 122 : index
    %152 = vector.load %arg29[%c0_181, %c122_182] : memref<16x328xf32, #tpu.memory_space<vmem>>, vector<16x72xf32>
    %c16_183 = arith.constant 16 : index
    %c0_184 = arith.constant 0 : index
    %153 = vector.load %arg25[%c16_183, %c0_184] : memref<144x72xf32, #tpu.memory_space<vmem>>, vector<16x72xf32>
    tpu.vector_store %arg25[%c16_183, %c0_184], %152 {strides = array<i32>} : memref<144x72xf32, #tpu.memory_space<vmem>>, vector<16x72xf32>,
    %c0_185 = arith.constant 0 : index
    %c123_186 = arith.constant 123 : index
    %154 = vector.load %arg29[%c0_185, %c123_186] : memref<16x328xf32, #tpu.memory_space<vmem>>, vector<16x72xf32>
    %c32_187 = arith.constant 32 : index
    %c0_188 = arith.constant 0 : index
    %155 = vector.load %arg25[%c32_187, %c0_188] : memref<144x72xf32, #tpu.memory_space<vmem>>, vector<16x72xf32>
    tpu.vector_store %arg25[%c32_187, %c0_188], %154 {strides = array<i32>} : memref<144x72xf32, #tpu.memory_space<vmem>>, vector<16x72xf32>,
    %c0_189 = arith.constant 0 : index
    %c127_190 = arith.constant 127 : index
    %156 = vector.load %arg29[%c0_189, %c127_190] : memref<16x328xf32, #tpu.memory_space<vmem>>, vector<16x72xf32>
    %c48_191 = arith.constant 48 : index
    %c0_192 = arith.constant 0 : index
    %157 = vector.load %arg25[%c48_191, %c0_192] : memref<144x72xf32, #tpu.memory_space<vmem>>, vector<16x72xf32>
    tpu.vector_store %arg25[%c48_191, %c0_192], %156 {strides = array<i32>} : memref<144x72xf32, #tpu.memory_space<vmem>>, vector<16x72xf32>,
    %c0_193 = arith.constant 0 : index
    %c128_194 = arith.constant 128 : index
    %158 = vector.load %arg29[%c0_193, %c128_194] : memref<16x328xf32, #tpu.memory_space<vmem>>, vector<16x72xf32>
    %c64_195 = arith.constant 64 : index
    %c0_196 = arith.constant 0 : index
    %159 = vector.load %arg25[%c64_195, %c0_196] : memref<144x72xf32, #tpu.memory_space<vmem>>, vector<16x72xf32>
    tpu.vector_store %arg25[%c64_195, %c0_196], %158 {strides = array<i32>} : memref<144x72xf32, #tpu.memory_space<vmem>>, vector<16x72xf32>,
    %c0_197 = arith.constant 0 : index
    %c129_198 = arith.constant 129 : index
    %160 = vector.load %arg29[%c0_197, %c129_198] : memref<16x328xf32, #tpu.memory_space<vmem>>, vector<16x72xf32>
    %c80_199 = arith.constant 80 : index
    %c0_200 = arith.constant 0 : index
    %161 = vector.load %arg25[%c80_199, %c0_200] : memref<144x72xf32, #tpu.memory_space<vmem>>, vector<16x72xf32>
    tpu.vector_store %arg25[%c80_199, %c0_200], %160 {strides = array<i32>} : memref<144x72xf32, #tpu.memory_space<vmem>>, vector<16x72xf32>,
    %c0_201 = arith.constant 0 : index
    %c133_202 = arith.constant 133 : index
    %162 = vector.load %arg29[%c0_201, %c133_202] : memref<16x328xf32, #tpu.memory_space<vmem>>, vector<16x72xf32>
    %c96_203 = arith.constant 96 : index
    %c0_204 = arith.constant 0 : index
    %163 = vector.load %arg25[%c96_203, %c0_204] : memref<144x72xf32, #tpu.memory_space<vmem>>, vector<16x72xf32>
    tpu.vector_store %arg25[%c96_203, %c0_204], %162 {strides = array<i32>} : memref<144x72xf32, #tpu.memory_space<vmem>>, vector<16x72xf32>,
    %c0_205 = arith.constant 0 : index
    %c134_206 = arith.constant 134 : index
    %164 = vector.load %arg29[%c0_205, %c134_206] : memref<16x328xf32, #tpu.memory_space<vmem>>, vector<16x72xf32>
    %c112_207 = arith.constant 112 : index
    %c0_208 = arith.constant 0 : index
    %165 = vector.load %arg25[%c112_207, %c0_208] : memref<144x72xf32, #tpu.memory_space<vmem>>, vector<16x72xf32>
    tpu.vector_store %arg25[%c112_207, %c0_208], %164 {strides = array<i32>} : memref<144x72xf32, #tpu.memory_space<vmem>>, vector<16x72xf32>,
    %c0_209 = arith.constant 0 : index
    %c135_210 = arith.constant 135 : index
    %166 = vector.load %arg29[%c0_209, %c135_210] : memref<16x328xf32, #tpu.memory_space<vmem>>, vector<16x72xf32>
    %c128_211 = arith.constant 128 : index
    %c0_212 = arith.constant 0 : index
    %167 = vector.load %arg25[%c128_211, %c0_212] : memref<144x72xf32, #tpu.memory_space<vmem>>, vector<16x72xf32>
    tpu.vector_store %arg25[%c128_211, %c0_212], %166 {strides = array<i32>} : memref<144x72xf32, #tpu.memory_space<vmem>>, vector<16x72xf32>,
    %c0_213 = arith.constant 0 : index
    %c0_214 = arith.constant 0 : index
    %168 = vector.load %arg12[%c0_213, %c0_214] : memref<16x144xf32, #tpu.memory_space<vmem>>, vector<16x144xf32>
    %c0_215 = arith.constant 0 : index
    %c0_216 = arith.constant 0 : index
    %169 = vector.load %arg25[%c0_215, %c0_216] : memref<144x72xf32, #tpu.memory_space<vmem>>, vector<144x72xf32>
    %cst_217 = arith.constant dense<0.000000e+00> : vector<16x72xf32>
    %170 = tpu.matmul %168, %169, %cst_217 {dimension_numbers = #tpu.dot_dimension_numbers<[1], [0], [0], [1], [0, 0, 1, 1], [], []>} : vector<16x144xf32>, vector<144x72xf32>, vector<16x72xf32> -> vector<16x72xf32>
    %c0_218 = arith.constant 0 : index
    %c0_219 = arith.constant 0 : index
    %171 = vector.load %arg13[%c0_218, %c0_219] : memref<16x1xf32, #tpu.memory_space<vmem>>, vector<16x1xf32>
    %172 = vector.broadcast %171 : vector<16x1xf32> to vector<16x72xf32>
    %173 = arith.addf %170, %172 : vector<16x72xf32>
    %cst_220 = arith.constant 0.000000e+00 : f32
    %174 = vector.broadcast %cst_220 : f32 to vector<16x72xf32>
    %175 = arith.maximumf %173, %174 : vector<16x72xf32>
    %c0_221 = arith.constant 0 : index
    %c0_222 = arith.constant 0 : index
    %176 = vector.load %arg15[%c0_221, %c0_222] : memref<72x32xf32, #tpu.memory_space<vmem>>, vector<72x32xf32>
    %cst_223 = arith.constant dense<0.000000e+00> : vector<16x32xf32>
    %177 = tpu.matmul %175, %176, %cst_223 {dimension_numbers = #tpu.dot_dimension_numbers<[1], [0], [0], [1], [0, 0, 1, 1], [], []>} : vector<16x72xf32>, vector<72x32xf32>, vector<16x32xf32> -> vector<16x32xf32>
    %c0_224 = arith.constant 0 : index
    %c0_225 = arith.constant 0 : index
    %178 = vector.load %arg22[%c0_224, %c0_225] : memref<16x32xf32, #tpu.memory_space<vmem>>, vector<16x32xf32>
    tpu.vector_store %arg22[%c0_224, %c0_225], %177 {strides = array<i32>} : memref<16x32xf32, #tpu.memory_space<vmem>>, vector<16x32xf32>,
    %c0_226 = arith.constant 0 : index
    %c0_227 = arith.constant 0 : index
    %179 = vector.load %arg16[%c0_226, %c0_227] : memref<256x16xf32, #tpu.memory_space<vmem>>, vector<256x16xf32>
    %cst_228 = arith.constant dense<0.000000e+00> : vector<256x32xf32>
    %180 = tpu.matmul %179, %177, %cst_228 {dimension_numbers = #tpu.dot_dimension_numbers<[1], [0], [0], [1], [0, 0, 1, 1], [], []>} : vector<256x16xf32>, vector<16x32xf32>, vector<256x32xf32> -> vector<256x32xf32>
    %c0_229 = arith.constant 0 : index
    %c0_230 = arith.constant 0 : index
    %181 = vector.load %arg17[%c0_229, %c0_230] : memref<256x32xf32, #tpu.memory_space<vmem>>, vector<256x32xf32>
    %182 = arith.mulf %180, %181 : vector<256x32xf32>
    %c0_231 = arith.constant 0 : index
    %c0_232 = arith.constant 0 : index
    %183 = vector.load %arg18[%c0_231, %c0_232] : memref<32x2xf32, #tpu.memory_space<vmem>>, vector<32x2xf32>
    %cst_233 = arith.constant dense<0.000000e+00> : vector<256x2xf32>
    %184 = tpu.matmul %182, %183, %cst_233 {dimension_numbers = #tpu.dot_dimension_numbers<[1], [0], [0], [1], [0, 0, 1, 1], [], []>} : vector<256x32xf32>, vector<32x2xf32>, vector<256x2xf32> -> vector<256x2xf32>
    %c0_234 = arith.constant 0 : index
    %c0_235 = arith.constant 0 : index
    %185 = vector.load %arg19[%c0_234, %c0_235] : memref<10x256xf32, #tpu.memory_space<vmem>>, vector<10x256xf32>
    %cst_236 = arith.constant dense<0.000000e+00> : vector<10x2xf32>
    %186 = tpu.matmul %185, %184, %cst_236 {dimension_numbers = #tpu.dot_dimension_numbers<[1], [0], [0], [1], [0, 0, 1, 1], [], []>} : vector<10x256xf32>, vector<256x2xf32>, vector<10x2xf32> -> vector<10x2xf32>
    %c0_237 = arith.constant 0 : index
    %c0_238 = arith.constant 0 : index
    %187 = vector.load %arg20[%c0_237, %c0_238] : memref<10x1xf32, #tpu.memory_space<vmem>>, vector<10x1xf32>
    %188 = vector.broadcast %187 : vector<10x1xf32> to vector<10x2xf32>
    %189 = arith.addf %186, %188 : vector<10x2xf32>
    %c0_239 = arith.constant 0 : index
    %c0_240 = arith.constant 0 : index
    %190 = vector.load %arg21[%c0_239, %c0_240] : memref<10x2xf32, #tpu.memory_space<vmem>>, vector<10x2xf32>
    tpu.vector_store %arg21[%c0_239, %c0_240], %189 {strides = array<i32>} : memref<10x2xf32, #tpu.memory_space<vmem>>, vector<10x2xf32>,
    return
  }
  func.func @transform_0(%arg0: i32) -> (i32, i32) {
    %c0_i32 = arith.constant 0 : i32
    %c0_i32_0 = arith.constant 0 : i32
    %c0_i32_1 = arith.constant 0 : i32
    return %c0_i32, %c0_i32_0 : i32, i32
  }
  func.func @transform_1(%arg0: i32) -> (i32, i32) {
    %c0_i32 = arith.constant 0 : i32
    %c0_i32_0 = arith.constant 0 : i32
    %c0_i32_1 = arith.constant 0 : i32
    return %c0_i32, %c0_i32_0 : i32, i32
  }
  func.func @transform_2(%arg0: i32) -> (i32, i32) {
    %c0_i32 = arith.constant 0 : i32
    %c0_i32_0 = arith.constant 0 : i32
    %c0_i32_1 = arith.constant 0 : i32
    return %c0_i32, %c0_i32_0 : i32, i32
  }
  func.func @transform_3(%arg0: i32) -> (i32, i32) {
    %c0_i32 = arith.constant 0 : i32
    %c0_i32_0 = arith.constant 0 : i32
    %c0_i32_1 = arith.constant 0 : i32
    return %c0_i32, %c0_i32_0 : i32, i32
  }
  func.func @transform_4(%arg0: i32) -> (i32, i32) {
    %c0_i32 = arith.constant 0 : i32
    %c0_i32_0 = arith.constant 0 : i32
    %c0_i32_1 = arith.constant 0 : i32
    return %c0_i32, %c0_i32_0 : i32, i32
  }
  func.func @transform_5(%arg0: i32) -> (i32, i32) {
    %c0_i32 = arith.constant 0 : i32
    %c0_i32_0 = arith.constant 0 : i32
    %c0_i32_1 = arith.constant 0 : i32
    return %c0_i32, %c0_i32_0 : i32, i32
  }
  func.func @transform_6(%arg0: i32) -> (i32, i32) {
    %c0_i32 = arith.constant 0 : i32
    %c0_i32_0 = arith.constant 0 : i32
    %c0_i32_1 = arith.constant 0 : i32
    return %c0_i32, %c0_i32_0 : i32, i32
  }
  func.func @transform_7(%arg0: i32) -> (i32, i32) {
    %c0_i32 = arith.constant 0 : i32
    %c0_i32_0 = arith.constant 0 : i32
    %c0_i32_1 = arith.constant 0 : i32
    return %c0_i32, %c0_i32_0 : i32, i32
  }
  func.func @transform_8(%arg0: i32) -> (i32, i32) {
    %c0_i32 = arith.constant 0 : i32
    %c0_i32_0 = arith.constant 0 : i32
    %c0_i32_1 = arith.constant 0 : i32
    return %c0_i32, %c0_i32_0 : i32, i32
  }
  func.func @transform_9(%arg0: i32) -> (i32, i32) {
    %c0_i32 = arith.constant 0 : i32
    %c0_i32_0 = arith.constant 0 : i32
    %c0_i32_1 = arith.constant 0 : i32
    return %c0_i32, %c0_i32_0 : i32, i32
  }
  func.func @transform_10(%arg0: i32) -> (i32, i32) {
    %c0_i32 = arith.constant 0 : i32
    %c0_i32_0 = arith.constant 0 : i32
    %c0_i32_1 = arith.constant 0 : i32
    return %c0_i32, %c0_i32_0 : i32, i32
  }
  func.func @transform_11(%arg0: i32) -> (i32, i32) {
    %c0_i32 = arith.constant 0 : i32
    %c0_i32_0 = arith.constant 0 : i32
    %c0_i32_1 = arith.constant 0 : i32
    return %c0_i32, %c0_i32_0 : i32, i32
  }
  func.func @transform_12(%arg0: i32) -> (i32, i32) {
    %c0_i32 = arith.constant 0 : i32
    %c0_i32_0 = arith.constant 0 : i32
    %c0_i32_1 = arith.constant 0 : i32
    return %c0_i32, %c0_i32_0 : i32, i32
  }
  func.func @transform_13(%arg0: i32) -> (i32, i32) {
    %c0_i32 = arith.constant 0 : i32
    %c0_i32_0 = arith.constant 0 : i32
    %c0_i32_1 = arith.constant 0 : i32
    return %c0_i32, %c0_i32_0 : i32, i32
  }
  func.func @transform_14(%arg0: i32) -> (i32, i32) {
    %c0_i32 = arith.constant 0 : i32
    %c0_i32_0 = arith.constant 0 : i32
    %c0_i32_1 = arith.constant 0 : i32
    return %c0_i32, %c0_i32_0 : i32, i32
  }
  func.func @transform_15(%arg0: i32) -> (i32, i32) {
    %c0_i32 = arith.constant 0 : i32
    %c0_i32_0 = arith.constant 0 : i32
    %c0_i32_1 = arith.constant 0 : i32
    return %c0_i32, %c0_i32_0 : i32, i32
  }
  func.func @transform_16(%arg0: i32) -> (i32, i32) {
    %c0_i32 = arith.constant 0 : i32
    %c0_i32_0 = arith.constant 0 : i32
    %c0_i32_1 = arith.constant 0 : i32
    return %c0_i32, %c0_i32_0 : i32, i32
  }
  func.func @transform_17(%arg0: i32) -> (i32, i32) {
    %c0_i32 = arith.constant 0 : i32
    %c0_i32_0 = arith.constant 0 : i32
    %c0_i32_1 = arith.constant 0 : i32
    return %c0_i32, %c0_i32_0 : i32, i32
  }
  func.func @transform_18(%arg0: i32) -> (i32, i32) {
    %c0_i32 = arith.constant 0 : i32
    %c0_i32_0 = arith.constant 0 : i32
    %c0_i32_1 = arith.constant 0 : i32
    return %c0_i32, %c0_i32_0 : i32, i32
  }
  func.func @transform_19(%arg0: i32) -> (i32, i32) {
    %c0_i32 = arith.constant 0 : i32
    %c0_i32_0 = arith.constant 0 : i32
    %c0_i32_1 = arith.constant 0 : i32
    return %c0_i32, %c0_i32_0 : i32, i32
  }
  func.func @transform_20(%arg0: i32) -> (i32, i32) {
    %c0_i32 = arith.constant 0 : i32
    %c0_i32_0 = arith.constant 0 : i32
    %c0_i32_1 = arith.constant 0 : i32
    return %c0_i32, %c0_i32_0 : i32, i32
  }
  func.func @transform_21(%arg0: i32) -> (i32, i32) {
    %c0_i32 = arith.constant 0 : i32
    %c0_i32_0 = arith.constant 0 : i32
    %c0_i32_1 = arith.constant 0 : i32
    return %c0_i32, %c0_i32_0 : i32, i32
  }
}

</mosaic_0001>

<llo_original>
// kernel: forward.1
$region0: #{forward.1}
  #allocation0 [shape = 'u32[]', space=smem, size = 0x4, offset = 0x4, fixed_abs, tag = 'smem constant byte address 0x4 - core index']
  #allocation1 [shape = 'u32[144,128]{1,0:T(1,128)}', space=vmem, size = 0x12000, scoped, tag = 'internal scratch']
  #allocation2 [shape = 'f32[32,648]{1,0:T(8,128)}', space=vmem, size = 0x18000, scoped, tag = 'scratch operand']
  #allocation3 [shape = 'f32[72,200]{1,0:T(8,128)}', space=vmem, size = 0x12000, scoped, tag = 'scratch operand']
  #allocation4 [shape = 'f32[144,72]{1,0:T(8,128)}', space=vmem, size = 0x12000, scoped, tag = 'scratch operand']
  #allocation5 [shape = 'f32[8,456]{1,0:T(8,128)}', space=vmem, size = 0x4000, scoped, tag = 'scratch operand']
  #allocation6 [shape = 'f32[16,328]{1,0:T(8,128)}', space=vmem, size = 0x6000, scoped, tag = 'scratch operand']
  #allocation7 [shape = 'f32[16,328]{1,0:T(8,128)}', space=vmem, size = 0x6000, scoped, tag = 'scratch operand']
  #allocation8 [shape = 'f32[16,328]{1,0:T(8,128)}', space=vmem, size = 0x6000, scoped, tag = 'scratch operand']
  %s0 = inlined_call_operand.vmem [shape: f32[3,904], index: 0, kind: input, shape index: {}]
  %s1 = inlined_call_operand.vmem [shape: f32[8,32], index: 1, kind: input, shape index: {}]
  %s2 = inlined_call_operand.vmem [shape: f32[8,1], index: 2, kind: input, shape index: {}]
  %s3 = inlined_call_operand.vmem [shape: bf16[629,200], index: 3, kind: input, shape index: {}]
  %s4 = inlined_call_operand.vmem [shape: f32[16,72], index: 4, kind: input, shape index: {}]
  %s5 = inlined_call_operand.vmem [shape: f32[16,1], index: 5, kind: input, shape index: {}]
  %s6 = inlined_call_operand.vmem [shape: bf16[189,72], index: 6, kind: input, shape index: {}]
  %s7 = inlined_call_operand.vmem [shape: f32[16,144], index: 7, kind: input, shape index: {}]
  %s8 = inlined_call_operand.vmem [shape: f32[16,1], index: 8, kind: input, shape index: {}]
  %s9 = inlined_call_operand.vmem [shape: f32[16,144], index: 9, kind: input, shape index: {}]
  %s10 = inlined_call_operand.vmem [shape: f32[16,1], index: 10, kind: input, shape index: {}]
  %s11 = inlined_call_operand.vmem [shape: f32[16,144], index: 11, kind: input, shape index: {}]
  %s12 = inlined_call_operand.vmem [shape: f32[16,1], index: 12, kind: input, shape index: {}]
  %s13 = inlined_call_operand.vmem [shape: f32[1,72], index: 13, kind: input, shape index: {}]
  %s14 = inlined_call_operand.vmem [shape: f32[72,32], index: 14, kind: input, shape index: {}]
  %s15 = inlined_call_operand.vmem [shape: f32[256,16], index: 15, kind: input, shape index: {}]
  %s16 = inlined_call_operand.vmem [shape: f32[256,32], index: 16, kind: input, shape index: {}]
  %s17 = inlined_call_operand.vmem [shape: f32[32,2], index: 17, kind: input, shape index: {}]
  %s18 = inlined_call_operand.vmem [shape: f32[10,256], index: 18, kind: input, shape index: {}]
  %s19 = inlined_call_operand.vmem [shape: f32[10,1], index: 19, kind: input, shape index: {}]
  %s20 = inlined_call_operand.vmem [shape: f32[10,2], index: 20, kind: output, shape index: {0}]
  %s21 = inlined_call_operand.vmem [shape: f32[16,32], index: 21, kind: output, shape index: {1}]
  %22 = xla_tuple %s20, %s21
  %s23 = sld [smem:[#allocation0]]
  $region98: #{forward.1} parent=0
    _
  %s25 = ssub.s32 1, %s23
  %s26 = scalar_select 0, %s25, %s23
  // Predicated region
  $region2: #{forward.1} parent=0 // pred_check
    _
  $region3: #{forward.1} parent=0 // pred_check_branch
    %28 = sbr.rel (0) target = $region5
  $region4: #{forward.1} parent=0 // pred_region
    _
  $region5: #{forward.1} parent=0 // pred_fallthru
    _
  // Predicated region
  $region6: #{forward.1} parent=0 // pred_check
    _
  $region7: #{forward.1} parent=0 // pred_check_branch
    %30 = sbr.rel (0) target = $region9
  $region8: #{forward.1} parent=0 // pred_region
    _
  $region9: #{forward.1} parent=0 // pred_fallthru
    _
  // Predicated region
  $region10: #{forward.1} parent=0 // pred_check
    _
  $region11: #{forward.1} parent=0 // pred_check_branch
    %32 = sbr.rel (0) target = $region13
  $region12: #{forward.1} parent=0 // pred_region
    _
  $region13: #{forward.1} parent=0 // pred_fallthru
    _
  // Predicated region
  $region14: #{forward.1} parent=0 // pred_check
    _
  $region15: #{forward.1} parent=0 // pred_check_branch
    %34 = sbr.rel (0) target = $region17
  $region16: #{forward.1} parent=0 // pred_region
    _
  $region17: #{forward.1} parent=0 // pred_fallthru
    _
  // Predicated region
  $region18: #{forward.1} parent=0 // pred_check
    _
  $region19: #{forward.1} parent=0 // pred_check_branch
    %36 = sbr.rel (0) target = $region21
  $region20: #{forward.1} parent=0 // pred_region
    _
  $region21: #{forward.1} parent=0 // pred_fallthru
    _
  // Predicated region
  $region22: #{forward.1} parent=0 // pred_check
    _
  $region23: #{forward.1} parent=0 // pred_check_branch
    %38 = sbr.rel (0) target = $region25
  $region24: #{forward.1} parent=0 // pred_region
    _
  $region25: #{forward.1} parent=0 // pred_fallthru
    _
  // Predicated region
  $region26: #{forward.1} parent=0 // pred_check
    _
  $region27: #{forward.1} parent=0 // pred_check_branch
    %40 = sbr.rel (0) target = $region29
  $region28: #{forward.1} parent=0 // pred_region
    _
  $region29: #{forward.1} parent=0 // pred_fallthru
    _
  // Predicated region
  $region30: #{forward.1} parent=0 // pred_check
    _
  $region31: #{forward.1} parent=0 // pred_check_branch
    %42 = sbr.rel (0) target = $region33
  $region32: #{forward.1} parent=0 // pred_region
    _
  $region33: #{forward.1} parent=0 // pred_fallthru
    _
  // Predicated region
  $region34: #{forward.1} parent=0 // pred_check
    _
  $region35: #{forward.1} parent=0 // pred_check_branch
    %44 = sbr.rel (0) target = $region37
  $region36: #{forward.1} parent=0 // pred_region
    _
  $region37: #{forward.1} parent=0 // pred_fallthru
    _
  // Predicated region
  $region38: #{forward.1} parent=0 // pred_check
    _
  $region39: #{forward.1} parent=0 // pred_check_branch
    %46 = sbr.rel (0) target = $region41
  $region40: #{forward.1} parent=0 // pred_region
    _
  $region41: #{forward.1} parent=0 // pred_fallthru
    _
  // Predicated region
  $region42: #{forward.1} parent=0 // pred_check
    _
  $region43: #{forward.1} parent=0 // pred_check_branch
    %48 = sbr.rel (0) target = $region45
  $region44: #{forward.1} parent=0 // pred_region
    _
  $region45: #{forward.1} parent=0 // pred_fallthru
    _
  // Predicated region
  $region46: #{forward.1} parent=0 // pred_check
    _
  $region47: #{forward.1} parent=0 // pred_check_branch
    %50 = sbr.rel (0) target = $region49
  $region48: #{forward.1} parent=0 // pred_region
    _
  $region49: #{forward.1} parent=0 // pred_fallthru
    _
  // Predicated region
  $region50: #{forward.1} parent=0 // pred_check
    _
  $region51: #{forward.1} parent=0 // pred_check_branch
    %52 = sbr.rel (0) target = $region53
  $region52: #{forward.1} parent=0 // pred_region
    _
  $region53: #{forward.1} parent=0 // pred_fallthru
    _
  // Predicated region
  $region54: #{forward.1} parent=0 // pred_check
    _
  $region55: #{forward.1} parent=0 // pred_check_branch
    %54 = sbr.rel (0) target = $region57
  $region56: #{forward.1} parent=0 // pred_region
    _
  $region57: #{forward.1} parent=0 // pred_fallthru
    _
  // Predicated region
  $region58: #{forward.1} parent=0 // pred_check
    _
  $region59: #{forward.1} parent=0 // pred_check_branch
    %56 = sbr.rel (0) target = $region61
  $region60: #{forward.1} parent=0 // pred_region
    _
  $region61: #{forward.1} parent=0 // pred_fallthru
    _
  // Predicated region
  $region62: #{forward.1} parent=0 // pred_check
    _
  $region63: #{forward.1} parent=0 // pred_check_branch
    %58 = sbr.rel (0) target = $region65
  $region64: #{forward.1} parent=0 // pred_region
    _
  $region65: #{forward.1} parent=0 // pred_fallthru
    _
  // Predicated region
  $region66: #{forward.1} parent=0 // pred_check
    _
  $region67: #{forward.1} parent=0 // pred_check_branch
    %60 = sbr.rel (0) target = $region69
  $region68: #{forward.1} parent=0 // pred_region
    _
  $region69: #{forward.1} parent=0 // pred_fallthru
    _
  // Predicated region
  $region70: #{forward.1} parent=0 // pred_check
    _
  $region71: #{forward.1} parent=0 // pred_check_branch
    %62 = sbr.rel (0) target = $region73
  $region72: #{forward.1} parent=0 // pred_region
    _
  $region73: #{forward.1} parent=0 // pred_fallthru
    _
  // Predicated region
  $region74: #{forward.1} parent=0 // pred_check
    _
  $region75: #{forward.1} parent=0 // pred_check_branch
    %64 = sbr.rel (0) target = $region77
  $region76: #{forward.1} parent=0 // pred_region
    _
  $region77: #{forward.1} parent=0 // pred_fallthru
    _
  // Predicated region
  $region78: #{forward.1} parent=0 // pred_check
    _
  $region79: #{forward.1} parent=0 // pred_check_branch
    %66 = sbr.rel (0) target = $region81
  $region80: #{forward.1} parent=0 // pred_region
    _
  $region81: #{forward.1} parent=0 // pred_fallthru
    _
  %67 = vst [vmem:[#allocation2 + $0x90] sm:$0xf8] 0.0
  %68 = vst [vmem:[#allocation2 + $0x98] sm:$0xf8] 0.0
  %69 = vst [vmem:[#allocation2 + $0xa0] sm:$0xf8] 0.0
  %70 = vst [vmem:[#allocation2 + $0xa8] sm:$0xf8] 0.0
  %71 = vst [vmem:[#allocation2 + $0xb0] sm:$0xf8] 0.0
  %vm72 = vcmask 64515
  %73 = vst.msk [vmem:[#allocation2 + $0xb8] sm:$0xf8] %vm72, 0.0
  %74 = vst [vmem:[#allocation5] sm:$0xff] 0.0
  %vm75 = vcmask 1048128
  %76 = vst.msk [vmem:[#allocation5 + $0x10] sm:$0xff] %vm75, 0.0
  %vm77 = vcmask 588800
  %78 = vst.msk [vmem:[#allocation5 + $0x18] sm:$0xff] %vm77, 0.0
  %79 = vst [vmem:[#allocation6] sm:$0xff] 0.0
  %80 = vst [vmem:[#allocation6 + $0x18] sm:$0xff] 0.0
  %81 = vst.msk [vmem:[#allocation6 + $0x8] sm:$0xff] %vm75, 0.0
  %82 = vst.msk [vmem:[#allocation6 + $0x10] sm:$0xff] %vm77, 0.0
  %83 = vst.msk [vmem:[#allocation6 + $0x20] sm:$0xff] %vm75, 0.0
  %84 = vst.msk [vmem:[#allocation6 + $0x28] sm:$0xff] %vm77, 0.0
  %85 = vst [vmem:[#allocation7] sm:$0xff] 0.0
  %86 = vst [vmem:[#allocation7 + $0x18] sm:$0xff] 0.0
  %87 = vst.msk [vmem:[#allocation7 + $0x8] sm:$0xff] %vm75, 0.0
  %88 = vst.msk [vmem:[#allocation7 + $0x10] sm:$0xff] %vm77, 0.0
  %89 = vst.msk [vmem:[#allocation7 + $0x20] sm:$0xff] %vm75, 0.0
  %90 = vst.msk [vmem:[#allocation7 + $0x28] sm:$0xff] %vm77, 0.0
  %91 = vst [vmem:[#allocation8] sm:$0xff] 0.0
  %92 = vst [vmem:[#allocation8 + $0x18] sm:$0xff] 0.0
  %93 = vst.msk [vmem:[#allocation8 + $0x8] sm:$0xff] %vm75, 0.0
  %94 = vst.msk [vmem:[#allocation8 + $0x10] sm:$0xff] %vm77, 0.0
  %95 = vst.msk [vmem:[#allocation8 + $0x20] sm:$0xff] %vm75, 0.0
  %96 = vst.msk [vmem:[#allocation8 + $0x28] sm:$0xff] %vm77, 0.0
  %v97 = vld [vmem:[%s0] sm:$0x77]
  %v98 = vld [vmem:[%s0 + $0x8] sm:$0x77]
  %v99 = vld [vmem:[%s0 + $0x10] sm:$0x77]
  %v103 = vcombine.high %v97, %v97
  %v104 = vcombine.high %v98, %v98
  %v105 = vcombine.high %v99, %v99
  %106 = vrot.lane.b32.xlu0 %v97, 19
  %v107 = vpop.permute.xlu0 %106
  %108 = vrot.lane.b32.xlu0 %v103, 19
  %v109 = vpop.permute.xlu0 %108
  %110 = vrot.lane.b32.xlu0 %v98, 19
  %v111 = vpop.permute.xlu0 %110
  %112 = vrot.lane.b32.xlu0 %v104, 19
  %v113 = vpop.permute.xlu0 %112
  %114 = vrot.lane.b32.xlu0 %v99, 19
  %v115 = vpop.permute.xlu0 %114
  %116 = vrot.lane.b32.xlu0 %v105, 19
  %v117 = vpop.permute.xlu0 %116
  %vm118 = vcmask 154624
  %v119 = vsel %vm118, %v107, %v109
  %v120 = vsel %vm118, %v109, %v111
  %v121 = vsel %vm118, %v111, %v113
  %v122 = vsel %vm118, %v113, %v115
  %v123 = vsel %vm118, %v115, %v117
  %130 = vst [vmem:[#allocation2] sm:$0x7] %v119
  %131 = vst [vmem:[#allocation2 + $0x8] sm:$0x7] %v120
  %132 = vst [vmem:[#allocation2 + $0x10] sm:$0x7] %v121
  %133 = vst [vmem:[#allocation2 + $0x18] sm:$0x7] %v122
  %134 = vst [vmem:[#allocation2 + $0x20] sm:$0x7] %v123
  %vm135 = vcmask 59392
  %136 = vst.msk [vmem:[#allocation2 + $0x28] sm:$0x7] %vm135, %v117
  %v137 = vld [vmem:[%s0] sm:$0x77]
  %v138 = vld [vmem:[%s0 + $0x8] sm:$0x77]
  %v139 = vld [vmem:[%s0 + $0x10] sm:$0x77]
  %v143 = vcombine.high %v137, %v137
  %v144 = vcombine.high %v138, %v138
  %v145 = vcombine.high %v139, %v139
  %v146 = vrot.slane %v137, 5
  %v147 = vrot.slane %v143, 5
  %v148 = vrot.slane %v138, 5
  %v149 = vrot.slane %v144, 5
  %v150 = vrot.slane %v139, 5
  %v151 = vrot.slane %v145, 5
  %152 = vrot.lane.b32.xlu0 %v146, 18
  %v153 = vpop.permute.xlu0 %152
  %154 = vrot.lane.b32.xlu0 %v147, 18
  %v155 = vpop.permute.xlu0 %154
  %156 = vrot.lane.b32.xlu0 %v148, 18
  %v157 = vpop.permute.xlu0 %156
  %158 = vrot.lane.b32.xlu0 %v149, 18
  %v159 = vpop.permute.xlu0 %158
  %160 = vrot.lane.b32.xlu0 %v150, 18
  %v161 = vpop.permute.xlu0 %160
  %162 = vrot.lane.b32.xlu0 %v151, 18
  %v163 = vpop.permute.xlu0 %162
  %vm164 = vcmask 146432
  %v165 = vsel %vm164, %v153, %v155
  %v166 = vsel %vm164, %v155, %v157
  %v167 = vsel %vm164, %v157, %v159
  %v168 = vsel %vm164, %v159, %v161
  %v169 = vsel %vm164, %v161, %v163
  %176 = vst [vmem:[#allocation2] sm:$0x38] %v165
  %177 = vst [vmem:[#allocation2 + $0x8] sm:$0x38] %v166
  %178 = vst [vmem:[#allocation2 + $0x10] sm:$0x38] %v167
  %179 = vst [vmem:[#allocation2 + $0x18] sm:$0x38] %v168
  %180 = vst [vmem:[#allocation2 + $0x20] sm:$0x38] %v169
  %vm181 = vcmask 62467
  %182 = vst.msk [vmem:[#allocation2 + $0x28] sm:$0x38] %vm181, %v163
  %v183 = vld [vmem:[%s0] sm:$0x77]
  %v184 = vld [vmem:[%s0 + $0x8] sm:$0x77]
  %v185 = vld [vmem:[%s0 + $0x10] sm:$0x77]
  %v189 = vcombine.high %v183, %v183
  %v190 = vcombine.high %v184, %v184
  %v191 = vcombine.high %v185, %v185
  %v192 = vrot.slane %v183, 2
  %v193 = vrot.slane %v189, 2
  %v194 = vrot.slane %v184, 2
  %v195 = vrot.slane %v190, 2
  %v196 = vrot.slane %v185, 2
  %v197 = vrot.slane %v191, 2
  %198 = vrot.lane.b32.xlu0 %v192, 17
  %v199 = vpop.permute.xlu0 %198
  %200 = vrot.lane.b32.xlu0 %v193, 17
  %v201 = vpop.permute.xlu0 %200
  %202 = vrot.lane.b32.xlu0 %v194, 17
  %v203 = vpop.permute.xlu0 %202
  %204 = vrot.lane.b32.xlu0 %v195, 17
  %v205 = vpop.permute.xlu0 %204
  %206 = vrot.lane.b32.xlu0 %v196, 17
  %v207 = vpop.permute.xlu0 %206
  %208 = vrot.lane.b32.xlu0 %v197, 17
  %v209 = vpop.permute.xlu0 %208
  %vm210 = vcmask 138240
  %v211 = vsel %vm210, %v199, %v201
  %v212 = vsel %vm210, %v201, %v203
  %v213 = vsel %vm210, %v203, %v205
  %v214 = vsel %vm210, %v205, %v207
  %v215 = vsel %vm210, %v207, %v209
  %222 = vst [vmem:[#allocation2] sm:$0xc0] %v211
  %223 = vst [vmem:[#allocation2 + $0x8] sm:$0xc0] %v212
  %224 = vst [vmem:[#allocation2 + $0x10] sm:$0xc0] %v213
  %225 = vst [vmem:[#allocation2 + $0x18] sm:$0xc0] %v214
  %226 = vst [vmem:[#allocation2 + $0x20] sm:$0xc0] %v215
  %vm227 = vcmask 64518
  %228 = vst.msk [vmem:[#allocation2 + $0x28] sm:$0xc0] %vm227, %v209
  %229 = vst [vmem:[#allocation2 + $0x30] sm:$0x1] %v211
  %230 = vst [vmem:[#allocation2 + $0x38] sm:$0x1] %v212
  %231 = vst [vmem:[#allocation2 + $0x40] sm:$0x1] %v213
  %232 = vst [vmem:[#allocation2 + $0x48] sm:$0x1] %v214
  %233 = vst [vmem:[#allocation2 + $0x50] sm:$0x1] %v215
  %vm234 = vcmask 57344
  %235 = vst.msk [vmem:[#allocation2 + $0x58] sm:$0x1] %vm234, %v209
  %v236 = vld [vmem:[%s0] sm:$0x77]
  %v237 = vld [vmem:[%s0 + $0x8] sm:$0x77]
  %v238 = vld [vmem:[%s0 + $0x10] sm:$0x77]
  %v239 = vld [vmem:[%s0 + $0x18] sm:$0x7]
  %v244 = vcombine.high %v236, %v236
  %v245 = vcombine.high %v237, %v237
  %v246 = vcombine.high %v238, %v238
  %v247 = vrot.slane %v236, 7
  %v248 = vrot.slane %v244, 7
  %v249 = vrot.slane %v237, 7
  %v250 = vrot.slane %v245, 7
  %v251 = vrot.slane %v238, 7
  %v252 = vrot.slane %v246, 7
  %v253 = vrot.slane %v239, 7
  %254 = vrot.lane.b32.xlu0 %v247, 1
  %v255 = vpop.permute.xlu0 %254
  %256 = vrot.lane.b32.xlu0 %v248, 1
  %v257 = vpop.permute.xlu0 %256
  %258 = vrot.lane.b32.xlu0 %v249, 1
  %v259 = vpop.permute.xlu0 %258
  %260 = vrot.lane.b32.xlu0 %v250, 1
  %v261 = vpop.permute.xlu0 %260
  %262 = vrot.lane.b32.xlu0 %v251, 1
  %v263 = vpop.permute.xlu0 %262
  %264 = vrot.lane.b32.xlu0 %v252, 1
  %v265 = vpop.permute.xlu0 %264
  %266 = vrot.lane.b32.xlu0 %v253, 1
  %v267 = vpop.permute.xlu0 %266
  %vm268 = vcmask 7168
  %v269 = vsel %vm268, %v255, %v257
  %v270 = vsel %vm268, %v257, %v259
  %v271 = vsel %vm268, %v259, %v261
  %v272 = vsel %vm268, %v261, %v263
  %v273 = vsel %vm268, %v263, %v265
  %v274 = vsel %vm268, %v265, %v267
  %281 = vst [vmem:[#allocation2 + $0x30] sm:$0xe] %v269
  %282 = vst [vmem:[#allocation2 + $0x38] sm:$0xe] %v270
  %283 = vst [vmem:[#allocation2 + $0x40] sm:$0xe] %v271
  %284 = vst [vmem:[#allocation2 + $0x48] sm:$0xe] %v272
  %285 = vst [vmem:[#allocation2 + $0x50] sm:$0xe] %v273
  %vm286 = vcmask 60417
  %287 = vst.msk [vmem:[#allocation2 + $0x58] sm:$0xe] %vm286, %v274
  %v288 = vld [vmem:[%s0 + $0x4] sm:$0x77]
  %v289 = vld [vmem:[%s0 + $0xc] sm:$0x77]
  %v290 = vld [vmem:[%s0 + $0x14] sm:$0x77]
  %v294 = vcombine.low %v288, %v288
  %v295 = vcombine.low %v289, %v289
  %v296 = vcombine.low %v290, %v290
  %300 = vst [vmem:[#allocation2 + $0x30] sm:$0x70] %v294
  %301 = vst [vmem:[#allocation2 + $0x38] sm:$0x70] %v288
  %302 = vst [vmem:[#allocation2 + $0x40] sm:$0x70] %v295
  %303 = vst [vmem:[#allocation2 + $0x48] sm:$0x70] %v289
  %304 = vst [vmem:[#allocation2 + $0x50] sm:$0x70] %v296
  %vm305 = vcmask 63492
  %306 = vst.msk [vmem:[#allocation2 + $0x58] sm:$0x70] %vm305, %v290
  %v307 = vld [vmem:[%s0 + $0x4] sm:$0x77]
  %v308 = vld [vmem:[%s0 + $0xc] sm:$0x77]
  %v309 = vld [vmem:[%s0 + $0x14] sm:$0x77]
  %v313 = vcombine.high %v307, %v307
  %v314 = vcombine.high %v308, %v308
  %v315 = vcombine.high %v309, %v309
  %v316 = vrot.slane %v307, 1
  %v317 = vrot.slane %v313, 1
  %v318 = vrot.slane %v308, 1
  %v319 = vrot.slane %v314, 1
  %v320 = vrot.slane %v309, 1
  %v321 = vrot.slane %v315, 1
  %322 = vrot.lane.b32.xlu0 %v316, 127
  %v323 = vpop.permute.xlu0 %322
  %324 = vrot.lane.b32.xlu0 %v317, 127
  %v325 = vpop.permute.xlu0 %324
  %326 = vrot.lane.b32.xlu0 %v318, 127
  %v327 = vpop.permute.xlu0 %326
  %328 = vrot.lane.b32.xlu0 %v319, 127
  %v329 = vpop.permute.xlu0 %328
  %330 = vrot.lane.b32.xlu0 %v320, 127
  %v331 = vpop.permute.xlu0 %330
  %332 = vrot.lane.b32.xlu0 %v321, 127
  %v333 = vpop.permute.xlu0 %332
  %vm334 = vcmask 1039360
  %v335 = vsel %vm334, %v323, %v325
  %v336 = vsel %vm334, %v325, %v327
  %v337 = vsel %vm334, %v327, %v329
  %v338 = vsel %vm334, %v329, %v331
  %v339 = vsel %vm334, %v331, %v333
  %346 = vst [vmem:[#allocation2 + $0x30] sm:$0x80] %v335
  %347 = vst [vmem:[#allocation2 + $0x38] sm:$0x80] %v336
  %348 = vst [vmem:[#allocation2 + $0x40] sm:$0x80] %v337
  %349 = vst [vmem:[#allocation2 + $0x48] sm:$0x80] %v338
  %350 = vst [vmem:[#allocation2 + $0x50] sm:$0x80] %v339
  %vm351 = vcmask 64519
  %352 = vst.msk [vmem:[#allocation2 + $0x58] sm:$0x80] %vm351, %v333
  %353 = vst [vmem:[#allocation2 + $0x60] sm:$0x3] %v335
  %354 = vst [vmem:[#allocation2 + $0x68] sm:$0x3] %v336
  %355 = vst [vmem:[#allocation2 + $0x70] sm:$0x3] %v337
  %356 = vst [vmem:[#allocation2 + $0x78] sm:$0x3] %v338
  %357 = vst [vmem:[#allocation2 + $0x80] sm:$0x3] %v339
  %vm358 = vcmask 58368
  %359 = vst.msk [vmem:[#allocation2 + $0x88] sm:$0x3] %vm358, %v333
  %v360 = vld [vmem:[%s0 + $0x4] sm:$0x77]
  %v361 = vld [vmem:[%s0 + $0xc] sm:$0x77]
  %v362 = vld [vmem:[%s0 + $0x14] sm:$0x77]
  %v366 = vcombine.high %v360, %v360
  %v367 = vcombine.high %v361, %v361
  %v368 = vcombine.high %v362, %v362
  %v369 = vrot.slane %v360, 6
  %v370 = vrot.slane %v366, 6
  %v371 = vrot.slane %v361, 6
  %v372 = vrot.slane %v367, 6
  %v373 = vrot.slane %v362, 6
  %v374 = vrot.slane %v368, 6
  %375 = vrot.lane.b32.xlu0 %v369, 111
  %v376 = vpop.permute.xlu0 %375
  %377 = vrot.lane.b32.xlu0 %v370, 111
  %v378 = vpop.permute.xlu0 %377
  %379 = vrot.lane.b32.xlu0 %v371, 111
  %v380 = vpop.permute.xlu0 %379
  %381 = vrot.lane.b32.xlu0 %v372, 111
  %v382 = vpop.permute.xlu0 %381
  %383 = vrot.lane.b32.xlu0 %v373, 111
  %v384 = vpop.permute.xlu0 %383
  %385 = vrot.lane.b32.xlu0 %v374, 111
  %v386 = vpop.permute.xlu0 %385
  %vm387 = vcmask 908288
  %v388 = vsel %vm387, %v376, %v378
  %v389 = vsel %vm387, %v378, %v380
  %v390 = vsel %vm387, %v380, %v382
  %v391 = vsel %vm387, %v382, %v384
  %v392 = vsel %vm387, %v384, %v386
  %399 = vst [vmem:[#allocation2 + $0x60] sm:$0x1c] %v388
  %400 = vst [vmem:[#allocation2 + $0x68] sm:$0x1c] %v389
  %401 = vst [vmem:[#allocation2 + $0x70] sm:$0x1c] %v390
  %402 = vst [vmem:[#allocation2 + $0x78] sm:$0x1c] %v391
  %403 = vst [vmem:[#allocation2 + $0x80] sm:$0x1c] %v392
  %vm404 = vcmask 61442
  %405 = vst.msk [vmem:[#allocation2 + $0x88] sm:$0x1c] %vm404, %v386
  %v406 = vld [vmem:[%s0 + $0x4] sm:$0x77]
  %v407 = vld [vmem:[%s0 + $0xc] sm:$0x77]
  %v408 = vld [vmem:[%s0 + $0x14] sm:$0x77]
  %v412 = vcombine.high %v406, %v406
  %v413 = vcombine.high %v407, %v407
  %v414 = vcombine.high %v408, %v408
  %v415 = vrot.slane %v406, 3
  %v416 = vrot.slane %v412, 3
  %v417 = vrot.slane %v407, 3
  %v418 = vrot.slane %v413, 3
  %v419 = vrot.slane %v408, 3
  %v420 = vrot.slane %v414, 3
  %421 = vrot.lane.b32.xlu0 %v415, 110
  %v422 = vpop.permute.xlu0 %421
  %423 = vrot.lane.b32.xlu0 %v416, 110
  %v424 = vpop.permute.xlu0 %423
  %425 = vrot.lane.b32.xlu0 %v417, 110
  %v426 = vpop.permute.xlu0 %425
  %427 = vrot.lane.b32.xlu0 %v418, 110
  %v428 = vpop.permute.xlu0 %427
  %429 = vrot.lane.b32.xlu0 %v419, 110
  %v430 = vpop.permute.xlu0 %429
  %431 = vrot.lane.b32.xlu0 %v420, 110
  %v432 = vpop.permute.xlu0 %431
  %vm433 = vcmask 900096
  %v434 = vsel %vm433, %v422, %v424
  %v435 = vsel %vm433, %v424, %v426
  %v436 = vsel %vm433, %v426, %v428
  %v437 = vsel %vm433, %v428, %v430
  %v438 = vsel %vm433, %v430, %v432
  %445 = vst [vmem:[#allocation2 + $0x60] sm:$0xe0] %v434
  %446 = vst [vmem:[#allocation2 + $0x68] sm:$0xe0] %v435
  %447 = vst [vmem:[#allocation2 + $0x70] sm:$0xe0] %v436
  %448 = vst [vmem:[#allocation2 + $0x78] sm:$0xe0] %v437
  %449 = vst [vmem:[#allocation2 + $0x80] sm:$0xe0] %v438
  %vm450 = vcmask 64517
  %451 = vst.msk [vmem:[#allocation2 + $0x88] sm:$0xe0] %vm450, %v432
  %v452 = vld [vmem:[%s0 + $0x4] sm:$0x77]
  %v453 = vld [vmem:[%s0 + $0xc] sm:$0x77]
  %v454 = vld [vmem:[%s0 + $0x14] sm:$0x77]
  %v458 = vcombine.high %v452, %v452
  %v459 = vcombine.high %v453, %v453
  %v460 = vcombine.high %v454, %v454
  %461 = vrot.lane.b32.xlu0 %v452, 109
  %v462 = vpop.permute.xlu0 %461
  %463 = vrot.lane.b32.xlu0 %v458, 109
  %v464 = vpop.permute.xlu0 %463
  %465 = vrot.lane.b32.xlu0 %v453, 109
  %v466 = vpop.permute.xlu0 %465
  %467 = vrot.lane.b32.xlu0 %v459, 109
  %v468 = vpop.permute.xlu0 %467
  %469 = vrot.lane.b32.xlu0 %v454, 109
  %v470 = vpop.permute.xlu0 %469
  %471 = vrot.lane.b32.xlu0 %v460, 109
  %v472 = vpop.permute.xlu0 %471
  %vm473 = vcmask 891904
  %v474 = vsel %vm473, %v462, %v464
  %v475 = vsel %vm473, %v464, %v466
  %v476 = vsel %vm473, %v466, %v468
  %v477 = vsel %vm473, %v468, %v470
  %v478 = vsel %vm473, %v470, %v472
  %485 = vst [vmem:[#allocation2 + $0x90] sm:$0x7] %v474
  %486 = vst [vmem:[#allocation2 + $0x98] sm:$0x7] %v475
  %487 = vst [vmem:[#allocation2 + $0xa0] sm:$0x7] %v476
  %488 = vst [vmem:[#allocation2 + $0xa8] sm:$0x7] %v477
  %489 = vst [vmem:[#allocation2 + $0xb0] sm:$0x7] %v478
  %490 = vst.msk [vmem:[#allocation2 + $0xb8] sm:$0x7] %vm135, %v472
  %v491 = vld [vmem:[%s1] sm:$0xff]
  %v492 = vld [vmem:[#allocation2] sm:$0xff]
  %v493 = vld [vmem:[#allocation2 + $0x8] sm:$0xff]
  %v494 = vld [vmem:[#allocation2 + $0x10] sm:$0xff]
  %v495 = vld [vmem:[#allocation2 + $0x18] sm:$0xff]
  %v496 = vld [vmem:[#allocation2 + $0x20] sm:$0xff]
  %v497 = vld [vmem:[#allocation2 + $0x28] sm:$0xff]
  %v498 = vld [vmem:[#allocation2 + $0x30] sm:$0xff]
  %v499 = vld [vmem:[#allocation2 + $0x38] sm:$0xff]
  %v500 = vld [vmem:[#allocation2 + $0x40] sm:$0xff]
  %v501 = vld [vmem:[#allocation2 + $0x48] sm:$0xff]
  %v502 = vld [vmem:[#allocation2 + $0x50] sm:$0xff]
  %v503 = vld [vmem:[#allocation2 + $0x58] sm:$0xff]
  %v504 = vld [vmem:[#allocation2 + $0x60] sm:$0xff]
  %v505 = vld [vmem:[#allocation2 + $0x68] sm:$0xff]
  %v506 = vld [vmem:[#allocation2 + $0x70] sm:$0xff]
  %v507 = vld [vmem:[#allocation2 + $0x78] sm:$0xff]
  %v508 = vld [vmem:[#allocation2 + $0x80] sm:$0xff]
  %v509 = vld [vmem:[#allocation2 + $0x88] sm:$0xff]
  %v510 = vld [vmem:[#allocation2 + $0x90] sm:$0xff]
  %v511 = vld [vmem:[#allocation2 + $0x98] sm:$0xff]
  %v512 = vld [vmem:[#allocation2 + $0xa0] sm:$0xff]
  %v513 = vld [vmem:[#allocation2 + $0xa8] sm:$0xff]
  %v514 = vld [vmem:[#allocation2 + $0xb0] sm:$0xff]
  %v515 = vld [vmem:[#allocation2 + $0xb8] sm:$0xff]
  %v516 = vld [vmem:[%s2] sm:$0xff]
  %518 = vset.pattern.permute.xlu0 0
  %519 = vperm.xlu0 %518, %v516
  %v520 = vpop.permute.xlu0 %519
  %vm522 = vcmask 261120
  %v524 = vsel %vm522, %v491, 0
  %526 = vmatprep.subr.mxu0 0.0
  %527 = vmatpush1.msra.mxu0 0.0
  %528 = vmatprep.subr.mxu0 0.0
  %529 = vmatpush1.msra.mxu0 0.0
  %530 = vmatprep.subr.mxu0 0.0
  %531 = vmatpush1.msra.mxu0 0.0
  %532 = vmatprep.subr.mxu0 0.0
  %533 = vmatpush1.msra.mxu0 0.0
  %534 = vmatprep.subr.mxu0 0.0
  %535 = vmatpush1.msra.mxu0 0.0
  %536 = vmatprep.subr.mxu0 0.0
  %537 = vmatpush1.msra.mxu0 0.0
  %538 = vmatprep.subr.mxu0 0.0
  %539 = vmatpush1.msra.mxu0 0.0
  %540 = vmatprep.subr.mxu0 0.0
  %541 = vmatpush1.msra.mxu0 0.0
  %542 = vmatprep.subr.mxu0 0.0
  %543 = vmatpush1.msra.mxu0 0.0
  %544 = vmatprep.subr.mxu0 0.0
  %545 = vmatpush1.msra.mxu0 0.0
  %546 = vmatprep.subr.mxu0 0.0
  %547 = vmatpush1.msra.mxu0 0.0
  %548 = vmatprep.subr.mxu0 0.0
  %549 = vmatpush1.msra.mxu0 0.0
  %550 = vmatprep.subr.mxu0 %v511
  %551 = vmatpush1.msra.mxu0 %v510
  %552 = vmatprep.subr.mxu0 %v505
  %553 = vmatpush1.msra.mxu0 %v504
  %554 = vmatprep.subr.mxu0 %v499
  %555 = vmatpush1.msra.mxu0 %v498
  %556 = vmatprep.subr.mxu0 %v493
  %557 = vmatpush1.msra.mxu0 %v492
  %558 = vmatprep.subr.mxu0 0.0
  %559 = vmatpush2.msra.mxu0 0.0
  %560 = vmatprep.subr.mxu0 0.0
  %561 = vmatpush2.msra.mxu0 0.0
  %562 = vmatprep.subr.mxu0 0.0
  %563 = vmatpush2.msra.mxu0 0.0
  %564 = vmatprep.subr.mxu0 0.0
  %565 = vmatpush2.msra.mxu0 0.0
  %566 = vmatprep.subr.mxu0 0.0
  %567 = vmatpush2.msra.mxu0 0.0
  %568 = vmatprep.subr.mxu0 0.0
  %569 = vmatpush2.msra.mxu0 0.0
  %570 = vmatprep.subr.mxu0 0.0
  %571 = vmatpush2.msra.mxu0 0.0
  %572 = vmatprep.subr.mxu0 0.0
  %573 = vmatpush2.msra.mxu0 0.0
  %574 = vmatprep.subr.mxu0 0.0
  %575 = vmatpush2.msra.mxu0 0.0
  %576 = vmatprep.subr.mxu0 0.0
  %577 = vmatpush2.msra.mxu0 0.0
  %578 = vmatprep.subr.mxu0 0.0
  %579 = vmatpush2.msra.mxu0 0.0
  %580 = vmatprep.subr.mxu0 0.0
  %581 = vmatpush2.msra.mxu0 0.0
  %582 = vmatprep.subr.mxu0 0.0
  %583 = vmatpush2.msra.mxu0 0.0
  %584 = vmatprep.subr.mxu0 0.0
  %585 = vmatpush2.msra.mxu0 0.0
  %586 = vmatprep.subr.mxu0 0.0
  %587 = vmatpush2.msra.mxu0 0.0
  %588 = vmatprep.subr.mxu0 0.0
  %589 = vmatpush2.msra.mxu0 0.0
  %590 = vmatprep.mubr.f32.mxu0 0.0
  %591 = vmatmul.mubr.f32.gmra.mxu0 %v524
  %v592 = vpop.f32.mrf.mxu0
  %v593 = vadd.f32 %v520, %v592
  %v594 = vpop.f32.mrf.mxu0
  %v595 = vadd.f32 %v520, %v594
  %596 = vdwg.mxu0
  %597 = vmatprep.subr.mxu0 0.0
  %598 = vmatpush1.msra.mxu0 0.0
  %599 = vmatprep.subr.mxu0 0.0
  %600 = vmatpush1.msra.mxu0 0.0
  %601 = vmatprep.subr.mxu0 0.0
  %602 = vmatpush1.msra.mxu0 0.0
  %603 = vmatprep.subr.mxu0 0.0
  %604 = vmatpush1.msra.mxu0 0.0
  %605 = vmatprep.subr.mxu0 0.0
  %606 = vmatpush1.msra.mxu0 0.0
  %607 = vmatprep.subr.mxu0 0.0
  %608 = vmatpush1.msra.mxu0 0.0
  %609 = vmatprep.subr.mxu0 0.0
  %610 = vmatpush1.msra.mxu0 0.0
  %611 = vmatprep.subr.mxu0 0.0
  %612 = vmatpush1.msra.mxu0 0.0
  %613 = vmatprep.subr.mxu0 0.0
  %614 = vmatpush1.msra.mxu0 0.0
  %615 = vmatprep.subr.mxu0 0.0
  %616 = vmatpush1.msra.mxu0 0.0
  %617 = vmatprep.subr.mxu0 0.0
  %618 = vmatpush1.msra.mxu0 0.0
  %619 = vmatprep.subr.mxu0 0.0
  %620 = vmatpush1.msra.mxu0 0.0
  %621 = vmatprep.subr.mxu0 %v513
  %622 = vmatpush1.msra.mxu0 %v512
  %623 = vmatprep.subr.mxu0 %v507
  %624 = vmatpush1.msra.mxu0 %v506
  %625 = vmatprep.subr.mxu0 %v501
  %626 = vmatpush1.msra.mxu0 %v500
  %627 = vmatprep.subr.mxu0 %v495
  %628 = vmatpush1.msra.mxu0 %v494
  %629 = vmatprep.subr.mxu0 0.0
  %630 = vmatpush2.msra.mxu0 0.0
  %631 = vmatprep.subr.mxu0 0.0
  %632 = vmatpush2.msra.mxu0 0.0
  %633 = vmatprep.subr.mxu0 0.0
  %634 = vmatpush2.msra.mxu0 0.0
  %635 = vmatprep.subr.mxu0 0.0
  %636 = vmatpush2.msra.mxu0 0.0
  %637 = vmatprep.subr.mxu0 0.0
  %638 = vmatpush2.msra.mxu0 0.0
  %639 = vmatprep.subr.mxu0 0.0
  %640 = vmatpush2.msra.mxu0 0.0
  %641 = vmatprep.subr.mxu0 0.0
  %642 = vmatpush2.msra.mxu0 0.0
  %643 = vmatprep.subr.mxu0 0.0
  %644 = vmatpush2.msra.mxu0 0.0
  %645 = vmatprep.subr.mxu0 0.0
  %646 = vmatpush2.msra.mxu0 0.0
  %647 = vmatprep.subr.mxu0 0.0
  %648 = vmatpush2.msra.mxu0 0.0
  %649 = vmatprep.subr.mxu0 0.0
  %650 = vmatpush2.msra.mxu0 0.0
  %651 = vmatprep.subr.mxu0 0.0
  %652 = vmatpush2.msra.mxu0 0.0
  %653 = vmatprep.subr.mxu0 0.0
  %654 = vmatpush2.msra.mxu0 0.0
  %655 = vmatprep.subr.mxu0 0.0
  %656 = vmatpush2.msra.mxu0 0.0
  %657 = vmatprep.subr.mxu0 0.0
  %658 = vmatpush2.msra.mxu0 0.0
  %659 = vmatprep.subr.mxu0 0.0
  %660 = vmatpush2.msra.mxu0 0.0
  %661 = vmatprep.mubr.f32.mxu0 0.0
  %662 = vmatmul.mubr.f32.gmra.mxu0 %v524
  %v663 = vpop.f32.mrf.mxu0
  %v664 = vadd.f32 %v520, %v663
  %v665 = vpop.f32.mrf.mxu0
  %v666 = vadd.f32 %v520, %v665
  %667 = vdwg.mxu0
  %668 = vmatprep.subr.mxu0 0.0
  %669 = vmatpush1.msra.mxu0 0.0
  %670 = vmatprep.subr.mxu0 0.0
  %671 = vmatpush1.msra.mxu0 0.0
  %672 = vmatprep.subr.mxu0 0.0
  %673 = vmatpush1.msra.mxu0 0.0
  %674 = vmatprep.subr.mxu0 0.0
  %675 = vmatpush1.msra.mxu0 0.0
  %676 = vmatprep.subr.mxu0 0.0
  %677 = vmatpush1.msra.mxu0 0.0
  %678 = vmatprep.subr.mxu0 0.0
  %679 = vmatpush1.msra.mxu0 0.0
  %680 = vmatprep.subr.mxu0 0.0
  %681 = vmatpush1.msra.mxu0 0.0
  %682 = vmatprep.subr.mxu0 0.0
  %683 = vmatpush1.msra.mxu0 0.0
  %684 = vmatprep.subr.mxu0 0.0
  %685 = vmatpush1.msra.mxu0 0.0
  %686 = vmatprep.subr.mxu0 0.0
  %687 = vmatpush1.msra.mxu0 0.0
  %688 = vmatprep.subr.mxu0 0.0
  %689 = vmatpush1.msra.mxu0 0.0
  %690 = vmatprep.subr.mxu0 0.0
  %691 = vmatpush1.msra.mxu0 0.0
  %692 = vmatprep.subr.mxu0 %v515
  %693 = vmatpush1.msra.mxu0 %v514
  %694 = vmatprep.subr.mxu0 %v509
  %695 = vmatpush1.msra.mxu0 %v508
  %696 = vmatprep.subr.mxu0 %v503
  %697 = vmatpush1.msra.mxu0 %v502
  %698 = vmatprep.subr.mxu0 %v497
  %699 = vmatpush1.msra.mxu0 %v496
  %700 = vmatprep.subr.mxu0 0.0
  %701 = vmatpush2.msra.mxu0 0.0
  %702 = vmatprep.subr.mxu0 0.0
  %703 = vmatpush2.msra.mxu0 0.0
  %704 = vmatprep.subr.mxu0 0.0
  %705 = vmatpush2.msra.mxu0 0.0
  %706 = vmatprep.subr.mxu0 0.0
  %707 = vmatpush2.msra.mxu0 0.0
  %708 = vmatprep.subr.mxu0 0.0
  %709 = vmatpush2.msra.mxu0 0.0
  %710 = vmatprep.subr.mxu0 0.0
  %711 = vmatpush2.msra.mxu0 0.0
  %712 = vmatprep.subr.mxu0 0.0
  %713 = vmatpush2.msra.mxu0 0.0
  %714 = vmatprep.subr.mxu0 0.0
  %715 = vmatpush2.msra.mxu0 0.0
  %716 = vmatprep.subr.mxu0 0.0
  %717 = vmatpush2.msra.mxu0 0.0
  %718 = vmatprep.subr.mxu0 0.0
  %719 = vmatpush2.msra.mxu0 0.0
  %720 = vmatprep.subr.mxu0 0.0
  %721 = vmatpush2.msra.mxu0 0.0
  %722 = vmatprep.subr.mxu0 0.0
  %723 = vmatpush2.msra.mxu0 0.0
  %724 = vmatprep.subr.mxu0 0.0
  %725 = vmatpush2.msra.mxu0 0.0
  %726 = vmatprep.subr.mxu0 0.0
  %727 = vmatpush2.msra.mxu0 0.0
  %728 = vmatprep.subr.mxu0 0.0
  %729 = vmatpush2.msra.mxu0 0.0
  %730 = vmatprep.subr.mxu0 0.0
  %731 = vmatpush2.msra.mxu0 0.0
  %732 = vmatprep.mubr.f32.mxu0 0.0
  %733 = vmatmul.mubr.f32.gmra.mxu0 %v524
  %v734 = vpop.f32.mrf.mxu0
  %v735 = vadd.f32 %v520, %v734
  %v736 = vpop.f32.mrf.mxu0
  %v737 = vadd.f32 %v520, %v736
  %738 = vdwg.mxu0
  %v739 = vmax.f32 %v593, 0.0
  %v740 = vmax.f32 %v595, 0.0
  %v741 = vmax.f32 %v664, 0.0
  %v742 = vmax.f32 %v666, 0.0
  %v743 = vmax.f32 %v735, 0.0
  %v744 = vmax.f32 %v737, 0.0
  %751 = vrot.lane.b32.xlu0 %v739, 110
  %v752 = vpop.permute.xlu0 %751
  %753 = vrot.lane.b32.xlu0 %v740, 110
  %v754 = vpop.permute.xlu0 %753
  %755 = vrot.lane.b32.xlu0 %v741, 110
  %v756 = vpop.permute.xlu0 %755
  %757 = vrot.lane.b32.xlu0 %v742, 110
  %v758 = vpop.permute.xlu0 %757
  %759 = vrot.lane.b32.xlu0 %v743, 110
  %v760 = vpop.permute.xlu0 %759
  %761 = vrot.lane.b32.xlu0 %v744, 110
  %v762 = vpop.permute.xlu0 %761
  %v763 = vsel %vm433, %v752, %v754
  %v764 = vsel %vm433, %v754, %v756
  %v765 = vsel %vm433, %v756, %v758
  %v766 = vsel %vm433, %v758, %v760
  %v767 = vsel %vm433, %v760, %v762
  %v773 = vmax.f32 %v739, %v763
  %v774 = vmax.f32 %v740, %v764
  %v775 = vmax.f32 %v741, %v765
  %v776 = vmax.f32 %v742, %v766
  %v777 = vmax.f32 %v743, %v767
  %783 = vrot.lane.b32.xlu0 %v773, 127
  %v784 = vpop.permute.xlu0 %783
  %785 = vrot.lane.b32.xlu0 %v774, 127
  %v786 = vpop.permute.xlu0 %785
  %787 = vrot.lane.b32.xlu0 %v775, 127
  %v788 = vpop.permute.xlu0 %787
  %789 = vrot.lane.b32.xlu0 %v776, 127
  %v790 = vpop.permute.xlu0 %789
  %791 = vrot.lane.b32.xlu0 %v777, 127
  %v792 = vpop.permute.xlu0 %791
  %v793 = vsel %vm334, %v784, %v786
  %v794 = vsel %vm334, %v786, %v788
  %v795 = vsel %vm334, %v788, %v790
  %v796 = vsel %vm334, %v790, %v792
  %v802 = vmax.f32 %v773, %v793
  %v803 = vmax.f32 %v774, %v794
  %v804 = vmax.f32 %v775, %v795
  %v805 = vmax.f32 %v776, %v796
  %v806 = vmax.f32 %v777, %v792
  %v807 = vld [vmem:[%s3] sm:$0xff]
  %v808 = vld [vmem:[%s3 + $0x8] sm:$0xff]
  %v809 = vld [vmem:[%s3 + $0x10] sm:$0xff]
  %v810 = vld [vmem:[%s3 + $0x18] sm:$0xff]
  %v811 = vld [vmem:[%s3 + $0x20] sm:$0xff]
  %v812 = vld [vmem:[%s3 + $0x28] sm:$0xff]
  %v813 = vld [vmem:[%s3 + $0x30] sm:$0xff]
  %v814 = vld [vmem:[%s3 + $0x38] sm:$0xff]
  %v815 = vld [vmem:[%s3 + $0x40] sm:$0xff]
  %v816 = vld [vmem:[%s3 + $0x48] sm:$0xff]
  %v817 = vld [vmem:[%s3 + $0x50] sm:$0xff]
  %v818 = vld [vmem:[%s3 + $0x58] sm:$0xff]
  %v819 = vld [vmem:[%s3 + $0x60] sm:$0xff]
  %v820 = vld [vmem:[%s3 + $0x68] sm:$0xff]
  %v821 = vld [vmem:[%s3 + $0x70] sm:$0xff]
  %v822 = vld [vmem:[%s3 + $0x78] sm:$0xff]
  %v823 = vld [vmem:[%s3 + $0x80] sm:$0xff]
  %v824 = vld [vmem:[%s3 + $0x88] sm:$0xff]
  %v825 = vld [vmem:[%s3 + $0x90] sm:$0xff]
  %v826 = vld [vmem:[%s3 + $0x98] sm:$0xff]
  %v827 = vld [vmem:[%s3 + $0xa0] sm:$0xff]
  %v828 = vld [vmem:[%s3 + $0xa8] sm:$0xff]
  %v829 = vld [vmem:[%s3 + $0xb0] sm:$0xff]
  %v830 = vld [vmem:[%s3 + $0xb8] sm:$0xff]
  %v831 = vld [vmem:[%s3 + $0xc0] sm:$0xff]
  %v832 = vld [vmem:[%s3 + $0xc8] sm:$0xff]
  %v833 = vld [vmem:[%s3 + $0xd0] sm:$0xff]
  %v834 = vld [vmem:[%s3 + $0xd8] sm:$0xff]
  %v835 = vld [vmem:[%s3 + $0xe0] sm:$0xff]
  %v836 = vld [vmem:[%s3 + $0xe8] sm:$0xff]
  %v837 = vld [vmem:[%s3 + $0xf0] sm:$0xff]
  %v838 = vld [vmem:[%s3 + $0xf8] sm:$0xff]
  %v839 = vld [vmem:[%s3 + $0x100] sm:$0xff]
  %v840 = vld [vmem:[%s3 + $0x108] sm:$0xff]
  %v841 = vld [vmem:[%s3 + $0x110] sm:$0xff]
  %v842 = vld [vmem:[%s3 + $0x118] sm:$0xff]
  %v843 = vld [vmem:[%s3 + $0x120] sm:$0xff]
  %v844 = vld [vmem:[%s3 + $0x128] sm:$0xff]
  %v845 = vld [vmem:[%s3 + $0x130] sm:$0xff]
  %v846 = vld [vmem:[%s3 + $0x138] sm:$0xff]
  %v847 = vld [vmem:[%s3 + $0x140] sm:$0xff]
  %v848 = vld [vmem:[%s3 + $0x148] sm:$0xff]
  %v849 = vld [vmem:[%s3 + $0x150] sm:$0xff]
  %v850 = vld [vmem:[%s3 + $0x158] sm:$0xff]
  %v851 = vld [vmem:[%s3 + $0x160] sm:$0xff]
  %v852 = vld [vmem:[%s3 + $0x168] sm:$0xff]
  %v853 = vld [vmem:[%s3 + $0x170] sm:$0xff]
  %v854 = vld [vmem:[%s3 + $0x178] sm:$0xff]
  %v855 = vld [vmem:[%s3 + $0x180] sm:$0xff]
  %v856 = vld [vmem:[%s3 + $0x188] sm:$0xff]
  %v857 = vld [vmem:[%s3 + $0x190] sm:$0xff]
  %v858 = vld [vmem:[%s3 + $0x198] sm:$0xff]
  %v859 = vld [vmem:[%s3 + $0x1a0] sm:$0xff]
  %v860 = vld [vmem:[%s3 + $0x1a8] sm:$0xff]
  %v861 = vld [vmem:[%s3 + $0x1b0] sm:$0xff]
  %v862 = vld [vmem:[%s3 + $0x1b8] sm:$0xff]
  %v863 = vld [vmem:[%s3 + $0x1c0] sm:$0xff]
  %v864 = vld [vmem:[%s3 + $0x1c8] sm:$0xff]
  %v865 = vld [vmem:[%s3 + $0x1d0] sm:$0xff]
  %v866 = vld [vmem:[%s3 + $0x1d8] sm:$0xff]
  %v867 = vld [vmem:[%s3 + $0x1e0] sm:$0xff]
  %v868 = vld [vmem:[%s3 + $0x1e8] sm:$0xff]
  %v869 = vld [vmem:[%s3 + $0x1f0] sm:$0xff]
  %v870 = vld [vmem:[%s3 + $0x1f8] sm:$0xff]
  %v871 = vld [vmem:[%s3 + $0x200] sm:$0xff]
  %v872 = vld [vmem:[%s3 + $0x208] sm:$0xff]
  %v873 = vld [vmem:[%s3 + $0x210] sm:$0xff]
  %v874 = vld [vmem:[%s3 + $0x218] sm:$0xff]
  %v875 = vld [vmem:[%s3 + $0x220] sm:$0xff]
  %v876 = vld [vmem:[%s3 + $0x228] sm:$0xff]
  %v877 = vld [vmem:[%s3 + $0x230] sm:$0xff]
  %v878 = vld [vmem:[%s3 + $0x238] sm:$0xff]
  %v879 = vld [vmem:[%s3 + $0x240] sm:$0xff]
  %v880 = vld [vmem:[%s3 + $0x248] sm:$0xff]
  %v881 = vld [vmem:[%s3 + $0x250] sm:$0xff]
  %v882 = vld [vmem:[%s3 + $0x258] sm:$0xff]
  %v883 = vld [vmem:[%s3 + $0x260] sm:$0xff]
  %v884 = vld [vmem:[%s3 + $0x268] sm:$0xff]
  %v885 = vld [vmem:[%s3 + $0x270] sm:$0x77]
  %v886 = vunpack.c.l.bf16 %v807
  %v887 = vunpack.c.h.bf16 %v807
  %v888 = vunpack.c.l.bf16 %v808
  %v889 = vunpack.c.h.bf16 %v808
  %v890 = vunpack.c.l.bf16 %v809
  %v891 = vunpack.c.h.bf16 %v809
  %v892 = vunpack.c.l.bf16 %v810
  %v893 = vunpack.c.h.bf16 %v810
  %v894 = vunpack.c.l.bf16 %v811
  %v895 = vunpack.c.h.bf16 %v811
  %v896 = vunpack.c.l.bf16 %v812
  %v897 = vunpack.c.h.bf16 %v812
  %v898 = vunpack.c.l.bf16 %v813
  %v899 = vunpack.c.h.bf16 %v813
  %v900 = vunpack.c.l.bf16 %v814
  %v901 = vunpack.c.h.bf16 %v814
  %v902 = vunpack.c.l.bf16 %v815
  %v903 = vunpack.c.h.bf16 %v815
  %v904 = vunpack.c.l.bf16 %v816
  %v905 = vunpack.c.h.bf16 %v816
  %v906 = vunpack.c.l.bf16 %v817
  %v907 = vunpack.c.h.bf16 %v817
  %v908 = vunpack.c.l.bf16 %v818
  %v909 = vunpack.c.h.bf16 %v818
  %v910 = vunpack.c.l.bf16 %v819
  %v911 = vunpack.c.h.bf16 %v819
  %v912 = vunpack.c.l.bf16 %v820
  %v913 = vunpack.c.h.bf16 %v820
  %v914 = vunpack.c.l.bf16 %v821
  %v915 = vunpack.c.h.bf16 %v821
  %v916 = vunpack.c.l.bf16 %v822
  %v917 = vunpack.c.h.bf16 %v822
  %v918 = vunpack.c.l.bf16 %v823
  %v919 = vunpack.c.h.bf16 %v823
  %v920 = vunpack.c.l.bf16 %v824
  %v921 = vunpack.c.h.bf16 %v824
  %v922 = vunpack.c.l.bf16 %v825
  %v923 = vunpack.c.h.bf16 %v825
  %v924 = vunpack.c.l.bf16 %v826
  %v925 = vunpack.c.h.bf16 %v826
  %v926 = vunpack.c.l.bf16 %v827
  %v927 = vunpack.c.h.bf16 %v827
  %v928 = vunpack.c.l.bf16 %v828
  %v929 = vunpack.c.h.bf16 %v828
  %v930 = vunpack.c.l.bf16 %v829
  %v931 = vunpack.c.h.bf16 %v829
  %v932 = vunpack.c.l.bf16 %v830
  %v933 = vunpack.c.h.bf16 %v830
  %v934 = vunpack.c.l.bf16 %v831
  %v935 = vunpack.c.h.bf16 %v831
  %v936 = vunpack.c.l.bf16 %v832
  %v937 = vunpack.c.h.bf16 %v832
  %v938 = vunpack.c.l.bf16 %v833
  %v939 = vunpack.c.h.bf16 %v833
  %v940 = vunpack.c.l.bf16 %v834
  %v941 = vunpack.c.h.bf16 %v834
  %v942 = vunpack.c.l.bf16 %v835
  %v943 = vunpack.c.h.bf16 %v835
  %v944 = vunpack.c.l.bf16 %v836
  %v945 = vunpack.c.h.bf16 %v836
  %v946 = vunpack.c.l.bf16 %v837
  %v947 = vunpack.c.h.bf16 %v837
  %v948 = vunpack.c.l.bf16 %v838
  %v949 = vunpack.c.h.bf16 %v838
  %v950 = vunpack.c.l.bf16 %v839
  %v951 = vunpack.c.h.bf16 %v839
  %v952 = vunpack.c.l.bf16 %v840
  %v953 = vunpack.c.h.bf16 %v840
  %v954 = vunpack.c.l.bf16 %v841
  %v955 = vunpack.c.h.bf16 %v841
  %v956 = vunpack.c.l.bf16 %v842
  %v957 = vunpack.c.h.bf16 %v842
  %v958 = vunpack.c.l.bf16 %v843
  %v959 = vunpack.c.h.bf16 %v843
  %v960 = vunpack.c.l.bf16 %v844
  %v961 = vunpack.c.h.bf16 %v844
  %v962 = vunpack.c.l.bf16 %v845
  %v963 = vunpack.c.h.bf16 %v845
  %v964 = vunpack.c.l.bf16 %v846
  %v965 = vunpack.c.h.bf16 %v846
  %v966 = vunpack.c.l.bf16 %v847
  %v967 = vunpack.c.h.bf16 %v847
  %v968 = vunpack.c.l.bf16 %v848
  %v969 = vunpack.c.h.bf16 %v848
  %v970 = vunpack.c.l.bf16 %v849
  %v971 = vunpack.c.h.bf16 %v849
  %v972 = vunpack.c.l.bf16 %v850
  %v973 = vunpack.c.h.bf16 %v850
  %v974 = vunpack.c.l.bf16 %v851
  %v975 = vunpack.c.h.bf16 %v851
  %v976 = vunpack.c.l.bf16 %v852
  %v977 = vunpack.c.h.bf16 %v852
  %v978 = vunpack.c.l.bf16 %v853
  %v979 = vunpack.c.h.bf16 %v853
  %v980 = vunpack.c.l.bf16 %v854
  %v981 = vunpack.c.h.bf16 %v854
  %v982 = vunpack.c.l.bf16 %v855
  %v983 = vunpack.c.h.bf16 %v855
  %v984 = vunpack.c.l.bf16 %v856
  %v985 = vunpack.c.h.bf16 %v856
  %v986 = vunpack.c.l.bf16 %v857
  %v987 = vunpack.c.h.bf16 %v857
  %v988 = vunpack.c.l.bf16 %v858
  %v989 = vunpack.c.h.bf16 %v858
  %v990 = vunpack.c.l.bf16 %v859
  %v991 = vunpack.c.h.bf16 %v859
  %v992 = vunpack.c.l.bf16 %v860
  %v993 = vunpack.c.h.bf16 %v860
  %v994 = vunpack.c.l.bf16 %v861
  %v995 = vunpack.c.h.bf16 %v861
  %v996 = vunpack.c.l.bf16 %v862
  %v997 = vunpack.c.h.bf16 %v862
  %v998 = vunpack.c.l.bf16 %v863
  %v999 = vunpack.c.h.bf16 %v863
  %v1000 = vunpack.c.l.bf16 %v864
  %v1001 = vunpack.c.h.bf16 %v864
  %v1002 = vunpack.c.l.bf16 %v865
  %v1003 = vunpack.c.h.bf16 %v865
  %v1004 = vunpack.c.l.bf16 %v866
  %v1005 = vunpack.c.h.bf16 %v866
  %v1006 = vunpack.c.l.bf16 %v867
  %v1007 = vunpack.c.h.bf16 %v867
  %v1008 = vunpack.c.l.bf16 %v868
  %v1009 = vunpack.c.h.bf16 %v868
  %v1010 = vunpack.c.l.bf16 %v869
  %v1011 = vunpack.c.h.bf16 %v869
  %v1012 = vunpack.c.l.bf16 %v870
  %v1013 = vunpack.c.h.bf16 %v870
  %v1014 = vunpack.c.l.bf16 %v871
  %v1015 = vunpack.c.h.bf16 %v871
  %v1016 = vunpack.c.l.bf16 %v872
  %v1017 = vunpack.c.h.bf16 %v872
  %v1018 = vunpack.c.l.bf16 %v873
  %v1019 = vunpack.c.h.bf16 %v873
  %v1020 = vunpack.c.l.bf16 %v874
  %v1021 = vunpack.c.h.bf16 %v874
  %v1022 = vunpack.c.l.bf16 %v875
  %v1023 = vunpack.c.h.bf16 %v875
  %v1024 = vunpack.c.l.bf16 %v876
  %v1025 = vunpack.c.h.bf16 %v876
  %v1026 = vunpack.c.l.bf16 %v877
  %v1027 = vunpack.c.h.bf16 %v877
  %v1028 = vunpack.c.l.bf16 %v878
  %v1029 = vunpack.c.h.bf16 %v878
  %v1030 = vunpack.c.l.bf16 %v879
  %v1031 = vunpack.c.h.bf16 %v879
  %v1032 = vunpack.c.l.bf16 %v880
  %v1033 = vunpack.c.h.bf16 %v880
  %v1034 = vunpack.c.l.bf16 %v881
  %v1035 = vunpack.c.h.bf16 %v881
  %v1036 = vunpack.c.l.bf16 %v882
  %v1037 = vunpack.c.h.bf16 %v882
  %v1038 = vunpack.c.l.bf16 %v883
  %v1039 = vunpack.c.h.bf16 %v883
  %v1040 = vunpack.c.l.bf16 %v884
  %v1041 = vunpack.c.h.bf16 %v884
  %v1042 = vunpack.c.l.bf16 %v885
  %v1043 = vunpack.c.h.bf16 %v885
  %vm1044 = vcmask 957440
  %v1046 = vsel %vm1044, %v806, 0
  %vm1048 = vcmask 1044480
  %v1050 = vsel %vm1048, %v1042, 0
  %v1053 = vsel %vm1048, %v1043, 0
  %1055 = vmatprep.subr.mxu0 %v917
  %1056 = vmatpush1.msra.mxu0 %v916
  %1057 = vmatprep.subr.mxu0 %v915
  %1058 = vmatpush1.msra.mxu0 %v914
  %1059 = vmatprep.subr.mxu0 %v913
  %1060 = vmatpush1.msra.mxu0 %v912
  %1061 = vmatprep.subr.mxu0 %v911
  %1062 = vmatpush1.msra.mxu0 %v910
  %1063 = vmatprep.subr.mxu0 %v909
  %1064 = vmatpush1.msra.mxu0 %v908
  %1065 = vmatprep.subr.mxu0 %v907
  %1066 = vmatpush1.msra.mxu0 %v906
  %1067 = vmatprep.subr.mxu0 %v905
  %1068 = vmatpush1.msra.mxu0 %v904
  %1069 = vmatprep.subr.mxu0 %v903
  %1070 = vmatpush1.msra.mxu0 %v902
  %1071 = vmatprep.subr.mxu0 %v901
  %1072 = vmatpush1.msra.mxu0 %v900
  %1073 = vmatprep.subr.mxu0 %v899
  %1074 = vmatpush1.msra.mxu0 %v898
  %1075 = vmatprep.subr.mxu0 %v897
  %1076 = vmatpush1.msra.mxu0 %v896
  %1077 = vmatprep.subr.mxu0 %v895
  %1078 = vmatpush1.msra.mxu0 %v894
  %1079 = vmatprep.subr.mxu0 %v893
  %1080 = vmatpush1.msra.mxu0 %v892
  %1081 = vmatprep.subr.mxu0 %v891
  %1082 = vmatpush1.msra.mxu0 %v890
  %1083 = vmatprep.subr.mxu0 %v889
  %1084 = vmatpush1.msra.mxu0 %v888
  %1085 = vmatprep.subr.mxu0 %v887
  %1086 = vmatpush1.msra.mxu0 %v886
  %1087 = vmatprep.subr.mxu0 %v949
  %1088 = vmatpush2.msra.mxu0 %v948
  %1089 = vmatprep.subr.mxu0 %v947
  %1090 = vmatpush2.msra.mxu0 %v946
  %1091 = vmatprep.subr.mxu0 %v945
  %1092 = vmatpush2.msra.mxu0 %v944
  %1093 = vmatprep.subr.mxu0 %v943
  %1094 = vmatpush2.msra.mxu0 %v942
  %1095 = vmatprep.subr.mxu0 %v941
  %1096 = vmatpush2.msra.mxu0 %v940
  %1097 = vmatprep.subr.mxu0 %v939
  %1098 = vmatpush2.msra.mxu0 %v938
  %1099 = vmatprep.subr.mxu0 %v937
  %1100 = vmatpush2.msra.mxu0 %v936
  %1101 = vmatprep.subr.mxu0 %v935
  %1102 = vmatpush2.msra.mxu0 %v934
  %1103 = vmatprep.subr.mxu0 %v933
  %1104 = vmatpush2.msra.mxu0 %v932
  %1105 = vmatprep.subr.mxu0 %v931
  %1106 = vmatpush2.msra.mxu0 %v930
  %1107 = vmatprep.subr.mxu0 %v929
  %1108 = vmatpush2.msra.mxu0 %v928
  %1109 = vmatprep.subr.mxu0 %v927
  %1110 = vmatpush2.msra.mxu0 %v926
  %1111 = vmatprep.subr.mxu0 %v925
  %1112 = vmatpush2.msra.mxu0 %v924
  %1113 = vmatprep.subr.mxu0 %v923
  %1114 = vmatpush2.msra.mxu0 %v922
  %1115 = vmatprep.subr.mxu0 %v921
  %1116 = vmatpush2.msra.mxu0 %v920
  %1117 = vmatprep.subr.mxu0 %v919
  %1118 = vmatpush2.msra.mxu0 %v918
  %1119 = vmatprep.mubr.f32.mxu0 %v803
  %1120 = vmatmul.mubr.f32.gmra.mxu0 %v802
  %v1121 = vpop.f32.mrf.mxu0
  %v1122 = vadd.f32 0.0, %v1121
  %v1123 = vpop.f32.mrf.mxu0
  %v1124 = vadd.f32 0.0, %v1123
  %1125 = vdwg.mxu0
  %1126 = vmatprep.subr.mxu0 %v981
  %1127 = vmatpush1.msra.mxu0 %v980
  %1128 = vmatprep.subr.mxu0 %v979
  %1129 = vmatpush1.msra.mxu0 %v978
  %1130 = vmatprep.subr.mxu0 %v977
  %1131 = vmatpush1.msra.mxu0 %v976
  %1132 = vmatprep.subr.mxu0 %v975
  %1133 = vmatpush1.msra.mxu0 %v974
  %1134 = vmatprep.subr.mxu0 %v973
  %1135 = vmatpush1.msra.mxu0 %v972
  %1136 = vmatprep.subr.mxu0 %v971
  %1137 = vmatpush1.msra.mxu0 %v970
  %1138 = vmatprep.subr.mxu0 %v969
  %1139 = vmatpush1.msra.mxu0 %v968
  %1140 = vmatprep.subr.mxu0 %v967
  %1141 = vmatpush1.msra.mxu0 %v966
  %1142 = vmatprep.subr.mxu0 %v965
  %1143 = vmatpush1.msra.mxu0 %v964
  %1144 = vmatprep.subr.mxu0 %v963
  %1145 = vmatpush1.msra.mxu0 %v962
  %1146 = vmatprep.subr.mxu0 %v961
  %1147 = vmatpush1.msra.mxu0 %v960
  %1148 = vmatprep.subr.mxu0 %v959
  %1149 = vmatpush1.msra.mxu0 %v958
  %1150 = vmatprep.subr.mxu0 %v957
  %1151 = vmatpush1.msra.mxu0 %v956
  %1152 = vmatprep.subr.mxu0 %v955
  %1153 = vmatpush1.msra.mxu0 %v954
  %1154 = vmatprep.subr.mxu0 %v953
  %1155 = vmatpush1.msra.mxu0 %v952
  %1156 = vmatprep.subr.mxu0 %v951
  %1157 = vmatpush1.msra.mxu0 %v950
  %1158 = vmatprep.subr.mxu0 %v1013
  %1159 = vmatpush2.msra.mxu0 %v1012
  %1160 = vmatprep.subr.mxu0 %v1011
  %1161 = vmatpush2.msra.mxu0 %v1010
  %1162 = vmatprep.subr.mxu0 %v1009
  %1163 = vmatpush2.msra.mxu0 %v1008
  %1164 = vmatprep.subr.mxu0 %v1007
  %1165 = vmatpush2.msra.mxu0 %v1006
  %1166 = vmatprep.subr.mxu0 %v1005
  %1167 = vmatpush2.msra.mxu0 %v1004
  %1168 = vmatprep.subr.mxu0 %v1003
  %1169 = vmatpush2.msra.mxu0 %v1002
  %1170 = vmatprep.subr.mxu0 %v1001
  %1171 = vmatpush2.msra.mxu0 %v1000
  %1172 = vmatprep.subr.mxu0 %v999
  %1173 = vmatpush2.msra.mxu0 %v998
  %1174 = vmatprep.subr.mxu0 %v997
  %1175 = vmatpush2.msra.mxu0 %v996
  %1176 = vmatprep.subr.mxu0 %v995
  %1177 = vmatpush2.msra.mxu0 %v994
  %1178 = vmatprep.subr.mxu0 %v993
  %1179 = vmatpush2.msra.mxu0 %v992
  %1180 = vmatprep.subr.mxu0 %v991
  %1181 = vmatpush2.msra.mxu0 %v990
  %1182 = vmatprep.subr.mxu0 %v989
  %1183 = vmatpush2.msra.mxu0 %v988
  %1184 = vmatprep.subr.mxu0 %v987
  %1185 = vmatpush2.msra.mxu0 %v986
  %1186 = vmatprep.subr.mxu0 %v985
  %1187 = vmatpush2.msra.mxu0 %v984
  %1188 = vmatprep.subr.mxu0 %v983
  %1189 = vmatpush2.msra.mxu0 %v982
  %1190 = vmatprep.mubr.f32.mxu0 %v805
  %1191 = vmatmul.mubr.f32.gmra.mxu0 %v804
  %v1192 = vpop.f32.mrf.mxu0
  %v1193 = vadd.f32 %v1122, %v1192
  %v1194 = vpop.f32.mrf.mxu0
  %v1195 = vadd.f32 %v1124, %v1194
  %1196 = vdwg.mxu0
  %1197 = vmatprep.subr.mxu0 0.0
  %1198 = vmatpush1.msra.mxu0 0.0
  %1199 = vmatprep.subr.mxu0 %v1053
  %1200 = vmatpush1.msra.mxu0 %v1050
  %1201 = vmatprep.subr.mxu0 %v1041
  %1202 = vmatpush1.msra.mxu0 %v1040
  %1203 = vmatprep.subr.mxu0 %v1039
  %1204 = vmatpush1.msra.mxu0 %v1038
  %1205 = vmatprep.subr.mxu0 %v1037
  %1206 = vmatpush1.msra.mxu0 %v1036
  %1207 = vmatprep.subr.mxu0 %v1035
  %1208 = vmatpush1.msra.mxu0 %v1034
  %1209 = vmatprep.subr.mxu0 %v1033
  %1210 = vmatpush1.msra.mxu0 %v1032
  %1211 = vmatprep.subr.mxu0 %v1031
  %1212 = vmatpush1.msra.mxu0 %v1030
  %1213 = vmatprep.subr.mxu0 %v1029
  %1214 = vmatpush1.msra.mxu0 %v1028
  %1215 = vmatprep.subr.mxu0 %v1027
  %1216 = vmatpush1.msra.mxu0 %v1026
  %1217 = vmatprep.subr.mxu0 %v1025
  %1218 = vmatpush1.msra.mxu0 %v1024
  %1219 = vmatprep.subr.mxu0 %v1023
  %1220 = vmatpush1.msra.mxu0 %v1022
  %1221 = vmatprep.subr.mxu0 %v1021
  %1222 = vmatpush1.msra.mxu0 %v1020
  %1223 = vmatprep.subr.mxu0 %v1019
  %1224 = vmatpush1.msra.mxu0 %v1018
  %1225 = vmatprep.subr.mxu0 %v1017
  %1226 = vmatpush1.msra.mxu0 %v1016
  %1227 = vmatprep.subr.mxu0 %v1015
  %1228 = vmatpush1.msra.mxu0 %v1014
  %1229 = vmatprep.subr.mxu0 0.0
  %1230 = vmatpush2.msra.mxu0 0.0
  %1231 = vmatprep.subr.mxu0 0.0
  %1232 = vmatpush2.msra.mxu0 0.0
  %1233 = vmatprep.subr.mxu0 0.0
  %1234 = vmatpush2.msra.mxu0 0.0
  %1235 = vmatprep.subr.mxu0 0.0
  %1236 = vmatpush2.msra.mxu0 0.0
  %1237 = vmatprep.subr.mxu0 0.0
  %1238 = vmatpush2.msra.mxu0 0.0
  %1239 = vmatprep.subr.mxu0 0.0
  %1240 = vmatpush2.msra.mxu0 0.0
  %1241 = vmatprep.subr.mxu0 0.0
  %1242 = vmatpush2.msra.mxu0 0.0
  %1243 = vmatprep.subr.mxu0 0.0
  %1244 = vmatpush2.msra.mxu0 0.0
  %1245 = vmatprep.subr.mxu0 0.0
  %1246 = vmatpush2.msra.mxu0 0.0
  %1247 = vmatprep.subr.mxu0 0.0
  %1248 = vmatpush2.msra.mxu0 0.0
  %1249 = vmatprep.subr.mxu0 0.0
  %1250 = vmatpush2.msra.mxu0 0.0
  %1251 = vmatprep.subr.mxu0 0.0
  %1252 = vmatpush2.msra.mxu0 0.0
  %1253 = vmatprep.subr.mxu0 0.0
  %1254 = vmatpush2.msra.mxu0 0.0
  %1255 = vmatprep.subr.mxu0 0.0
  %1256 = vmatpush2.msra.mxu0 0.0
  %1257 = vmatprep.subr.mxu0 0.0
  %1258 = vmatpush2.msra.mxu0 0.0
  %1259 = vmatprep.subr.mxu0 0.0
  %1260 = vmatpush2.msra.mxu0 0.0
  %1261 = vmatprep.mubr.f32.mxu0 0.0
  %1262 = vmatmul.mubr.f32.gmra.mxu0 %v1046
  %v1263 = vpop.f32.mrf.mxu0
  %v1264 = vadd.f32 %v1193, %v1263
  %v1265 = vpop.f32.mrf.mxu0
  %v1266 = vadd.f32 %v1195, %v1265
  %1267 = vdwg.mxu0
  %1268 = vst [vmem:[#allocation5 + $0x8] sm:$0xff] %v1264
  %1269 = vst.msk [vmem:[#allocation5 + $0x10] sm:$0xff] %vm77, %v1266
  %v1270 = vld [vmem:[#allocation5] sm:$0xff]
  %v1271 = vld [vmem:[#allocation5 + $0x8] sm:$0xff]
  %v1272 = vld [vmem:[#allocation5 + $0x10] sm:$0xff]
  %1276 = vrot.lane.b32.xlu0 %v1270, 11
  %v1277 = vpop.permute.xlu0 %1276
  %1278 = vrot.lane.b32.xlu0 %v1271, 11
  %v1279 = vpop.permute.xlu0 %1278
  %1280 = vrot.lane.b32.xlu0 %v1272, 11
  %v1281 = vpop.permute.xlu0 %1280
  %vm1282 = vcmask 89088
  %v1283 = vsel %vm1282, %v1277, %v1279
  %v1284 = vsel %vm1282, %v1279, %v1281
  %1287 = vst [vmem:[#allocation3] sm:$0xff] %v1283
  %1288 = vst.msk [vmem:[#allocation3 + $0x8] sm:$0xff] %vm77, %v1284
  %v1289 = vld [vmem:[#allocation5] sm:$0xff]
  %v1290 = vld [vmem:[#allocation5 + $0x8] sm:$0xff]
  %v1291 = vld [vmem:[#allocation5 + $0x10] sm:$0xff]
  %1295 = vrot.lane.b32.xlu0 %v1289, 10
  %v1296 = vpop.permute.xlu0 %1295
  %1297 = vrot.lane.b32.xlu0 %v1290, 10
  %v1298 = vpop.permute.xlu0 %1297
  %1299 = vrot.lane.b32.xlu0 %v1291, 10
  %v1300 = vpop.permute.xlu0 %1299
  %vm1301 = vcmask 80896
  %v1302 = vsel %vm1301, %v1296, %v1298
  %v1303 = vsel %vm1301, %v1298, %v1300
  %1306 = vst [vmem:[#allocation3 + $0x10] sm:$0xff] %v1302
  %1307 = vst.msk [vmem:[#allocation3 + $0x18] sm:$0xff] %vm77, %v1303
  %v1308 = vld [vmem:[#allocation5] sm:$0xff]
  %v1309 = vld [vmem:[#allocation5 + $0x8] sm:$0xff]
  %v1310 = vld [vmem:[#allocation5 + $0x10] sm:$0xff]
  %1314 = vrot.lane.b32.xlu0 %v1308, 9
  %v1315 = vpop.permute.xlu0 %1314
  %1316 = vrot.lane.b32.xlu0 %v1309, 9
  %v1317 = vpop.permute.xlu0 %1316
  %1318 = vrot.lane.b32.xlu0 %v1310, 9
  %v1319 = vpop.permute.xlu0 %1318
  %vm1320 = vcmask 72704
  %v1321 = vsel %vm1320, %v1315, %v1317
  %v1322 = vsel %vm1320, %v1317, %v1319
  %1325 = vst [vmem:[#allocation3 + $0x20] sm:$0xff] %v1321
  %1326 = vst.msk [vmem:[#allocation3 + $0x28] sm:$0xff] %vm77, %v1322
  %v1327 = vld [vmem:[#allocation5] sm:$0xff]
  %v1328 = vld [vmem:[#allocation5 + $0x8] sm:$0xff]
  %v1329 = vld [vmem:[#allocation5 + $0x10] sm:$0xff]
  %1333 = vrot.lane.b32.xlu0 %v1327, 1
  %v1334 = vpop.permute.xlu0 %1333
  %1335 = vrot.lane.b32.xlu0 %v1328, 1
  %v1336 = vpop.permute.xlu0 %1335
  %1337 = vrot.lane.b32.xlu0 %v1329, 1
  %v1338 = vpop.permute.xlu0 %1337
  %v1339 = vsel %vm268, %v1334, %v1336
  %v1340 = vsel %vm268, %v1336, %v1338
  %1343 = vst [vmem:[#allocation3 + $0x30] sm:$0xff] %v1339
  %1344 = vst.msk [vmem:[#allocation3 + $0x38] sm:$0xff] %vm77, %v1340
  %v1345 = vld [vmem:[#allocation5 + $0x8] sm:$0xff]
  %v1346 = vld [vmem:[#allocation5 + $0x10] sm:$0xff]
  %1347 = vst [vmem:[#allocation3 + $0x40] sm:$0xff] %v1345
  %1348 = vst.msk [vmem:[#allocation3 + $0x48] sm:$0xff] %vm77, %v1346
  %v1349 = vld [vmem:[#allocation5 + $0x8] sm:$0xff]
  %v1350 = vld [vmem:[#allocation5 + $0x10] sm:$0xff]
  %1353 = vrot.lane.b32.xlu0 %v1349, 127
  %v1354 = vpop.permute.xlu0 %1353
  %1355 = vrot.lane.b32.xlu0 %v1350, 127
  %v1356 = vpop.permute.xlu0 %1355
  %v1357 = vsel %vm334, %v1354, %v1356
  %1360 = vst [vmem:[#allocation3 + $0x50] sm:$0xff] %v1357
  %1361 = vst.msk [vmem:[#allocation3 + $0x58] sm:$0xff] %vm77, %v1356
  %v1362 = vld [vmem:[#allocation5 + $0x8] sm:$0xff]
  %v1363 = vld [vmem:[#allocation5 + $0x10] sm:$0xff]
  %1366 = vrot.lane.b32.xlu0 %v1362, 119
  %v1367 = vpop.permute.xlu0 %1366
  %1368 = vrot.lane.b32.xlu0 %v1363, 119
  %v1369 = vpop.permute.xlu0 %1368
  %vm1370 = vcmask 973824
  %v1371 = vsel %vm1370, %v1367, %v1369
  %1374 = vst [vmem:[#allocation3 + $0x60] sm:$0xff] %v1371
  %1375 = vst.msk [vmem:[#allocation3 + $0x68] sm:$0xff] %vm77, %v1369
  %v1376 = vld [vmem:[#allocation5 + $0x8] sm:$0xff]
  %v1377 = vld [vmem:[#allocation5 + $0x10] sm:$0xff]
  %1380 = vrot.lane.b32.xlu0 %v1376, 118
  %v1381 = vpop.permute.xlu0 %1380
  %1382 = vrot.lane.b32.xlu0 %v1377, 118
  %v1383 = vpop.permute.xlu0 %1382
  %vm1384 = vcmask 965632
  %v1385 = vsel %vm1384, %v1381, %v1383
  %1388 = vst [vmem:[#allocation3 + $0x70] sm:$0xff] %v1385
  %1389 = vst.msk [vmem:[#allocation3 + $0x78] sm:$0xff] %vm77, %v1383
  %v1390 = vld [vmem:[#allocation5 + $0x8] sm:$0xff]
  %v1391 = vld [vmem:[#allocation5 + $0x10] sm:$0xff]
  %1394 = vrot.lane.b32.xlu0 %v1390, 117
  %v1395 = vpop.permute.xlu0 %1394
  %1396 = vrot.lane.b32.xlu0 %v1391, 117
  %v1397 = vpop.permute.xlu0 %1396
  %v1398 = vsel %vm1044, %v1395, %v1397
  %1401 = vst [vmem:[#allocation3 + $0x80] sm:$0xff] %v1398
  %1402 = vst.msk [vmem:[#allocation3 + $0x88] sm:$0xff] %vm77, %v1397
  %v1403 = vld [vmem:[%s4] sm:$0xff]
  %v1404 = vld [vmem:[%s4 + $0x8] sm:$0xff]
  %v1405 = vld [vmem:[#allocation3] sm:$0xff]
  %v1406 = vld [vmem:[#allocation3 + $0x8] sm:$0xff]
  %v1407 = vld [vmem:[#allocation3 + $0x10] sm:$0xff]
  %v1408 = vld [vmem:[#allocation3 + $0x18] sm:$0xff]
  %v1409 = vld [vmem:[#allocation3 + $0x20] sm:$0xff]
  %v1410 = vld [vmem:[#allocation3 + $0x28] sm:$0xff]
  %v1411 = vld [vmem:[#allocation3 + $0x30] sm:$0xff]
  %v1412 = vld [vmem:[#allocation3 + $0x38] sm:$0xff]
  %v1413 = vld [vmem:[#allocation3 + $0x40] sm:$0xff]
  %v1414 = vld [vmem:[#allocation3 + $0x48] sm:$0xff]
  %v1415 = vld [vmem:[#allocation3 + $0x50] sm:$0xff]
  %v1416 = vld [vmem:[#allocation3 + $0x58] sm:$0xff]
  %v1417 = vld [vmem:[#allocation3 + $0x60] sm:$0xff]
  %v1418 = vld [vmem:[#allocation3 + $0x68] sm:$0xff]
  %v1419 = vld [vmem:[#allocation3 + $0x70] sm:$0xff]
  %v1420 = vld [vmem:[#allocation3 + $0x78] sm:$0xff]
  %v1421 = vld [vmem:[#allocation3 + $0x80] sm:$0xff]
  %v1422 = vld [vmem:[#allocation3 + $0x88] sm:$0xff]
  %v1423 = vld [vmem:[%s5] sm:$0xff]
  %v1424 = vld [vmem:[%s5 + $0x8] sm:$0xff]
  %1426 = vset.pattern.permute.xlu0 0
  %1427 = vperm.xlu0 %1426, %v1423
  %v1428 = vpop.permute.xlu0 %1427
  %1431 = vset.pattern.permute.xlu0 0
  %1432 = vperm.xlu0 %1431, %v1424
  %v1433 = vpop.permute.xlu0 %1432
  %v1436 = vsel %vm77, %v1403, 0
  %v1439 = vsel %vm77, %v1404, 0
  %1441 = vmatprep.subr.mxu0 0.0
  %1442 = vmatpush1.msra.mxu0 0.0
  %1443 = vmatprep.subr.mxu0 0.0
  %1444 = vmatpush1.msra.mxu0 0.0
  %1445 = vmatprep.subr.mxu0 0.0
  %1446 = vmatpush1.msra.mxu0 0.0
  %1447 = vmatprep.subr.mxu0 0.0
  %1448 = vmatpush1.msra.mxu0 0.0
  %1449 = vmatprep.subr.mxu0 0.0
  %1450 = vmatpush1.msra.mxu0 0.0
  %1451 = vmatprep.subr.mxu0 0.0
  %1452 = vmatpush1.msra.mxu0 0.0
  %1453 = vmatprep.subr.mxu0 0.0
  %1454 = vmatpush1.msra.mxu0 0.0
  %1455 = vmatprep.subr.mxu0 %v1422
  %1456 = vmatpush1.msra.mxu0 %v1421
  %1457 = vmatprep.subr.mxu0 %v1420
  %1458 = vmatpush1.msra.mxu0 %v1419
  %1459 = vmatprep.subr.mxu0 %v1418
  %1460 = vmatpush1.msra.mxu0 %v1417
  %1461 = vmatprep.subr.mxu0 %v1416
  %1462 = vmatpush1.msra.mxu0 %v1415
  %1463 = vmatprep.subr.mxu0 %v1414
  %1464 = vmatpush1.msra.mxu0 %v1413
  %1465 = vmatprep.subr.mxu0 %v1412
  %1466 = vmatpush1.msra.mxu0 %v1411
  %1467 = vmatprep.subr.mxu0 %v1410
  %1468 = vmatpush1.msra.mxu0 %v1409
  %1469 = vmatprep.subr.mxu0 %v1408
  %1470 = vmatpush1.msra.mxu0 %v1407
  %1471 = vmatprep.subr.mxu0 %v1406
  %1472 = vmatpush1.msra.mxu0 %v1405
  %1473 = vmatprep.subr.mxu0 0.0
  %1474 = vmatpush2.msra.mxu0 0.0
  %1475 = vmatprep.subr.mxu0 0.0
  %1476 = vmatpush2.msra.mxu0 0.0
  %1477 = vmatprep.subr.mxu0 0.0
  %1478 = vmatpush2.msra.mxu0 0.0
  %1479 = vmatprep.subr.mxu0 0.0
  %1480 = vmatpush2.msra.mxu0 0.0
  %1481 = vmatprep.subr.mxu0 0.0
  %1482 = vmatpush2.msra.mxu0 0.0
  %1483 = vmatprep.subr.mxu0 0.0
  %1484 = vmatpush2.msra.mxu0 0.0
  %1485 = vmatprep.subr.mxu0 0.0
  %1486 = vmatpush2.msra.mxu0 0.0
  %1487 = vmatprep.subr.mxu0 0.0
  %1488 = vmatpush2.msra.mxu0 0.0
  %1489 = vmatprep.subr.mxu0 0.0
  %1490 = vmatpush2.msra.mxu0 0.0
  %1491 = vmatprep.subr.mxu0 0.0
  %1492 = vmatpush2.msra.mxu0 0.0
  %1493 = vmatprep.subr.mxu0 0.0
  %1494 = vmatpush2.msra.mxu0 0.0
  %1495 = vmatprep.subr.mxu0 0.0
  %1496 = vmatpush2.msra.mxu0 0.0
  %1497 = vmatprep.subr.mxu0 0.0
  %1498 = vmatpush2.msra.mxu0 0.0
  %1499 = vmatprep.subr.mxu0 0.0
  %1500 = vmatpush2.msra.mxu0 0.0
  %1501 = vmatprep.subr.mxu0 0.0
  %1502 = vmatpush2.msra.mxu0 0.0
  %1503 = vmatprep.subr.mxu0 0.0
  %1504 = vmatpush2.msra.mxu0 0.0
  %1505 = vmatprep.mubr.f32.mxu0 0.0
  %1506 = vmatmul.mubr.f32.gmra.mxu0 %v1436
  %v1507 = vpop.f32.mrf.mxu0
  %v1508 = vadd.f32 %v1428, %v1507
  %v1509 = vpop.f32.mrf.mxu0
  %v1510 = vadd.f32 %v1428, %v1509
  %1511 = vmatprep.mubr.f32.mxu0 0.0
  %1512 = vmatmul.mubr.f32.gmra.mxu0 %v1439
  %v1513 = vpop.f32.mrf.mxu0
  %v1514 = vadd.f32 %v1433, %v1513
  %v1515 = vpop.f32.mrf.mxu0
  %v1516 = vadd.f32 %v1433, %v1515
  %1517 = vdwg.mxu0
  %v1518 = vmax.f32 %v1508, 0.0
  %v1519 = vmax.f32 %v1510, 0.0
  %v1520 = vmax.f32 %v1514, 0.0
  %v1521 = vmax.f32 %v1516, 0.0
  %1526 = vrot.lane.b32.xlu0 %v1518, 118
  %v1527 = vpop.permute.xlu0 %1526
  %1528 = vrot.lane.b32.xlu0 %v1519, 118
  %v1529 = vpop.permute.xlu0 %1528
  %1530 = vrot.lane.b32.xlu0 %v1520, 118
  %v1531 = vpop.permute.xlu0 %1530
  %1532 = vrot.lane.b32.xlu0 %v1521, 118
  %v1533 = vpop.permute.xlu0 %1532
  %v1534 = vsel %vm1384, %v1527, %v1529
  %v1535 = vsel %vm1384, %v1531, %v1533
  %v1540 = vmax.f32 %v1518, %v1534
  %v1541 = vmax.f32 %v1519, %v1529
  %v1542 = vmax.f32 %v1520, %v1535
  %v1543 = vmax.f32 %v1521, %v1533
  %1548 = vrot.lane.b32.xlu0 %v1540, 127
  %v1549 = vpop.permute.xlu0 %1548
  %1550 = vrot.lane.b32.xlu0 %v1541, 127
  %v1551 = vpop.permute.xlu0 %1550
  %1552 = vrot.lane.b32.xlu0 %v1542, 127
  %v1553 = vpop.permute.xlu0 %1552
  %1554 = vrot.lane.b32.xlu0 %v1543, 127
  %v1555 = vpop.permute.xlu0 %1554
  %v1556 = vsel %vm334, %v1549, %v1551
  %v1557 = vsel %vm334, %v1553, %v1555
  %v1562 = vmax.f32 %v1540, %v1556
  %v1563 = vmax.f32 %v1541, %v1551
  %v1564 = vmax.f32 %v1542, %v1557
  %v1565 = vmax.f32 %v1543, %v1555
  %v1566 = vld [vmem:[%s6] sm:$0xf]
  %v1567 = vld [vmem:[%s6 + $0x4] sm:$0xf]
  %v1568 = vld [vmem:[%s6 + $0x8] sm:$0xf]
  %v1569 = vld [vmem:[%s6 + $0xc] sm:$0xf]
  %v1570 = vld [vmem:[%s6 + $0x10] sm:$0xf]
  %v1571 = vld [vmem:[%s6 + $0x14] sm:$0xf]
  %v1572 = vld [vmem:[%s6 + $0x18] sm:$0xf]
  %v1573 = vld [vmem:[%s6 + $0x1c] sm:$0xf]
  %v1574 = vld [vmem:[%s6 + $0x20] sm:$0xf]
  %v1575 = vld [vmem:[%s6 + $0x24] sm:$0xf]
  %v1576 = vld [vmem:[%s6 + $0x28] sm:$0xf]
  %v1577 = vld [vmem:[%s6 + $0x2c] sm:$0xf]
  %v1578 = vld [vmem:[%s6 + $0x30] sm:$0xf]
  %v1579 = vld [vmem:[%s6 + $0x34] sm:$0xf]
  %v1580 = vld [vmem:[%s6 + $0x38] sm:$0xf]
  %v1581 = vld [vmem:[%s6 + $0x3c] sm:$0xf]
  %v1582 = vld [vmem:[%s6 + $0x40] sm:$0xf]
  %v1583 = vld [vmem:[%s6 + $0x44] sm:$0xf]
  %v1584 = vld [vmem:[%s6 + $0x48] sm:$0xf]
  %v1585 = vld [vmem:[%s6 + $0x4c] sm:$0xf]
  %v1586 = vld [vmem:[%s6 + $0x50] sm:$0xf]
  %v1587 = vld [vmem:[%s6 + $0x54] sm:$0xf]
  %v1588 = vld [vmem:[%s6 + $0x58] sm:$0xf]
  %v1589 = vld [vmem:[%s6 + $0x5c] sm:$0x7]
  %v1590 = vunpack.c.l.bf16 %v1566
  %v1591 = vunpack.c.l.bf16 %v1567
  %v1592 = vunpack.c.l.bf16 %v1568
  %v1593 = vunpack.c.l.bf16 %v1569
  %v1594 = vunpack.c.l.bf16 %v1570
  %v1595 = vunpack.c.l.bf16 %v1571
  %v1596 = vunpack.c.l.bf16 %v1572
  %v1597 = vunpack.c.l.bf16 %v1573
  %v1598 = vunpack.c.l.bf16 %v1574
  %v1599 = vunpack.c.l.bf16 %v1575
  %v1600 = vunpack.c.l.bf16 %v1576
  %v1601 = vunpack.c.l.bf16 %v1577
  %v1602 = vunpack.c.l.bf16 %v1578
  %v1603 = vunpack.c.l.bf16 %v1579
  %v1604 = vunpack.c.l.bf16 %v1580
  %v1605 = vunpack.c.l.bf16 %v1581
  %v1606 = vunpack.c.l.bf16 %v1582
  %v1607 = vunpack.c.l.bf16 %v1583
  %v1608 = vunpack.c.l.bf16 %v1584
  %v1609 = vunpack.c.l.bf16 %v1585
  %v1610 = vunpack.c.l.bf16 %v1586
  %v1611 = vunpack.c.l.bf16 %v1587
  %v1612 = vunpack.c.l.bf16 %v1588
  %v1613 = vunpack.c.l.bf16 %v1589
  %vm1614 = vcmask 498688
  %v1616 = vsel %vm1614, %v1563, 0
  %v1619 = vsel %vm1614, %v1565, 0
  %v1622 = vsel %vm1048, %v1613, 0
  %1624 = vmatprep.subr.mxu0 0.0
  %1625 = vmatpush1.msra.mxu0 %v1605
  %1626 = vmatprep.subr.mxu0 0.0
  %1627 = vmatpush1.msra.mxu0 %v1604
  %1628 = vmatprep.subr.mxu0 0.0
  %1629 = vmatpush1.msra.mxu0 %v1603
  %1630 = vmatprep.subr.mxu0 0.0
  %1631 = vmatpush1.msra.mxu0 %v1602
  %1632 = vmatprep.subr.mxu0 0.0
  %1633 = vmatpush1.msra.mxu0 %v1601
  %1634 = vmatprep.subr.mxu0 0.0
  %1635 = vmatpush1.msra.mxu0 %v1600
  %1636 = vmatprep.subr.mxu0 0.0
  %1637 = vmatpush1.msra.mxu0 %v1599
  %1638 = vmatprep.subr.mxu0 0.0
  %1639 = vmatpush1.msra.mxu0 %v1598
  %1640 = vmatprep.subr.mxu0 0.0
  %1641 = vmatpush1.msra.mxu0 %v1597
  %1642 = vmatprep.subr.mxu0 0.0
  %1643 = vmatpush1.msra.mxu0 %v1596
  %1644 = vmatprep.subr.mxu0 0.0
  %1645 = vmatpush1.msra.mxu0 %v1595
  %1646 = vmatprep.subr.mxu0 0.0
  %1647 = vmatpush1.msra.mxu0 %v1594
  %1648 = vmatprep.subr.mxu0 0.0
  %1649 = vmatpush1.msra.mxu0 %v1593
  %1650 = vmatprep.subr.mxu0 0.0
  %1651 = vmatpush1.msra.mxu0 %v1592
  %1652 = vmatprep.subr.mxu0 0.0
  %1653 = vmatpush1.msra.mxu0 %v1591
  %1654 = vmatprep.subr.mxu0 0.0
  %1655 = vmatpush1.msra.mxu0 %v1590
  %1656 = vmatprep.subr.mxu0 0.0
  %1657 = vmatpush2.msra.mxu0 0.0
  %1658 = vmatprep.subr.mxu0 0.0
  %1659 = vmatpush2.msra.mxu0 0.0
  %1660 = vmatprep.subr.mxu0 0.0
  %1661 = vmatpush2.msra.mxu0 0.0
  %1662 = vmatprep.subr.mxu0 0.0
  %1663 = vmatpush2.msra.mxu0 0.0
  %1664 = vmatprep.subr.mxu0 0.0
  %1665 = vmatpush2.msra.mxu0 0.0
  %1666 = vmatprep.subr.mxu0 0.0
  %1667 = vmatpush2.msra.mxu0 0.0
  %1668 = vmatprep.subr.mxu0 0.0
  %1669 = vmatpush2.msra.mxu0 0.0
  %1670 = vmatprep.subr.mxu0 0.0
  %1671 = vmatpush2.msra.mxu0 0.0
  %1672 = vmatprep.subr.mxu0 0.0
  %1673 = vmatpush2.msra.mxu0 %v1622
  %1674 = vmatprep.subr.mxu0 0.0
  %1675 = vmatpush2.msra.mxu0 %v1612
  %1676 = vmatprep.subr.mxu0 0.0
  %1677 = vmatpush2.msra.mxu0 %v1611
  %1678 = vmatprep.subr.mxu0 0.0
  %1679 = vmatpush2.msra.mxu0 %v1610
  %1680 = vmatprep.subr.mxu0 0.0
  %1681 = vmatpush2.msra.mxu0 %v1609
  %1682 = vmatprep.subr.mxu0 0.0
  %1683 = vmatpush2.msra.mxu0 %v1608
  %1684 = vmatprep.subr.mxu0 0.0
  %1685 = vmatpush2.msra.mxu0 %v1607
  %1686 = vmatprep.subr.mxu0 0.0
  %1687 = vmatpush2.msra.mxu0 %v1606
  %1688 = vmatprep.mubr.f32.mxu0 %v1616
  %1689 = vmatmul.mubr.f32.gmra.mxu0 %v1562
  %v1690 = vpop.f32.mrf.mxu0
  %v1691 = vadd.f32 0.0, %v1690
  %v1692 = vpop.f32.mrf.mxu0
  %1693 = vmatprep.mubr.f32.mxu0 %v1619
  %1694 = vmatmul.mubr.f32.gmra.mxu0 %v1564
  %v1695 = vpop.f32.mrf.mxu0
  %v1696 = vadd.f32 0.0, %v1695
  %v1697 = vpop.f32.mrf.mxu0
  %1698 = vdwg.mxu0
  %1699 = vst.msk [vmem:[#allocation6 + $0x8] sm:$0xff] %vm77, %v1691
  %1700 = vst.msk [vmem:[#allocation6 + $0x20] sm:$0xff] %vm77, %v1696
  %v1701 = vld [vmem:[#allocation6] sm:$0xff]
  %v1702 = vld [vmem:[#allocation6 + $0x8] sm:$0xff]
  %v1703 = vld [vmem:[#allocation6 + $0x18] sm:$0xff]
  %v1704 = vld [vmem:[#allocation6 + $0x20] sm:$0xff]
  %1709 = vrot.lane.b32.xlu0 %v1701, 7
  %v1710 = vpop.permute.xlu0 %1709
  %1711 = vrot.lane.b32.xlu0 %v1702, 7
  %v1712 = vpop.permute.xlu0 %1711
  %1713 = vrot.lane.b32.xlu0 %v1703, 7
  %v1714 = vpop.permute.xlu0 %1713
  %1715 = vrot.lane.b32.xlu0 %v1704, 7
  %v1716 = vpop.permute.xlu0 %1715
  %vm1717 = vcmask 56320
  %v1718 = vsel %vm1717, %v1710, %v1712
  %v1719 = vsel %vm1717, %v1714, %v1716
  %1722 = vst.msk [vmem:[#allocation4] sm:$0xff] %vm77, %v1718
  %1723 = vst.msk [vmem:[#allocation4 + $0x8] sm:$0xff] %vm77, %v1719
  %v1724 = vld [vmem:[#allocation6] sm:$0xff]
  %v1725 = vld [vmem:[#allocation6 + $0x8] sm:$0xff]
  %v1726 = vld [vmem:[#allocation6 + $0x18] sm:$0xff]
  %v1727 = vld [vmem:[#allocation6 + $0x20] sm:$0xff]
  %1732 = vrot.lane.b32.xlu0 %v1724, 6
  %v1733 = vpop.permute.xlu0 %1732
  %1734 = vrot.lane.b32.xlu0 %v1725, 6
  %v1735 = vpop.permute.xlu0 %1734
  %1736 = vrot.lane.b32.xlu0 %v1726, 6
  %v1737 = vpop.permute.xlu0 %1736
  %1738 = vrot.lane.b32.xlu0 %v1727, 6
  %v1739 = vpop.permute.xlu0 %1738
  %vm1740 = vcmask 48128
  %v1741 = vsel %vm1740, %v1733, %v1735
  %v1742 = vsel %vm1740, %v1737, %v1739
  %1745 = vst.msk [vmem:[#allocation4 + $0x10] sm:$0xff] %vm77, %v1741
  %1746 = vst.msk [vmem:[#allocation4 + $0x18] sm:$0xff] %vm77, %v1742
  %v1747 = vld [vmem:[#allocation6] sm:$0xff]
  %v1748 = vld [vmem:[#allocation6 + $0x8] sm:$0xff]
  %v1749 = vld [vmem:[#allocation6 + $0x18] sm:$0xff]
  %v1750 = vld [vmem:[#allocation6 + $0x20] sm:$0xff]
  %1755 = vrot.lane.b32.xlu0 %v1747, 5
  %v1756 = vpop.permute.xlu0 %1755
  %1757 = vrot.lane.b32.xlu0 %v1748, 5
  %v1758 = vpop.permute.xlu0 %1757
  %1759 = vrot.lane.b32.xlu0 %v1749, 5
  %v1760 = vpop.permute.xlu0 %1759
  %1761 = vrot.lane.b32.xlu0 %v1750, 5
  %v1762 = vpop.permute.xlu0 %1761
  %vm1763 = vcmask 39936
  %v1764 = vsel %vm1763, %v1756, %v1758
  %v1765 = vsel %vm1763, %v1760, %v1762
  %1768 = vst.msk [vmem:[#allocation4 + $0x20] sm:$0xff] %vm77, %v1764
  %1769 = vst.msk [vmem:[#allocation4 + $0x28] sm:$0xff] %vm77, %v1765
  %v1770 = vld [vmem:[#allocation6] sm:$0xff]
  %v1771 = vld [vmem:[#allocation6 + $0x8] sm:$0xff]
  %v1772 = vld [vmem:[#allocation6 + $0x18] sm:$0xff]
  %v1773 = vld [vmem:[#allocation6 + $0x20] sm:$0xff]
  %1778 = vrot.lane.b32.xlu0 %v1770, 1
  %v1779 = vpop.permute.xlu0 %1778
  %1780 = vrot.lane.b32.xlu0 %v1771, 1
  %v1781 = vpop.permute.xlu0 %1780
  %1782 = vrot.lane.b32.xlu0 %v1772, 1
  %v1783 = vpop.permute.xlu0 %1782
  %1784 = vrot.lane.b32.xlu0 %v1773, 1
  %v1785 = vpop.permute.xlu0 %1784
  %v1786 = vsel %vm268, %v1779, %v1781
  %v1787 = vsel %vm268, %v1783, %v1785
  %1790 = vst.msk [vmem:[#allocation4 + $0x30] sm:$0xff] %vm77, %v1786
  %1791 = vst.msk [vmem:[#allocation4 + $0x38] sm:$0xff] %vm77, %v1787
  %v1792 = vld [vmem:[#allocation6 + $0x8] sm:$0xff]
  %v1793 = vld [vmem:[#allocation6 + $0x20] sm:$0xff]
  %1794 = vst.msk [vmem:[#allocation4 + $0x40] sm:$0xff] %vm77, %v1792
  %1795 = vst.msk [vmem:[#allocation4 + $0x48] sm:$0xff] %vm77, %v1793
  %v1796 = vld [vmem:[#allocation6 + $0x8] sm:$0xff]
  %v1797 = vld [vmem:[#allocation6 + $0x20] sm:$0xff]
  %1800 = vrot.lane.b32.xlu0 %v1796, 127
  %v1801 = vpop.permute.xlu0 %1800
  %1802 = vrot.lane.b32.xlu0 %v1797, 127
  %v1803 = vpop.permute.xlu0 %1802
  %1806 = vst.msk [vmem:[#allocation4 + $0x50] sm:$0xff] %vm77, %v1801
  %1807 = vst.msk [vmem:[#allocation4 + $0x58] sm:$0xff] %vm77, %v1803
  %v1808 = vld [vmem:[#allocation6 + $0x8] sm:$0xff]
  %v1809 = vld [vmem:[#allocation6 + $0x20] sm:$0xff]
  %1812 = vrot.lane.b32.xlu0 %v1808, 123
  %v1813 = vpop.permute.xlu0 %1812
  %1814 = vrot.lane.b32.xlu0 %v1809, 123
  %v1815 = vpop.permute.xlu0 %1814
  %1818 = vst.msk [vmem:[#allocation4 + $0x60] sm:$0xff] %vm77, %v1813
  %1819 = vst.msk [vmem:[#allocation4 + $0x68] sm:$0xff] %vm77, %v1815
  %v1820 = vld [vmem:[#allocation6 + $0x8] sm:$0xff]
  %v1821 = vld [vmem:[#allocation6 + $0x20] sm:$0xff]
  %1824 = vrot.lane.b32.xlu0 %v1820, 122
  %v1825 = vpop.permute.xlu0 %1824
  %1826 = vrot.lane.b32.xlu0 %v1821, 122
  %v1827 = vpop.permute.xlu0 %1826
  %1830 = vst.msk [vmem:[#allocation4 + $0x70] sm:$0xff] %vm77, %v1825
  %1831 = vst.msk [vmem:[#allocation4 + $0x78] sm:$0xff] %vm77, %v1827
  %v1832 = vld [vmem:[#allocation6 + $0x8] sm:$0xff]
  %v1833 = vld [vmem:[#allocation6 + $0x20] sm:$0xff]
  %1836 = vrot.lane.b32.xlu0 %v1832, 121
  %v1837 = vpop.permute.xlu0 %1836
  %1838 = vrot.lane.b32.xlu0 %v1833, 121
  %v1839 = vpop.permute.xlu0 %1838
  %1842 = vst.msk [vmem:[#allocation4 + $0x80] sm:$0xff] %vm77, %v1837
  %1843 = vst.msk [vmem:[#allocation4 + $0x88] sm:$0xff] %vm77, %v1839
  %v1844 = vld [vmem:[%s7] sm:$0xff]
  %v1845 = vld [vmem:[%s7 + $0x8] sm:$0xff]
  %v1846 = vld [vmem:[%s7 + $0x10] sm:$0xff]
  %v1847 = vld [vmem:[%s7 + $0x18] sm:$0xff]
  %v1848 = vld [vmem:[#allocation4] sm:$0xff]
  %v1849 = vld [vmem:[#allocation4 + $0x8] sm:$0xff]
  %v1850 = vld [vmem:[#allocation4 + $0x10] sm:$0xff]
  %v1851 = vld [vmem:[#allocation4 + $0x18] sm:$0xff]
  %v1852 = vld [vmem:[#allocation4 + $0x20] sm:$0xff]
  %v1853 = vld [vmem:[#allocation4 + $0x28] sm:$0xff]
  %v1854 = vld [vmem:[#allocation4 + $0x30] sm:$0xff]
  %v1855 = vld [vmem:[#allocation4 + $0x38] sm:$0xff]
  %v1856 = vld [vmem:[#allocation4 + $0x40] sm:$0xff]
  %v1857 = vld [vmem:[#allocation4 + $0x48] sm:$0xff]
  %v1858 = vld [vmem:[#allocation4 + $0x50] sm:$0xff]
  %v1859 = vld [vmem:[#allocation4 + $0x58] sm:$0xff]
  %v1860 = vld [vmem:[#allocation4 + $0x60] sm:$0xff]
  %v1861 = vld [vmem:[#allocation4 + $0x68] sm:$0xff]
  %v1862 = vld [vmem:[#allocation4 + $0x70] sm:$0xff]
  %v1863 = vld [vmem:[#allocation4 + $0x78] sm:$0xff]
  %v1864 = vld [vmem:[#allocation4 + $0x80] sm:$0xff]
  %v1865 = vld [vmem:[#allocation4 + $0x88] sm:$0xff]
  %v1866 = vld [vmem:[%s8] sm:$0xff]
  %v1867 = vld [vmem:[%s8 + $0x8] sm:$0xff]
  %1869 = vset.pattern.permute.xlu0 0
  %1870 = vperm.xlu0 %1869, %v1866
  %v1871 = vpop.permute.xlu0 %1870
  %1874 = vset.pattern.permute.xlu0 0
  %1875 = vperm.xlu0 %1874, %v1867
  %v1876 = vpop.permute.xlu0 %1875
  %vm1878 = vcmask 130048
  %v1880 = vsel %vm1878, %v1845, 0
  %v1883 = vsel %vm1878, %v1847, 0
  %1885 = vmatprep.subr.mxu0 0.0
  %1886 = vmatpush1.msra.mxu0 %v1863
  %1887 = vmatprep.subr.mxu0 0.0
  %1888 = vmatpush1.msra.mxu0 %v1862
  %1889 = vmatprep.subr.mxu0 0.0
  %1890 = vmatpush1.msra.mxu0 %v1861
  %1891 = vmatprep.subr.mxu0 0.0
  %1892 = vmatpush1.msra.mxu0 %v1860
  %1893 = vmatprep.subr.mxu0 0.0
  %1894 = vmatpush1.msra.mxu0 %v1859
  %1895 = vmatprep.subr.mxu0 0.0
  %1896 = vmatpush1.msra.mxu0 %v1858
  %1897 = vmatprep.subr.mxu0 0.0
  %1898 = vmatpush1.msra.mxu0 %v1857
  %1899 = vmatprep.subr.mxu0 0.0
  %1900 = vmatpush1.msra.mxu0 %v1856
  %1901 = vmatprep.subr.mxu0 0.0
  %1902 = vmatpush1.msra.mxu0 %v1855
  %1903 = vmatprep.subr.mxu0 0.0
  %1904 = vmatpush1.msra.mxu0 %v1854
  %1905 = vmatprep.subr.mxu0 0.0
  %1906 = vmatpush1.msra.mxu0 %v1853
  %1907 = vmatprep.subr.mxu0 0.0
  %1908 = vmatpush1.msra.mxu0 %v1852
  %1909 = vmatprep.subr.mxu0 0.0
  %1910 = vmatpush1.msra.mxu0 %v1851
  %1911 = vmatprep.subr.mxu0 0.0
  %1912 = vmatpush1.msra.mxu0 %v1850
  %1913 = vmatprep.subr.mxu0 0.0
  %1914 = vmatpush1.msra.mxu0 %v1849
  %1915 = vmatprep.subr.mxu0 0.0
  %1916 = vmatpush1.msra.mxu0 %v1848
  %1917 = vmatprep.subr.mxu0 0.0
  %1918 = vmatpush2.msra.mxu0 0.0
  %1919 = vmatprep.subr.mxu0 0.0
  %1920 = vmatpush2.msra.mxu0 0.0
  %1921 = vmatprep.subr.mxu0 0.0
  %1922 = vmatpush2.msra.mxu0 0.0
  %1923 = vmatprep.subr.mxu0 0.0
  %1924 = vmatpush2.msra.mxu0 0.0
  %1925 = vmatprep.subr.mxu0 0.0
  %1926 = vmatpush2.msra.mxu0 0.0
  %1927 = vmatprep.subr.mxu0 0.0
  %1928 = vmatpush2.msra.mxu0 0.0
  %1929 = vmatprep.subr.mxu0 0.0
  %1930 = vmatpush2.msra.mxu0 0.0
  %1931 = vmatprep.subr.mxu0 0.0
  %1932 = vmatpush2.msra.mxu0 0.0
  %1933 = vmatprep.subr.mxu0 0.0
  %1934 = vmatpush2.msra.mxu0 0.0
  %1935 = vmatprep.subr.mxu0 0.0
  %1936 = vmatpush2.msra.mxu0 0.0
  %1937 = vmatprep.subr.mxu0 0.0
  %1938 = vmatpush2.msra.mxu0 0.0
  %1939 = vmatprep.subr.mxu0 0.0
  %1940 = vmatpush2.msra.mxu0 0.0
  %1941 = vmatprep.subr.mxu0 0.0
  %1942 = vmatpush2.msra.mxu0 0.0
  %1943 = vmatprep.subr.mxu0 0.0
  %1944 = vmatpush2.msra.mxu0 0.0
  %1945 = vmatprep.subr.mxu0 0.0
  %1946 = vmatpush2.msra.mxu0 %v1865
  %1947 = vmatprep.subr.mxu0 0.0
  %1948 = vmatpush2.msra.mxu0 %v1864
  %1949 = vmatprep.mubr.f32.mxu0 %v1880
  %1950 = vmatmul.mubr.f32.gmra.mxu0 %v1844
  %v1951 = vpop.f32.mrf.mxu0
  %v1952 = vadd.f32 %v1871, %v1951
  %v1953 = vpop.f32.mrf.mxu0
  %1954 = vmatprep.mubr.f32.mxu0 %v1883
  %1955 = vmatmul.mubr.f32.gmra.mxu0 %v1846
  %v1956 = vpop.f32.mrf.mxu0
  %v1957 = vadd.f32 %v1876, %v1956
  %v1958 = vpop.f32.mrf.mxu0
  %1959 = vdwg.mxu0
  %v1960 = vmax.f32 %v1952, 0.0
  %v1961 = vmax.f32 %v1957, 0.0
  %v1962 = vld [vmem:[%s13] sm:$0x1]
  %v1964 = vlaneseq
  %v1965 = vshrl.u32 %v1964, 7
  %v1966 = vsub.s32 0, %v1965
  %v1967 = vrot.slane %v1962, %v1966
  %v1969 = vmul.f32 %v1960, %v1967
  %v1970 = vmul.f32 %v1961, %v1967
  %1971 = vst.msk [vmem:[#allocation7 + $0x8] sm:$0xff] %vm77, %v1969
  %1972 = vst.msk [vmem:[#allocation7 + $0x20] sm:$0xff] %vm77, %v1970
  %v1973 = vld [vmem:[#allocation7] sm:$0xff]
  %v1974 = vld [vmem:[#allocation7 + $0x8] sm:$0xff]
  %v1975 = vld [vmem:[#allocation7 + $0x18] sm:$0xff]
  %v1976 = vld [vmem:[#allocation7 + $0x20] sm:$0xff]
  %1981 = vrot.lane.b32.xlu0 %v1973, 7
  %v1982 = vpop.permute.xlu0 %1981
  %1983 = vrot.lane.b32.xlu0 %v1974, 7
  %v1984 = vpop.permute.xlu0 %1983
  %1985 = vrot.lane.b32.xlu0 %v1975, 7
  %v1986 = vpop.permute.xlu0 %1985
  %1987 = vrot.lane.b32.xlu0 %v1976, 7
  %v1988 = vpop.permute.xlu0 %1987
  %v1989 = vsel %vm1717, %v1982, %v1984
  %v1990 = vsel %vm1717, %v1986, %v1988
  %1993 = vst.msk [vmem:[#allocation4] sm:$0xff] %vm77, %v1989
  %1994 = vst.msk [vmem:[#allocation4 + $0x8] sm:$0xff] %vm77, %v1990
  %v1995 = vld [vmem:[#allocation7] sm:$0xff]
  %v1996 = vld [vmem:[#allocation7 + $0x8] sm:$0xff]
  %v1997 = vld [vmem:[#allocation7 + $0x18] sm:$0xff]
  %v1998 = vld [vmem:[#allocation7 + $0x20] sm:$0xff]
  %2003 = vrot.lane.b32.xlu0 %v1995, 6
  %v2004 = vpop.permute.xlu0 %2003
  %2005 = vrot.lane.b32.xlu0 %v1996, 6
  %v2006 = vpop.permute.xlu0 %2005
  %2007 = vrot.lane.b32.xlu0 %v1997, 6
  %v2008 = vpop.permute.xlu0 %2007
  %2009 = vrot.lane.b32.xlu0 %v1998, 6
  %v2010 = vpop.permute.xlu0 %2009
  %v2011 = vsel %vm1740, %v2004, %v2006
  %v2012 = vsel %vm1740, %v2008, %v2010
  %2015 = vst.msk [vmem:[#allocation4 + $0x10] sm:$0xff] %vm77, %v2011
  %2016 = vst.msk [vmem:[#allocation4 + $0x18] sm:$0xff] %vm77, %v2012
  %v2017 = vld [vmem:[#allocation7] sm:$0xff]
  %v2018 = vld [vmem:[#allocation7 + $0x8] sm:$0xff]
  %v2019 = vld [vmem:[#allocation7 + $0x18] sm:$0xff]
  %v2020 = vld [vmem:[#allocation7 + $0x20] sm:$0xff]
  %2025 = vrot.lane.b32.xlu0 %v2017, 5
  %v2026 = vpop.permute.xlu0 %2025
  %2027 = vrot.lane.b32.xlu0 %v2018, 5
  %v2028 = vpop.permute.xlu0 %2027
  %2029 = vrot.lane.b32.xlu0 %v2019, 5
  %v2030 = vpop.permute.xlu0 %2029
  %2031 = vrot.lane.b32.xlu0 %v2020, 5
  %v2032 = vpop.permute.xlu0 %2031
  %v2033 = vsel %vm1763, %v2026, %v2028
  %v2034 = vsel %vm1763, %v2030, %v2032
  %2037 = vst.msk [vmem:[#allocation4 + $0x20] sm:$0xff] %vm77, %v2033
  %2038 = vst.msk [vmem:[#allocation4 + $0x28] sm:$0xff] %vm77, %v2034
  %v2039 = vld [vmem:[#allocation7] sm:$0xff]
  %v2040 = vld [vmem:[#allocation7 + $0x8] sm:$0xff]
  %v2041 = vld [vmem:[#allocation7 + $0x18] sm:$0xff]
  %v2042 = vld [vmem:[#allocation7 + $0x20] sm:$0xff]
  %2047 = vrot.lane.b32.xlu0 %v2039, 1
  %v2048 = vpop.permute.xlu0 %2047
  %2049 = vrot.lane.b32.xlu0 %v2040, 1
  %v2050 = vpop.permute.xlu0 %2049
  %2051 = vrot.lane.b32.xlu0 %v2041, 1
  %v2052 = vpop.permute.xlu0 %2051
  %2053 = vrot.lane.b32.xlu0 %v2042, 1
  %v2054 = vpop.permute.xlu0 %2053
  %v2055 = vsel %vm268, %v2048, %v2050
  %v2056 = vsel %vm268, %v2052, %v2054
  %2059 = vst.msk [vmem:[#allocation4 + $0x30] sm:$0xff] %vm77, %v2055
  %2060 = vst.msk [vmem:[#allocation4 + $0x38] sm:$0xff] %vm77, %v2056
  %v2061 = vld [vmem:[#allocation7 + $0x8] sm:$0xff]
  %v2062 = vld [vmem:[#allocation7 + $0x20] sm:$0xff]
  %2063 = vst.msk [vmem:[#allocation4 + $0x40] sm:$0xff] %vm77, %v2061
  %2064 = vst.msk [vmem:[#allocation4 + $0x48] sm:$0xff] %vm77, %v2062
  %v2065 = vld [vmem:[#allocation7 + $0x8] sm:$0xff]
  %v2066 = vld [vmem:[#allocation7 + $0x20] sm:$0xff]
  %2069 = vrot.lane.b32.xlu0 %v2065, 127
  %v2070 = vpop.permute.xlu0 %2069
  %2071 = vrot.lane.b32.xlu0 %v2066, 127
  %v2072 = vpop.permute.xlu0 %2071
  %2075 = vst.msk [vmem:[#allocation4 + $0x50] sm:$0xff] %vm77, %v2070
  %2076 = vst.msk [vmem:[#allocation4 + $0x58] sm:$0xff] %vm77, %v2072
  %v2077 = vld [vmem:[#allocation7 + $0x8] sm:$0xff]
  %v2078 = vld [vmem:[#allocation7 + $0x20] sm:$0xff]
  %2081 = vrot.lane.b32.xlu0 %v2077, 123
  %v2082 = vpop.permute.xlu0 %2081
  %2083 = vrot.lane.b32.xlu0 %v2078, 123
  %v2084 = vpop.permute.xlu0 %2083
  %2087 = vst.msk [vmem:[#allocation4 + $0x60] sm:$0xff] %vm77, %v2082
  %2088 = vst.msk [vmem:[#allocation4 + $0x68] sm:$0xff] %vm77, %v2084
  %v2089 = vld [vmem:[#allocation7 + $0x8] sm:$0xff]
  %v2090 = vld [vmem:[#allocation7 + $0x20] sm:$0xff]
  %2093 = vrot.lane.b32.xlu0 %v2089, 122
  %v2094 = vpop.permute.xlu0 %2093
  %2095 = vrot.lane.b32.xlu0 %v2090, 122
  %v2096 = vpop.permute.xlu0 %2095
  %2099 = vst.msk [vmem:[#allocation4 + $0x70] sm:$0xff] %vm77, %v2094
  %2100 = vst.msk [vmem:[#allocation4 + $0x78] sm:$0xff] %vm77, %v2096
  %v2101 = vld [vmem:[#allocation7 + $0x8] sm:$0xff]
  %v2102 = vld [vmem:[#allocation7 + $0x20] sm:$0xff]
  %2105 = vrot.lane.b32.xlu0 %v2101, 121
  %v2106 = vpop.permute.xlu0 %2105
  %2107 = vrot.lane.b32.xlu0 %v2102, 121
  %v2108 = vpop.permute.xlu0 %2107
  %2111 = vst.msk [vmem:[#allocation4 + $0x80] sm:$0xff] %vm77, %v2106
  %2112 = vst.msk [vmem:[#allocation4 + $0x88] sm:$0xff] %vm77, %v2108
  %v2113 = vld [vmem:[%s9] sm:$0xff]
  %v2114 = vld [vmem:[%s9 + $0x8] sm:$0xff]
  %v2115 = vld [vmem:[%s9 + $0x10] sm:$0xff]
  %v2116 = vld [vmem:[%s9 + $0x18] sm:$0xff]
  %v2117 = vld [vmem:[#allocation4] sm:$0xff]
  %v2118 = vld [vmem:[#allocation4 + $0x8] sm:$0xff]
  %v2119 = vld [vmem:[#allocation4 + $0x10] sm:$0xff]
  %v2120 = vld [vmem:[#allocation4 + $0x18] sm:$0xff]
  %v2121 = vld [vmem:[#allocation4 + $0x20] sm:$0xff]
  %v2122 = vld [vmem:[#allocation4 + $0x28] sm:$0xff]
  %v2123 = vld [vmem:[#allocation4 + $0x30] sm:$0xff]
  %v2124 = vld [vmem:[#allocation4 + $0x38] sm:$0xff]
  %v2125 = vld [vmem:[#allocation4 + $0x40] sm:$0xff]
  %v2126 = vld [vmem:[#allocation4 + $0x48] sm:$0xff]
  %v2127 = vld [vmem:[#allocation4 + $0x50] sm:$0xff]
  %v2128 = vld [vmem:[#allocation4 + $0x58] sm:$0xff]
  %v2129 = vld [vmem:[#allocation4 + $0x60] sm:$0xff]
  %v2130 = vld [vmem:[#allocation4 + $0x68] sm:$0xff]
  %v2131 = vld [vmem:[#allocation4 + $0x70] sm:$0xff]
  %v2132 = vld [vmem:[#allocation4 + $0x78] sm:$0xff]
  %v2133 = vld [vmem:[#allocation4 + $0x80] sm:$0xff]
  %v2134 = vld [vmem:[#allocation4 + $0x88] sm:$0xff]
  %v2135 = vld [vmem:[%s10] sm:$0xff]
  %v2136 = vld [vmem:[%s10 + $0x8] sm:$0xff]
  %2138 = vset.pattern.permute.xlu0 0
  %2139 = vperm.xlu0 %2138, %v2135
  %v2140 = vpop.permute.xlu0 %2139
  %2143 = vset.pattern.permute.xlu0 0
  %2144 = vperm.xlu0 %2143, %v2136
  %v2145 = vpop.permute.xlu0 %2144
  %v2148 = vsel %vm1878, %v2114, 0
  %v2151 = vsel %vm1878, %v2116, 0
  %2153 = vmatprep.subr.mxu0 0.0
  %2154 = vmatpush1.msra.mxu0 %v2132
  %2155 = vmatprep.subr.mxu0 0.0
  %2156 = vmatpush1.msra.mxu0 %v2131
  %2157 = vmatprep.subr.mxu0 0.0
  %2158 = vmatpush1.msra.mxu0 %v2130
  %2159 = vmatprep.subr.mxu0 0.0
  %2160 = vmatpush1.msra.mxu0 %v2129
  %2161 = vmatprep.subr.mxu0 0.0
  %2162 = vmatpush1.msra.mxu0 %v2128
  %2163 = vmatprep.subr.mxu0 0.0
  %2164 = vmatpush1.msra.mxu0 %v2127
  %2165 = vmatprep.subr.mxu0 0.0
  %2166 = vmatpush1.msra.mxu0 %v2126
  %2167 = vmatprep.subr.mxu0 0.0
  %2168 = vmatpush1.msra.mxu0 %v2125
  %2169 = vmatprep.subr.mxu0 0.0
  %2170 = vmatpush1.msra.mxu0 %v2124
  %2171 = vmatprep.subr.mxu0 0.0
  %2172 = vmatpush1.msra.mxu0 %v2123
  %2173 = vmatprep.subr.mxu0 0.0
  %2174 = vmatpush1.msra.mxu0 %v2122
  %2175 = vmatprep.subr.mxu0 0.0
  %2176 = vmatpush1.msra.mxu0 %v2121
  %2177 = vmatprep.subr.mxu0 0.0
  %2178 = vmatpush1.msra.mxu0 %v2120
  %2179 = vmatprep.subr.mxu0 0.0
  %2180 = vmatpush1.msra.mxu0 %v2119
  %2181 = vmatprep.subr.mxu0 0.0
  %2182 = vmatpush1.msra.mxu0 %v2118
  %2183 = vmatprep.subr.mxu0 0.0
  %2184 = vmatpush1.msra.mxu0 %v2117
  %2185 = vmatprep.subr.mxu0 0.0
  %2186 = vmatpush2.msra.mxu0 0.0
  %2187 = vmatprep.subr.mxu0 0.0
  %2188 = vmatpush2.msra.mxu0 0.0
  %2189 = vmatprep.subr.mxu0 0.0
  %2190 = vmatpush2.msra.mxu0 0.0
  %2191 = vmatprep.subr.mxu0 0.0
  %2192 = vmatpush2.msra.mxu0 0.0
  %2193 = vmatprep.subr.mxu0 0.0
  %2194 = vmatpush2.msra.mxu0 0.0
  %2195 = vmatprep.subr.mxu0 0.0
  %2196 = vmatpush2.msra.mxu0 0.0
  %2197 = vmatprep.subr.mxu0 0.0
  %2198 = vmatpush2.msra.mxu0 0.0
  %2199 = vmatprep.subr.mxu0 0.0
  %2200 = vmatpush2.msra.mxu0 0.0
  %2201 = vmatprep.subr.mxu0 0.0
  %2202 = vmatpush2.msra.mxu0 0.0
  %2203 = vmatprep.subr.mxu0 0.0
  %2204 = vmatpush2.msra.mxu0 0.0
  %2205 = vmatprep.subr.mxu0 0.0
  %2206 = vmatpush2.msra.mxu0 0.0
  %2207 = vmatprep.subr.mxu0 0.0
  %2208 = vmatpush2.msra.mxu0 0.0
  %2209 = vmatprep.subr.mxu0 0.0
  %2210 = vmatpush2.msra.mxu0 0.0
  %2211 = vmatprep.subr.mxu0 0.0
  %2212 = vmatpush2.msra.mxu0 0.0
  %2213 = vmatprep.subr.mxu0 0.0
  %2214 = vmatpush2.msra.mxu0 %v2134
  %2215 = vmatprep.subr.mxu0 0.0
  %2216 = vmatpush2.msra.mxu0 %v2133
  %2217 = vmatprep.mubr.f32.mxu0 %v2148
  %2218 = vmatmul.mubr.f32.gmra.mxu0 %v2113
  %v2219 = vpop.f32.mrf.mxu0
  %v2220 = vadd.f32 %v2140, %v2219
  %v2221 = vpop.f32.mrf.mxu0
  %2222 = vmatprep.mubr.f32.mxu0 %v2151
  %2223 = vmatmul.mubr.f32.gmra.mxu0 %v2115
  %v2224 = vpop.f32.mrf.mxu0
  %v2225 = vadd.f32 %v2145, %v2224
  %v2226 = vpop.f32.mrf.mxu0
  %2227 = vdwg.mxu0
  %v2228 = vmax.f32 %v2220, 0.0
  %v2229 = vmax.f32 %v2225, 0.0
  %v2230 = vld [vmem:[%s13] sm:$0x1]
  %v2232 = vlaneseq
  %v2233 = vshrl.u32 %v2232, 7
  %v2234 = vsub.s32 0, %v2233
  %v2235 = vrot.slane %v2230, %v2234
  %v2237 = vmul.f32 %v2228, %v2235
  %v2238 = vmul.f32 %v2229, %v2235
  %2239 = vst.msk [vmem:[#allocation8 + $0x8] sm:$0xff] %vm77, %v2237
  %2240 = vst.msk [vmem:[#allocation8 + $0x20] sm:$0xff] %vm77, %v2238
  %v2241 = vld [vmem:[#allocation8] sm:$0xff]
  %v2242 = vld [vmem:[#allocation8 + $0x8] sm:$0xff]
  %v2243 = vld [vmem:[#allocation8 + $0x18] sm:$0xff]
  %v2244 = vld [vmem:[#allocation8 + $0x20] sm:$0xff]
  %2249 = vrot.lane.b32.xlu0 %v2241, 7
  %v2250 = vpop.permute.xlu0 %2249
  %2251 = vrot.lane.b32.xlu0 %v2242, 7
  %v2252 = vpop.permute.xlu0 %2251
  %2253 = vrot.lane.b32.xlu0 %v2243, 7
  %v2254 = vpop.permute.xlu0 %2253
  %2255 = vrot.lane.b32.xlu0 %v2244, 7
  %v2256 = vpop.permute.xlu0 %2255
  %v2257 = vsel %vm1717, %v2250, %v2252
  %v2258 = vsel %vm1717, %v2254, %v2256
  %2261 = vst.msk [vmem:[#allocation4] sm:$0xff] %vm77, %v2257
  %2262 = vst.msk [vmem:[#allocation4 + $0x8] sm:$0xff] %vm77, %v2258
  %v2263 = vld [vmem:[#allocation8] sm:$0xff]
  %v2264 = vld [vmem:[#allocation8 + $0x8] sm:$0xff]
  %v2265 = vld [vmem:[#allocation8 + $0x18] sm:$0xff]
  %v2266 = vld [vmem:[#allocation8 + $0x20] sm:$0xff]
  %2271 = vrot.lane.b32.xlu0 %v2263, 6
  %v2272 = vpop.permute.xlu0 %2271
  %2273 = vrot.lane.b32.xlu0 %v2264, 6
  %v2274 = vpop.permute.xlu0 %2273
  %2275 = vrot.lane.b32.xlu0 %v2265, 6
  %v2276 = vpop.permute.xlu0 %2275
  %2277 = vrot.lane.b32.xlu0 %v2266, 6
  %v2278 = vpop.permute.xlu0 %2277
  %v2279 = vsel %vm1740, %v2272, %v2274
  %v2280 = vsel %vm1740, %v2276, %v2278
  %2283 = vst.msk [vmem:[#allocation4 + $0x10] sm:$0xff] %vm77, %v2279
  %2284 = vst.msk [vmem:[#allocation4 + $0x18] sm:$0xff] %vm77, %v2280
  %v2285 = vld [vmem:[#allocation8] sm:$0xff]
  %v2286 = vld [vmem:[#allocation8 + $0x8] sm:$0xff]
  %v2287 = vld [vmem:[#allocation8 + $0x18] sm:$0xff]
  %v2288 = vld [vmem:[#allocation8 + $0x20] sm:$0xff]
  %2293 = vrot.lane.b32.xlu0 %v2285, 5
  %v2294 = vpop.permute.xlu0 %2293
  %2295 = vrot.lane.b32.xlu0 %v2286, 5
  %v2296 = vpop.permute.xlu0 %2295
  %2297 = vrot.lane.b32.xlu0 %v2287, 5
  %v2298 = vpop.permute.xlu0 %2297
  %2299 = vrot.lane.b32.xlu0 %v2288, 5
  %v2300 = vpop.permute.xlu0 %2299
  %v2301 = vsel %vm1763, %v2294, %v2296
  %v2302 = vsel %vm1763, %v2298, %v2300
  %2305 = vst.msk [vmem:[#allocation4 + $0x20] sm:$0xff] %vm77, %v2301
  %2306 = vst.msk [vmem:[#allocation4 + $0x28] sm:$0xff] %vm77, %v2302
  %v2307 = vld [vmem:[#allocation8] sm:$0xff]
  %v2308 = vld [vmem:[#allocation8 + $0x8] sm:$0xff]
  %v2309 = vld [vmem:[#allocation8 + $0x18] sm:$0xff]
  %v2310 = vld [vmem:[#allocation8 + $0x20] sm:$0xff]
  %2315 = vrot.lane.b32.xlu0 %v2307, 1
  %v2316 = vpop.permute.xlu0 %2315
  %2317 = vrot.lane.b32.xlu0 %v2308, 1
  %v2318 = vpop.permute.xlu0 %2317
  %2319 = vrot.lane.b32.xlu0 %v2309, 1
  %v2320 = vpop.permute.xlu0 %2319
  %2321 = vrot.lane.b32.xlu0 %v2310, 1
  %v2322 = vpop.permute.xlu0 %2321
  %v2323 = vsel %vm268, %v2316, %v2318
  %v2324 = vsel %vm268, %v2320, %v2322
  %2327 = vst.msk [vmem:[#allocation4 + $0x30] sm:$0xff] %vm77, %v2323
  %2328 = vst.msk [vmem:[#allocation4 + $0x38] sm:$0xff] %vm77, %v2324
  %v2329 = vld [vmem:[#allocation8 + $0x8] sm:$0xff]
  %v2330 = vld [vmem:[#allocation8 + $0x20] sm:$0xff]
  %2331 = vst.msk [vmem:[#allocation4 + $0x40] sm:$0xff] %vm77, %v2329
  %2332 = vst.msk [vmem:[#allocation4 + $0x48] sm:$0xff] %vm77, %v2330
  %v2333 = vld [vmem:[#allocation8 + $0x8] sm:$0xff]
  %v2334 = vld [vmem:[#allocation8 + $0x20] sm:$0xff]
  %2337 = vrot.lane.b32.xlu0 %v2333, 127
  %v2338 = vpop.permute.xlu0 %2337
  %2339 = vrot.lane.b32.xlu0 %v2334, 127
  %v2340 = vpop.permute.xlu0 %2339
  %2343 = vst.msk [vmem:[#allocation4 + $0x50] sm:$0xff] %vm77, %v2338
  %2344 = vst.msk [vmem:[#allocation4 + $0x58] sm:$0xff] %vm77, %v2340
  %v2345 = vld [vmem:[#allocation8 + $0x8] sm:$0xff]
  %v2346 = vld [vmem:[#allocation8 + $0x20] sm:$0xff]
  %2349 = vrot.lane.b32.xlu0 %v2345, 123
  %v2350 = vpop.permute.xlu0 %2349
  %2351 = vrot.lane.b32.xlu0 %v2346, 123
  %v2352 = vpop.permute.xlu0 %2351
  %2355 = vst.msk [vmem:[#allocation4 + $0x60] sm:$0xff] %vm77, %v2350
  %2356 = vst.msk [vmem:[#allocation4 + $0x68] sm:$0xff] %vm77, %v2352
  %v2357 = vld [vmem:[#allocation8 + $0x8] sm:$0xff]
  %v2358 = vld [vmem:[#allocation8 + $0x20] sm:$0xff]
  %2361 = vrot.lane.b32.xlu0 %v2357, 122
  %v2362 = vpop.permute.xlu0 %2361
  %2363 = vrot.lane.b32.xlu0 %v2358, 122
  %v2364 = vpop.permute.xlu0 %2363
  %2367 = vst.msk [vmem:[#allocation4 + $0x70] sm:$0xff] %vm77, %v2362
  %2368 = vst.msk [vmem:[#allocation4 + $0x78] sm:$0xff] %vm77, %v2364
  %v2369 = vld [vmem:[#allocation8 + $0x8] sm:$0xff]
  %v2370 = vld [vmem:[#allocation8 + $0x20] sm:$0xff]
  %2373 = vrot.lane.b32.xlu0 %v2369, 121
  %v2374 = vpop.permute.xlu0 %2373
  %2375 = vrot.lane.b32.xlu0 %v2370, 121
  %v2376 = vpop.permute.xlu0 %2375
  %2379 = vst.msk [vmem:[#allocation4 + $0x80] sm:$0xff] %vm77, %v2374
  %2380 = vst.msk [vmem:[#allocation4 + $0x88] sm:$0xff] %vm77, %v2376
  %v2381 = vld [vmem:[%s11] sm:$0xff]
  %v2382 = vld [vmem:[%s11 + $0x8] sm:$0xff]
  %v2383 = vld [vmem:[%s11 + $0x10] sm:$0xff]
  %v2384 = vld [vmem:[%s11 + $0x18] sm:$0xff]
  %v2385 = vld [vmem:[#allocation4] sm:$0xff]
  %v2386 = vld [vmem:[#allocation4 + $0x8] sm:$0xff]
  %v2387 = vld [vmem:[#allocation4 + $0x10] sm:$0xff]
  %v2388 = vld [vmem:[#allocation4 + $0x18] sm:$0xff]
  %v2389 = vld [vmem:[#allocation4 + $0x20] sm:$0xff]
  %v2390 = vld [vmem:[#allocation4 + $0x28] sm:$0xff]
  %v2391 = vld [vmem:[#allocation4 + $0x30] sm:$0xff]
  %v2392 = vld [vmem:[#allocation4 + $0x38] sm:$0xff]
  %v2393 = vld [vmem:[#allocation4 + $0x40] sm:$0xff]
  %v2394 = vld [vmem:[#allocation4 + $0x48] sm:$0xff]
  %v2395 = vld [vmem:[#allocation4 + $0x50] sm:$0xff]
  %v2396 = vld [vmem:[#allocation4 + $0x58] sm:$0xff]
  %v2397 = vld [vmem:[#allocation4 + $0x60] sm:$0xff]
  %v2398 = vld [vmem:[#allocation4 + $0x68] sm:$0xff]
  %v2399 = vld [vmem:[#allocation4 + $0x70] sm:$0xff]
  %v2400 = vld [vmem:[#allocation4 + $0x78] sm:$0xff]
  %v2401 = vld [vmem:[#allocation4 + $0x80] sm:$0xff]
  %v2402 = vld [vmem:[#allocation4 + $0x88] sm:$0xff]
  %v2403 = vld [vmem:[%s12] sm:$0xff]
  %v2404 = vld [vmem:[%s12 + $0x8] sm:$0xff]
  %2406 = vset.pattern.permute.xlu0 0
  %2407 = vperm.xlu0 %2406, %v2403
  %v2408 = vpop.permute.xlu0 %2407
  %2411 = vset.pattern.permute.xlu0 0
  %2412 = vperm.xlu0 %2411, %v2404
  %v2413 = vpop.permute.xlu0 %2412
  %v2416 = vsel %vm1878, %v2382, 0
  %v2419 = vsel %vm1878, %v2384, 0
  %2421 = vmatprep.subr.mxu0 0.0
  %2422 = vmatpush1.msra.mxu0 %v2400
  %2423 = vmatprep.subr.mxu0 0.0
  %2424 = vmatpush1.msra.mxu0 %v2399
  %2425 = vmatprep.subr.mxu0 0.0
  %2426 = vmatpush1.msra.mxu0 %v2398
  %2427 = vmatprep.subr.mxu0 0.0
  %2428 = vmatpush1.msra.mxu0 %v2397
  %2429 = vmatprep.subr.mxu0 0.0
  %2430 = vmatpush1.msra.mxu0 %v2396
  %2431 = vmatprep.subr.mxu0 0.0
  %2432 = vmatpush1.msra.mxu0 %v2395
  %2433 = vmatprep.subr.mxu0 0.0
  %2434 = vmatpush1.msra.mxu0 %v2394
  %2435 = vmatprep.subr.mxu0 0.0
  %2436 = vmatpush1.msra.mxu0 %v2393
  %2437 = vmatprep.subr.mxu0 0.0
  %2438 = vmatpush1.msra.mxu0 %v2392
  %2439 = vmatprep.subr.mxu0 0.0
  %2440 = vmatpush1.msra.mxu0 %v2391
  %2441 = vmatprep.subr.mxu0 0.0
  %2442 = vmatpush1.msra.mxu0 %v2390
  %2443 = vmatprep.subr.mxu0 0.0
  %2444 = vmatpush1.msra.mxu0 %v2389
  %2445 = vmatprep.subr.mxu0 0.0
  %2446 = vmatpush1.msra.mxu0 %v2388
  %2447 = vmatprep.subr.mxu0 0.0
  %2448 = vmatpush1.msra.mxu0 %v2387
  %2449 = vmatprep.subr.mxu0 0.0
  %2450 = vmatpush1.msra.mxu0 %v2386
  %2451 = vmatprep.subr.mxu0 0.0
  %2452 = vmatpush1.msra.mxu0 %v2385
  %2453 = vmatprep.subr.mxu0 0.0
  %2454 = vmatpush2.msra.mxu0 0.0
  %2455 = vmatprep.subr.mxu0 0.0
  %2456 = vmatpush2.msra.mxu0 0.0
  %2457 = vmatprep.subr.mxu0 0.0
  %2458 = vmatpush2.msra.mxu0 0.0
  %2459 = vmatprep.subr.mxu0 0.0
  %2460 = vmatpush2.msra.mxu0 0.0
  %2461 = vmatprep.subr.mxu0 0.0
  %2462 = vmatpush2.msra.mxu0 0.0
  %2463 = vmatprep.subr.mxu0 0.0
  %2464 = vmatpush2.msra.mxu0 0.0
  %2465 = vmatprep.subr.mxu0 0.0
  %2466 = vmatpush2.msra.mxu0 0.0
  %2467 = vmatprep.subr.mxu0 0.0
  %2468 = vmatpush2.msra.mxu0 0.0
  %2469 = vmatprep.subr.mxu0 0.0
  %2470 = vmatpush2.msra.mxu0 0.0
  %2471 = vmatprep.subr.mxu0 0.0
  %2472 = vmatpush2.msra.mxu0 0.0
  %2473 = vmatprep.subr.mxu0 0.0
  %2474 = vmatpush2.msra.mxu0 0.0
  %2475 = vmatprep.subr.mxu0 0.0
  %2476 = vmatpush2.msra.mxu0 0.0
  %2477 = vmatprep.subr.mxu0 0.0
  %2478 = vmatpush2.msra.mxu0 0.0
  %2479 = vmatprep.subr.mxu0 0.0
  %2480 = vmatpush2.msra.mxu0 0.0
  %2481 = vmatprep.subr.mxu0 0.0
  %2482 = vmatpush2.msra.mxu0 %v2402
  %2483 = vmatprep.subr.mxu0 0.0
  %2484 = vmatpush2.msra.mxu0 %v2401
  %2485 = vmatprep.mubr.f32.mxu0 %v2416
  %2486 = vmatmul.mubr.f32.gmra.mxu0 %v2381
  %v2487 = vpop.f32.mrf.mxu0
  %v2488 = vadd.f32 %v2408, %v2487
  %v2489 = vpop.f32.mrf.mxu0
  %2490 = vmatprep.mubr.f32.mxu0 %v2419
  %2491 = vmatmul.mubr.f32.gmra.mxu0 %v2383
  %v2492 = vpop.f32.mrf.mxu0
  %v2493 = vadd.f32 %v2413, %v2492
  %v2494 = vpop.f32.mrf.mxu0
  %2495 = vdwg.mxu0
  %v2496 = vmax.f32 %v2488, 0.0
  %v2497 = vmax.f32 %v2493, 0.0
  %v2498 = vld [vmem:[%s14] sm:$0xff]
  %v2499 = vld [vmem:[%s14 + $0x8] sm:$0xff]
  %v2500 = vld [vmem:[%s14 + $0x10] sm:$0xff]
  %v2501 = vld [vmem:[%s14 + $0x18] sm:$0xff]
  %v2502 = vld [vmem:[%s14 + $0x20] sm:$0xff]
  %v2503 = vld [vmem:[%s14 + $0x28] sm:$0xff]
  %v2504 = vld [vmem:[%s14 + $0x30] sm:$0xff]
  %v2505 = vld [vmem:[%s14 + $0x38] sm:$0xff]
  %v2506 = vld [vmem:[%s14 + $0x40] sm:$0xff]
  %v2508 = vsel %vm77, %v2496, 0
  %v2511 = vsel %vm77, %v2497, 0
  %2513 = vmatprep.subr.mxu0 0.0
  %2514 = vmatpush1.msra.mxu0 0.0
  %2515 = vmatprep.subr.mxu0 0.0
  %2516 = vmatpush1.msra.mxu0 0.0
  %2517 = vmatprep.subr.mxu0 0.0
  %2518 = vmatpush1.msra.mxu0 0.0
  %2519 = vmatprep.subr.mxu0 0.0
  %2520 = vmatpush1.msra.mxu0 0.0
  %2521 = vmatprep.subr.mxu0 0.0
  %2522 = vmatpush1.msra.mxu0 0.0
  %2523 = vmatprep.subr.mxu0 0.0
  %2524 = vmatpush1.msra.mxu0 0.0
  %2525 = vmatprep.subr.mxu0 0.0
  %2526 = vmatpush1.msra.mxu0 0.0
  %2527 = vmatprep.subr.mxu0 0.0
  %2528 = vmatpush1.msra.mxu0 %v2506
  %2529 = vmatprep.subr.mxu0 0.0
  %2530 = vmatpush1.msra.mxu0 %v2505
  %2531 = vmatprep.subr.mxu0 0.0
  %2532 = vmatpush1.msra.mxu0 %v2504
  %2533 = vmatprep.subr.mxu0 0.0
  %2534 = vmatpush1.msra.mxu0 %v2503
  %2535 = vmatprep.subr.mxu0 0.0
  %2536 = vmatpush1.msra.mxu0 %v2502
  %2537 = vmatprep.subr.mxu0 0.0
  %2538 = vmatpush1.msra.mxu0 %v2501
  %2539 = vmatprep.subr.mxu0 0.0
  %2540 = vmatpush1.msra.mxu0 %v2500
  %2541 = vmatprep.subr.mxu0 0.0
  %2542 = vmatpush1.msra.mxu0 %v2499
  %2543 = vmatprep.subr.mxu0 0.0
  %2544 = vmatpush1.msra.mxu0 %v2498
  %2545 = vmatprep.subr.mxu0 0.0
  %2546 = vmatpush2.msra.mxu0 0.0
  %2547 = vmatprep.subr.mxu0 0.0
  %2548 = vmatpush2.msra.mxu0 0.0
  %2549 = vmatprep.subr.mxu0 0.0
  %2550 = vmatpush2.msra.mxu0 0.0
  %2551 = vmatprep.subr.mxu0 0.0
  %2552 = vmatpush2.msra.mxu0 0.0
  %2553 = vmatprep.subr.mxu0 0.0
  %2554 = vmatpush2.msra.mxu0 0.0
  %2555 = vmatprep.subr.mxu0 0.0
  %2556 = vmatpush2.msra.mxu0 0.0
  %2557 = vmatprep.subr.mxu0 0.0
  %2558 = vmatpush2.msra.mxu0 0.0
  %2559 = vmatprep.subr.mxu0 0.0
  %2560 = vmatpush2.msra.mxu0 0.0
  %2561 = vmatprep.subr.mxu0 0.0
  %2562 = vmatpush2.msra.mxu0 0.0
  %2563 = vmatprep.subr.mxu0 0.0
  %2564 = vmatpush2.msra.mxu0 0.0
  %2565 = vmatprep.subr.mxu0 0.0
  %2566 = vmatpush2.msra.mxu0 0.0
  %2567 = vmatprep.subr.mxu0 0.0
  %2568 = vmatpush2.msra.mxu0 0.0
  %2569 = vmatprep.subr.mxu0 0.0
  %2570 = vmatpush2.msra.mxu0 0.0
  %2571 = vmatprep.subr.mxu0 0.0
  %2572 = vmatpush2.msra.mxu0 0.0
  %2573 = vmatprep.subr.mxu0 0.0
  %2574 = vmatpush2.msra.mxu0 0.0
  %2575 = vmatprep.subr.mxu0 0.0
  %2576 = vmatpush2.msra.mxu0 0.0
  %2577 = vmatprep.mubr.f32.mxu0 0.0
  %2578 = vmatmul.mubr.f32.gmra.mxu0 %v2508
  %v2579 = vpop.f32.mrf.mxu0
  %v2580 = vadd.f32 0.0, %v2579
  %v2581 = vpop.f32.mrf.mxu0
  %2582 = vmatprep.mubr.f32.mxu0 0.0
  %2583 = vmatmul.mubr.f32.gmra.mxu0 %v2511
  %v2584 = vpop.f32.mrf.mxu0
  %v2585 = vadd.f32 0.0, %v2584
  %v2586 = vpop.f32.mrf.mxu0
  %2587 = vdwg.mxu0
  %2588 = vst.msk [vmem:[%s21] sm:$0xff] %vm522, %v2580
  %2589 = vst.msk [vmem:[%s21 + $0x8] sm:$0xff] %vm522, %v2585
  %v2590 = vld [vmem:[%s15] sm:$0xff]
  %v2591 = vld [vmem:[%s15 + $0x8] sm:$0xff]
  %v2592 = vld [vmem:[%s15 + $0x10] sm:$0xff]
  %v2593 = vld [vmem:[%s15 + $0x18] sm:$0xff]
  %v2594 = vld [vmem:[%s15 + $0x20] sm:$0xff]
  %v2595 = vld [vmem:[%s15 + $0x28] sm:$0xff]
  %v2596 = vld [vmem:[%s15 + $0x30] sm:$0xff]
  %v2597 = vld [vmem:[%s15 + $0x38] sm:$0xff]
  %v2598 = vld [vmem:[%s15 + $0x40] sm:$0xff]
  %v2599 = vld [vmem:[%s15 + $0x48] sm:$0xff]
  %v2600 = vld [vmem:[%s15 + $0x50] sm:$0xff]
  %v2601 = vld [vmem:[%s15 + $0x58] sm:$0xff]
  %v2602 = vld [vmem:[%s15 + $0x60] sm:$0xff]
  %v2603 = vld [vmem:[%s15 + $0x68] sm:$0xff]
  %v2604 = vld [vmem:[%s15 + $0x70] sm:$0xff]
  %v2605 = vld [vmem:[%s15 + $0x78] sm:$0xff]
  %v2606 = vld [vmem:[%s15 + $0x80] sm:$0xff]
  %v2607 = vld [vmem:[%s15 + $0x88] sm:$0xff]
  %v2608 = vld [vmem:[%s15 + $0x90] sm:$0xff]
  %v2609 = vld [vmem:[%s15 + $0x98] sm:$0xff]
  %v2610 = vld [vmem:[%s15 + $0xa0] sm:$0xff]
  %v2611 = vld [vmem:[%s15 + $0xa8] sm:$0xff]
  %v2612 = vld [vmem:[%s15 + $0xb0] sm:$0xff]
  %v2613 = vld [vmem:[%s15 + $0xb8] sm:$0xff]
  %v2614 = vld [vmem:[%s15 + $0xc0] sm:$0xff]
  %v2615 = vld [vmem:[%s15 + $0xc8] sm:$0xff]
  %v2616 = vld [vmem:[%s15 + $0xd0] sm:$0xff]
  %v2617 = vld [vmem:[%s15 + $0xd8] sm:$0xff]
  %v2618 = vld [vmem:[%s15 + $0xe0] sm:$0xff]
  %v2619 = vld [vmem:[%s15 + $0xe8] sm:$0xff]
  %v2620 = vld [vmem:[%s15 + $0xf0] sm:$0xff]
  %v2621 = vld [vmem:[%s15 + $0xf8] sm:$0xff]
  %v2623 = vsel %vm1878, %v2590, 0
  %v2626 = vsel %vm1878, %v2591, 0
  %v2629 = vsel %vm1878, %v2592, 0
  %v2632 = vsel %vm1878, %v2593, 0
  %v2635 = vsel %vm1878, %v2594, 0
  %v2638 = vsel %vm1878, %v2595, 0
  %v2641 = vsel %vm1878, %v2596, 0
  %v2644 = vsel %vm1878, %v2597, 0
  %v2647 = vsel %vm1878, %v2598, 0
  %v2650 = vsel %vm1878, %v2599, 0
  %v2653 = vsel %vm1878, %v2600, 0
  %v2656 = vsel %vm1878, %v2601, 0
  %v2659 = vsel %vm1878, %v2602, 0
  %v2662 = vsel %vm1878, %v2603, 0
  %v2665 = vsel %vm1878, %v2604, 0
  %v2668 = vsel %vm1878, %v2605, 0
  %v2671 = vsel %vm1878, %v2606, 0
  %v2674 = vsel %vm1878, %v2607, 0
  %v2677 = vsel %vm1878, %v2608, 0
  %v2680 = vsel %vm1878, %v2609, 0
  %v2683 = vsel %vm1878, %v2610, 0
  %v2686 = vsel %vm1878, %v2611, 0
  %v2689 = vsel %vm1878, %v2612, 0
  %v2692 = vsel %vm1878, %v2613, 0
  %v2695 = vsel %vm1878, %v2614, 0
  %v2698 = vsel %vm1878, %v2615, 0
  %v2701 = vsel %vm1878, %v2616, 0
  %v2704 = vsel %vm1878, %v2617, 0
  %v2707 = vsel %vm1878, %v2618, 0
  %v2710 = vsel %vm1878, %v2619, 0
  %v2713 = vsel %vm1878, %v2620, 0
  %v2716 = vsel %vm1878, %v2621, 0
  %2718 = vmatprep.subr.mxu0 0.0
  %2719 = vmatpush1.msra.mxu0 0.0
  %2720 = vmatprep.subr.mxu0 0.0
  %2721 = vmatpush1.msra.mxu0 0.0
  %2722 = vmatprep.subr.mxu0 0.0
  %2723 = vmatpush1.msra.mxu0 0.0
  %2724 = vmatprep.subr.mxu0 0.0
  %2725 = vmatpush1.msra.mxu0 0.0
  %2726 = vmatprep.subr.mxu0 0.0
  %2727 = vmatpush1.msra.mxu0 0.0
  %2728 = vmatprep.subr.mxu0 0.0
  %2729 = vmatpush1.msra.mxu0 0.0
  %2730 = vmatprep.subr.mxu0 0.0
  %2731 = vmatpush1.msra.mxu0 0.0
  %2732 = vmatprep.subr.mxu0 0.0
  %2733 = vmatpush1.msra.mxu0 0.0
  %2734 = vmatprep.subr.mxu0 0.0
  %2735 = vmatpush1.msra.mxu0 0.0
  %2736 = vmatprep.subr.mxu0 0.0
  %2737 = vmatpush1.msra.mxu0 0.0
  %2738 = vmatprep.subr.mxu0 0.0
  %2739 = vmatpush1.msra.mxu0 0.0
  %2740 = vmatprep.subr.mxu0 0.0
  %2741 = vmatpush1.msra.mxu0 0.0
  %2742 = vmatprep.subr.mxu0 0.0
  %2743 = vmatpush1.msra.mxu0 0.0
  %2744 = vmatprep.subr.mxu0 0.0
  %2745 = vmatpush1.msra.mxu0 0.0
  %2746 = vmatprep.subr.mxu0 0.0
  %2747 = vmatpush1.msra.mxu0 %v2585
  %2748 = vmatprep.subr.mxu0 0.0
  %2749 = vmatpush1.msra.mxu0 %v2580
  %2750 = vmatprep.subr.mxu0 0.0
  %2751 = vmatpush2.msra.mxu0 0.0
  %2752 = vmatprep.subr.mxu0 0.0
  %2753 = vmatpush2.msra.mxu0 0.0
  %2754 = vmatprep.subr.mxu0 0.0
  %2755 = vmatpush2.msra.mxu0 0.0
  %2756 = vmatprep.subr.mxu0 0.0
  %2757 = vmatpush2.msra.mxu0 0.0
  %2758 = vmatprep.subr.mxu0 0.0
  %2759 = vmatpush2.msra.mxu0 0.0
  %2760 = vmatprep.subr.mxu0 0.0
  %2761 = vmatpush2.msra.mxu0 0.0
  %2762 = vmatprep.subr.mxu0 0.0
  %2763 = vmatpush2.msra.mxu0 0.0
  %2764 = vmatprep.subr.mxu0 0.0
  %2765 = vmatpush2.msra.mxu0 0.0
  %2766 = vmatprep.subr.mxu0 0.0
  %2767 = vmatpush2.msra.mxu0 0.0
  %2768 = vmatprep.subr.mxu0 0.0
  %2769 = vmatpush2.msra.mxu0 0.0
  %2770 = vmatprep.subr.mxu0 0.0
  %2771 = vmatpush2.msra.mxu0 0.0
  %2772 = vmatprep.subr.mxu0 0.0
  %2773 = vmatpush2.msra.mxu0 0.0
  %2774 = vmatprep.subr.mxu0 0.0
  %2775 = vmatpush2.msra.mxu0 0.0
  %2776 = vmatprep.subr.mxu0 0.0
  %2777 = vmatpush2.msra.mxu0 0.0
  %2778 = vmatprep.subr.mxu0 0.0
  %2779 = vmatpush2.msra.mxu0 0.0
  %2780 = vmatprep.subr.mxu0 0.0
  %2781 = vmatpush2.msra.mxu0 0.0
  %2782 = vmatprep.mubr.f32.mxu0 0.0
  %2783 = vmatmul.mubr.f32.gmra.mxu0 %v2623
  %v2784 = vpop.f32.mrf.mxu0
  %v2785 = vadd.f32 0.0, %v2784
  %v2786 = vpop.f32.mrf.mxu0
  %2787 = vmatprep.mubr.f32.mxu0 0.0
  %2788 = vmatmul.mubr.f32.gmra.mxu0 %v2626
  %v2789 = vpop.f32.mrf.mxu0
  %v2790 = vadd.f32 0.0, %v2789
  %v2791 = vpop.f32.mrf.mxu0
  %2792 = vmatprep.mubr.f32.mxu0 0.0
  %2793 = vmatmul.mubr.f32.gmra.mxu0 %v2629
  %v2794 = vpop.f32.mrf.mxu0
  %v2795 = vadd.f32 0.0, %v2794
  %v2796 = vpop.f32.mrf.mxu0
  %2797 = vmatprep.mubr.f32.mxu0 0.0
  %2798 = vmatmul.mubr.f32.gmra.mxu0 %v2632
  %v2799 = vpop.f32.mrf.mxu0
  %v2800 = vadd.f32 0.0, %v2799
  %v2801 = vpop.f32.mrf.mxu0
  %2802 = vmatprep.mubr.f32.mxu0 0.0
  %2803 = vmatmul.mubr.f32.gmra.mxu0 %v2635
  %v2804 = vpop.f32.mrf.mxu0
  %v2805 = vadd.f32 0.0, %v2804
  %v2806 = vpop.f32.mrf.mxu0
  %2807 = vmatprep.mubr.f32.mxu0 0.0
  %2808 = vmatmul.mubr.f32.gmra.mxu0 %v2638
  %v2809 = vpop.f32.mrf.mxu0
  %v2810 = vadd.f32 0.0, %v2809
  %v2811 = vpop.f32.mrf.mxu0
  %2812 = vmatprep.mubr.f32.mxu0 0.0
  %2813 = vmatmul.mubr.f32.gmra.mxu0 %v2641
  %v2814 = vpop.f32.mrf.mxu0
  %v2815 = vadd.f32 0.0, %v2814
  %v2816 = vpop.f32.mrf.mxu0
  %2817 = vmatprep.mubr.f32.mxu0 0.0
  %2818 = vmatmul.mubr.f32.gmra.mxu0 %v2644
  %v2819 = vpop.f32.mrf.mxu0
  %v2820 = vadd.f32 0.0, %v2819
  %v2821 = vpop.f32.mrf.mxu0
  %2822 = vmatprep.mubr.f32.mxu0 0.0
  %2823 = vmatmul.mubr.f32.gmra.mxu0 %v2647
  %v2824 = vpop.f32.mrf.mxu0
  %v2825 = vadd.f32 0.0, %v2824
  %v2826 = vpop.f32.mrf.mxu0
  %2827 = vmatprep.mubr.f32.mxu0 0.0
  %2828 = vmatmul.mubr.f32.gmra.mxu0 %v2650
  %v2829 = vpop.f32.mrf.mxu0
  %v2830 = vadd.f32 0.0, %v2829
  %v2831 = vpop.f32.mrf.mxu0
  %2832 = vmatprep.mubr.f32.mxu0 0.0
  %2833 = vmatmul.mubr.f32.gmra.mxu0 %v2653
  %v2834 = vpop.f32.mrf.mxu0
  %v2835 = vadd.f32 0.0, %v2834
  %v2836 = vpop.f32.mrf.mxu0
  %2837 = vmatprep.mubr.f32.mxu0 0.0
  %2838 = vmatmul.mubr.f32.gmra.mxu0 %v2656
  %v2839 = vpop.f32.mrf.mxu0
  %v2840 = vadd.f32 0.0, %v2839
  %v2841 = vpop.f32.mrf.mxu0
  %2842 = vmatprep.mubr.f32.mxu0 0.0
  %2843 = vmatmul.mubr.f32.gmra.mxu0 %v2659
  %v2844 = vpop.f32.mrf.mxu0
  %v2845 = vadd.f32 0.0, %v2844
  %v2846 = vpop.f32.mrf.mxu0
  %2847 = vmatprep.mubr.f32.mxu0 0.0
  %2848 = vmatmul.mubr.f32.gmra.mxu0 %v2662
  %v2849 = vpop.f32.mrf.mxu0
  %v2850 = vadd.f32 0.0, %v2849
  %v2851 = vpop.f32.mrf.mxu0
  %2852 = vmatprep.mubr.f32.mxu0 0.0
  %2853 = vmatmul.mubr.f32.gmra.mxu0 %v2665
  %v2854 = vpop.f32.mrf.mxu0
  %v2855 = vadd.f32 0.0, %v2854
  %v2856 = vpop.f32.mrf.mxu0
  %2857 = vmatprep.mubr.f32.mxu0 0.0
  %2858 = vmatmul.mubr.f32.gmra.mxu0 %v2668
  %v2859 = vpop.f32.mrf.mxu0
  %v2860 = vadd.f32 0.0, %v2859
  %v2861 = vpop.f32.mrf.mxu0
  %2862 = vmatprep.mubr.f32.mxu0 0.0
  %2863 = vmatmul.mubr.f32.gmra.mxu0 %v2671
  %v2864 = vpop.f32.mrf.mxu0
  %v2865 = vadd.f32 0.0, %v2864
  %v2866 = vpop.f32.mrf.mxu0
  %2867 = vmatprep.mubr.f32.mxu0 0.0
  %2868 = vmatmul.mubr.f32.gmra.mxu0 %v2674
  %v2869 = vpop.f32.mrf.mxu0
  %v2870 = vadd.f32 0.0, %v2869
  %v2871 = vpop.f32.mrf.mxu0
  %2872 = vmatprep.mubr.f32.mxu0 0.0
  %2873 = vmatmul.mubr.f32.gmra.mxu0 %v2677
  %v2874 = vpop.f32.mrf.mxu0
  %v2875 = vadd.f32 0.0, %v2874
  %v2876 = vpop.f32.mrf.mxu0
  %2877 = vmatprep.mubr.f32.mxu0 0.0
  %2878 = vmatmul.mubr.f32.gmra.mxu0 %v2680
  %v2879 = vpop.f32.mrf.mxu0
  %v2880 = vadd.f32 0.0, %v2879
  %v2881 = vpop.f32.mrf.mxu0
  %2882 = vmatprep.mubr.f32.mxu0 0.0
  %2883 = vmatmul.mubr.f32.gmra.mxu0 %v2683
  %v2884 = vpop.f32.mrf.mxu0
  %v2885 = vadd.f32 0.0, %v2884
  %v2886 = vpop.f32.mrf.mxu0
  %2887 = vmatprep.mubr.f32.mxu0 0.0
  %2888 = vmatmul.mubr.f32.gmra.mxu0 %v2686
  %v2889 = vpop.f32.mrf.mxu0
  %v2890 = vadd.f32 0.0, %v2889
  %v2891 = vpop.f32.mrf.mxu0
  %2892 = vmatprep.mubr.f32.mxu0 0.0
  %2893 = vmatmul.mubr.f32.gmra.mxu0 %v2689
  %v2894 = vpop.f32.mrf.mxu0
  %v2895 = vadd.f32 0.0, %v2894
  %v2896 = vpop.f32.mrf.mxu0
  %2897 = vmatprep.mubr.f32.mxu0 0.0
  %2898 = vmatmul.mubr.f32.gmra.mxu0 %v2692
  %v2899 = vpop.f32.mrf.mxu0
  %v2900 = vadd.f32 0.0, %v2899
  %v2901 = vpop.f32.mrf.mxu0
  %2902 = vmatprep.mubr.f32.mxu0 0.0
  %2903 = vmatmul.mubr.f32.gmra.mxu0 %v2695
  %v2904 = vpop.f32.mrf.mxu0
  %v2905 = vadd.f32 0.0, %v2904
  %v2906 = vpop.f32.mrf.mxu0
  %2907 = vmatprep.mubr.f32.mxu0 0.0
  %2908 = vmatmul.mubr.f32.gmra.mxu0 %v2698
  %v2909 = vpop.f32.mrf.mxu0
  %v2910 = vadd.f32 0.0, %v2909
  %v2911 = vpop.f32.mrf.mxu0
  %2912 = vmatprep.mubr.f32.mxu0 0.0
  %2913 = vmatmul.mubr.f32.gmra.mxu0 %v2701
  %v2914 = vpop.f32.mrf.mxu0
  %v2915 = vadd.f32 0.0, %v2914
  %v2916 = vpop.f32.mrf.mxu0
  %2917 = vmatprep.mubr.f32.mxu0 0.0
  %2918 = vmatmul.mubr.f32.gmra.mxu0 %v2704
  %v2919 = vpop.f32.mrf.mxu0
  %v2920 = vadd.f32 0.0, %v2919
  %v2921 = vpop.f32.mrf.mxu0
  %2922 = vmatprep.mubr.f32.mxu0 0.0
  %2923 = vmatmul.mubr.f32.gmra.mxu0 %v2707
  %v2924 = vpop.f32.mrf.mxu0
  %v2925 = vadd.f32 0.0, %v2924
  %v2926 = vpop.f32.mrf.mxu0
  %2927 = vmatprep.mubr.f32.mxu0 0.0
  %2928 = vmatmul.mubr.f32.gmra.mxu0 %v2710
  %v2929 = vpop.f32.mrf.mxu0
  %v2930 = vadd.f32 0.0, %v2929
  %v2931 = vpop.f32.mrf.mxu0
  %2932 = vmatprep.mubr.f32.mxu0 0.0
  %2933 = vmatmul.mubr.f32.gmra.mxu0 %v2713
  %v2934 = vpop.f32.mrf.mxu0
  %v2935 = vadd.f32 0.0, %v2934
  %v2936 = vpop.f32.mrf.mxu0
  %2937 = vmatprep.mubr.f32.mxu0 0.0
  %2938 = vmatmul.mubr.f32.gmra.mxu0 %v2716
  %v2939 = vpop.f32.mrf.mxu0
  %v2940 = vadd.f32 0.0, %v2939
  %v2941 = vpop.f32.mrf.mxu0
  %2942 = vdwg.mxu0
  %v2943 = vld [vmem:[%s16] sm:$0xff]
  %v2944 = vld [vmem:[%s16 + $0x8] sm:$0xff]
  %v2945 = vld [vmem:[%s16 + $0x10] sm:$0xff]
  %v2946 = vld [vmem:[%s16 + $0x18] sm:$0xff]
  %v2947 = vld [vmem:[%s16 + $0x20] sm:$0xff]
  %v2948 = vld [vmem:[%s16 + $0x28] sm:$0xff]
  %v2949 = vld [vmem:[%s16 + $0x30] sm:$0xff]
  %v2950 = vld [vmem:[%s16 + $0x38] sm:$0xff]
  %v2951 = vld [vmem:[%s16 + $0x40] sm:$0xff]
  %v2952 = vld [vmem:[%s16 + $0x48] sm:$0xff]
  %v2953 = vld [vmem:[%s16 + $0x50] sm:$0xff]
  %v2954 = vld [vmem:[%s16 + $0x58] sm:$0xff]
  %v2955 = vld [vmem:[%s16 + $0x60] sm:$0xff]
  %v2956 = vld [vmem:[%s16 + $0x68] sm:$0xff]
  %v2957 = vld [vmem:[%s16 + $0x70] sm:$0xff]
  %v2958 = vld [vmem:[%s16 + $0x78] sm:$0xff]
  %v2959 = vld [vmem:[%s16 + $0x80] sm:$0xff]
  %v2960 = vld [vmem:[%s16 + $0x88] sm:$0xff]
  %v2961 = vld [vmem:[%s16 + $0x90] sm:$0xff]
  %v2962 = vld [vmem:[%s16 + $0x98] sm:$0xff]
  %v2963 = vld [vmem:[%s16 + $0xa0] sm:$0xff]
  %v2964 = vld [vmem:[%s16 + $0xa8] sm:$0xff]
  %v2965 = vld [vmem:[%s16 + $0xb0] sm:$0xff]
  %v2966 = vld [vmem:[%s16 + $0xb8] sm:$0xff]
  %v2967 = vld [vmem:[%s16 + $0xc0] sm:$0xff]
  %v2968 = vld [vmem:[%s16 + $0xc8] sm:$0xff]
  %v2969 = vld [vmem:[%s16 + $0xd0] sm:$0xff]
  %v2970 = vld [vmem:[%s16 + $0xd8] sm:$0xff]
  %v2971 = vld [vmem:[%s16 + $0xe0] sm:$0xff]
  %v2972 = vld [vmem:[%s16 + $0xe8] sm:$0xff]
  %v2973 = vld [vmem:[%s16 + $0xf0] sm:$0xff]
  %v2974 = vld [vmem:[%s16 + $0xf8] sm:$0xff]
  %v2975 = vmul.f32 %v2785, %v2943
  %v2976 = vmul.f32 %v2790, %v2944
  %v2977 = vmul.f32 %v2795, %v2945
  %v2978 = vmul.f32 %v2800, %v2946
  %v2979 = vmul.f32 %v2805, %v2947
  %v2980 = vmul.f32 %v2810, %v2948
  %v2981 = vmul.f32 %v2815, %v2949
  %v2982 = vmul.f32 %v2820, %v2950
  %v2983 = vmul.f32 %v2825, %v2951
  %v2984 = vmul.f32 %v2830, %v2952
  %v2985 = vmul.f32 %v2835, %v2953
  %v2986 = vmul.f32 %v2840, %v2954
  %v2987 = vmul.f32 %v2845, %v2955
  %v2988 = vmul.f32 %v2850, %v2956
  %v2989 = vmul.f32 %v2855, %v2957
  %v2990 = vmul.f32 %v2860, %v2958
  %v2991 = vmul.f32 %v2865, %v2959
  %v2992 = vmul.f32 %v2870, %v2960
  %v2993 = vmul.f32 %v2875, %v2961
  %v2994 = vmul.f32 %v2880, %v2962
  %v2995 = vmul.f32 %v2885, %v2963
  %v2996 = vmul.f32 %v2890, %v2964
  %v2997 = vmul.f32 %v2895, %v2965
  %v2998 = vmul.f32 %v2900, %v2966
  %v2999 = vmul.f32 %v2905, %v2967
  %v3000 = vmul.f32 %v2910, %v2968
  %v3001 = vmul.f32 %v2915, %v2969
  %v3002 = vmul.f32 %v2920, %v2970
  %v3003 = vmul.f32 %v2925, %v2971
  %v3004 = vmul.f32 %v2930, %v2972
  %v3005 = vmul.f32 %v2935, %v2973
  %v3006 = vmul.f32 %v2940, %v2974
  %v3007 = vld [vmem:[%s17] sm:$0xff]
  %v3008 = vld [vmem:[%s17 + $0x8] sm:$0xff]
  %v3009 = vld [vmem:[%s17 + $0x10] sm:$0xff]
  %v3010 = vld [vmem:[%s17 + $0x18] sm:$0xff]
  %v3012 = vsel %vm522, %v2975, 0
  %v3015 = vsel %vm522, %v2976, 0
  %v3018 = vsel %vm522, %v2977, 0
  %v3021 = vsel %vm522, %v2978, 0
  %v3024 = vsel %vm522, %v2979, 0
  %v3027 = vsel %vm522, %v2980, 0
  %v3030 = vsel %vm522, %v2981, 0
  %v3033 = vsel %vm522, %v2982, 0
  %v3036 = vsel %vm522, %v2983, 0
  %v3039 = vsel %vm522, %v2984, 0
  %v3042 = vsel %vm522, %v2985, 0
  %v3045 = vsel %vm522, %v2986, 0
  %v3048 = vsel %vm522, %v2987, 0
  %v3051 = vsel %vm522, %v2988, 0
  %v3054 = vsel %vm522, %v2989, 0
  %v3057 = vsel %vm522, %v2990, 0
  %v3060 = vsel %vm522, %v2991, 0
  %v3063 = vsel %vm522, %v2992, 0
  %v3066 = vsel %vm522, %v2993, 0
  %v3069 = vsel %vm522, %v2994, 0
  %v3072 = vsel %vm522, %v2995, 0
  %v3075 = vsel %vm522, %v2996, 0
  %v3078 = vsel %vm522, %v2997, 0
  %v3081 = vsel %vm522, %v2998, 0
  %v3084 = vsel %vm522, %v2999, 0
  %v3087 = vsel %vm522, %v3000, 0
  %v3090 = vsel %vm522, %v3001, 0
  %v3093 = vsel %vm522, %v3002, 0
  %v3096 = vsel %vm522, %v3003, 0
  %v3099 = vsel %vm522, %v3004, 0
  %v3102 = vsel %vm522, %v3005, 0
  %v3105 = vsel %vm522, %v3006, 0
  %3107 = vmatprep.subr.mxu0 0.0
  %3108 = vmatpush1.msra.mxu0 0.0
  %3109 = vmatprep.subr.mxu0 0.0
  %3110 = vmatpush1.msra.mxu0 0.0
  %3111 = vmatprep.subr.mxu0 0.0
  %3112 = vmatpush1.msra.mxu0 0.0
  %3113 = vmatprep.subr.mxu0 0.0
  %3114 = vmatpush1.msra.mxu0 0.0
  %3115 = vmatprep.subr.mxu0 0.0
  %3116 = vmatpush1.msra.mxu0 0.0
  %3117 = vmatprep.subr.mxu0 0.0
  %3118 = vmatpush1.msra.mxu0 0.0
  %3119 = vmatprep.subr.mxu0 0.0
  %3120 = vmatpush1.msra.mxu0 0.0
  %3121 = vmatprep.subr.mxu0 0.0
  %3122 = vmatpush1.msra.mxu0 0.0
  %3123 = vmatprep.subr.mxu0 0.0
  %3124 = vmatpush1.msra.mxu0 0.0
  %3125 = vmatprep.subr.mxu0 0.0
  %3126 = vmatpush1.msra.mxu0 0.0
  %3127 = vmatprep.subr.mxu0 0.0
  %3128 = vmatpush1.msra.mxu0 0.0
  %3129 = vmatprep.subr.mxu0 0.0
  %3130 = vmatpush1.msra.mxu0 0.0
  %3131 = vmatprep.subr.mxu0 0.0
  %3132 = vmatpush1.msra.mxu0 %v3010
  %3133 = vmatprep.subr.mxu0 0.0
  %3134 = vmatpush1.msra.mxu0 %v3009
  %3135 = vmatprep.subr.mxu0 0.0
  %3136 = vmatpush1.msra.mxu0 %v3008
  %3137 = vmatprep.subr.mxu0 0.0
  %3138 = vmatpush1.msra.mxu0 %v3007
  %3139 = vmatprep.subr.mxu0 0.0
  %3140 = vmatpush2.msra.mxu0 0.0
  %3141 = vmatprep.subr.mxu0 0.0
  %3142 = vmatpush2.msra.mxu0 0.0
  %3143 = vmatprep.subr.mxu0 0.0
  %3144 = vmatpush2.msra.mxu0 0.0
  %3145 = vmatprep.subr.mxu0 0.0
  %3146 = vmatpush2.msra.mxu0 0.0
  %3147 = vmatprep.subr.mxu0 0.0
  %3148 = vmatpush2.msra.mxu0 0.0
  %3149 = vmatprep.subr.mxu0 0.0
  %3150 = vmatpush2.msra.mxu0 0.0
  %3151 = vmatprep.subr.mxu0 0.0
  %3152 = vmatpush2.msra.mxu0 0.0
  %3153 = vmatprep.subr.mxu0 0.0
  %3154 = vmatpush2.msra.mxu0 0.0
  %3155 = vmatprep.subr.mxu0 0.0
  %3156 = vmatpush2.msra.mxu0 0.0
  %3157 = vmatprep.subr.mxu0 0.0
  %3158 = vmatpush2.msra.mxu0 0.0
  %3159 = vmatprep.subr.mxu0 0.0
  %3160 = vmatpush2.msra.mxu0 0.0
  %3161 = vmatprep.subr.mxu0 0.0
  %3162 = vmatpush2.msra.mxu0 0.0
  %3163 = vmatprep.subr.mxu0 0.0
  %3164 = vmatpush2.msra.mxu0 0.0
  %3165 = vmatprep.subr.mxu0 0.0
  %3166 = vmatpush2.msra.mxu0 0.0
  %3167 = vmatprep.subr.mxu0 0.0
  %3168 = vmatpush2.msra.mxu0 0.0
  %3169 = vmatprep.subr.mxu0 0.0
  %3170 = vmatpush2.msra.mxu0 0.0
  %3171 = vmatprep.mubr.f32.mxu0 0.0
  %3172 = vmatmul.mubr.f32.gmra.mxu0 %v3012
  %v3173 = vpop.f32.mrf.mxu0
  %v3174 = vadd.f32 0.0, %v3173
  %v3175 = vpop.f32.mrf.mxu0
  %3176 = vmatprep.mubr.f32.mxu0 0.0
  %3177 = vmatmul.mubr.f32.gmra.mxu0 %v3015
  %v3178 = vpop.f32.mrf.mxu0
  %v3179 = vadd.f32 0.0, %v3178
  %v3180 = vpop.f32.mrf.mxu0
  %3181 = vmatprep.mubr.f32.mxu0 0.0
  %3182 = vmatmul.mubr.f32.gmra.mxu0 %v3018
  %v3183 = vpop.f32.mrf.mxu0
  %v3184 = vadd.f32 0.0, %v3183
  %v3185 = vpop.f32.mrf.mxu0
  %3186 = vmatprep.mubr.f32.mxu0 0.0
  %3187 = vmatmul.mubr.f32.gmra.mxu0 %v3021
  %v3188 = vpop.f32.mrf.mxu0
  %v3189 = vadd.f32 0.0, %v3188
  %v3190 = vpop.f32.mrf.mxu0
  %3191 = vmatprep.mubr.f32.mxu0 0.0
  %3192 = vmatmul.mubr.f32.gmra.mxu0 %v3024
  %v3193 = vpop.f32.mrf.mxu0
  %v3194 = vadd.f32 0.0, %v3193
  %v3195 = vpop.f32.mrf.mxu0
  %3196 = vmatprep.mubr.f32.mxu0 0.0
  %3197 = vmatmul.mubr.f32.gmra.mxu0 %v3027
  %v3198 = vpop.f32.mrf.mxu0
  %v3199 = vadd.f32 0.0, %v3198
  %v3200 = vpop.f32.mrf.mxu0
  %3201 = vmatprep.mubr.f32.mxu0 0.0
  %3202 = vmatmul.mubr.f32.gmra.mxu0 %v3030
  %v3203 = vpop.f32.mrf.mxu0
  %v3204 = vadd.f32 0.0, %v3203
  %v3205 = vpop.f32.mrf.mxu0
  %3206 = vmatprep.mubr.f32.mxu0 0.0
  %3207 = vmatmul.mubr.f32.gmra.mxu0 %v3033
  %v3208 = vpop.f32.mrf.mxu0
  %v3209 = vadd.f32 0.0, %v3208
  %v3210 = vpop.f32.mrf.mxu0
  %3211 = vmatprep.mubr.f32.mxu0 0.0
  %3212 = vmatmul.mubr.f32.gmra.mxu0 %v3036
  %v3213 = vpop.f32.mrf.mxu0
  %v3214 = vadd.f32 0.0, %v3213
  %v3215 = vpop.f32.mrf.mxu0
  %3216 = vmatprep.mubr.f32.mxu0 0.0
  %3217 = vmatmul.mubr.f32.gmra.mxu0 %v3039
  %v3218 = vpop.f32.mrf.mxu0
  %v3219 = vadd.f32 0.0, %v3218
  %v3220 = vpop.f32.mrf.mxu0
  %3221 = vmatprep.mubr.f32.mxu0 0.0
  %3222 = vmatmul.mubr.f32.gmra.mxu0 %v3042
  %v3223 = vpop.f32.mrf.mxu0
  %v3224 = vadd.f32 0.0, %v3223
  %v3225 = vpop.f32.mrf.mxu0
  %3226 = vmatprep.mubr.f32.mxu0 0.0
  %3227 = vmatmul.mubr.f32.gmra.mxu0 %v3045
  %v3228 = vpop.f32.mrf.mxu0
  %v3229 = vadd.f32 0.0, %v3228
  %v3230 = vpop.f32.mrf.mxu0
  %3231 = vmatprep.mubr.f32.mxu0 0.0
  %3232 = vmatmul.mubr.f32.gmra.mxu0 %v3048
  %v3233 = vpop.f32.mrf.mxu0
  %v3234 = vadd.f32 0.0, %v3233
  %v3235 = vpop.f32.mrf.mxu0
  %3236 = vmatprep.mubr.f32.mxu0 0.0
  %3237 = vmatmul.mubr.f32.gmra.mxu0 %v3051
  %v3238 = vpop.f32.mrf.mxu0
  %v3239 = vadd.f32 0.0, %v3238
  %v3240 = vpop.f32.mrf.mxu0
  %3241 = vmatprep.mubr.f32.mxu0 0.0
  %3242 = vmatmul.mubr.f32.gmra.mxu0 %v3054
  %v3243 = vpop.f32.mrf.mxu0
  %v3244 = vadd.f32 0.0, %v3243
  %v3245 = vpop.f32.mrf.mxu0
  %3246 = vmatprep.mubr.f32.mxu0 0.0
  %3247 = vmatmul.mubr.f32.gmra.mxu0 %v3057
  %v3248 = vpop.f32.mrf.mxu0
  %v3249 = vadd.f32 0.0, %v3248
  %v3250 = vpop.f32.mrf.mxu0
  %3251 = vmatprep.mubr.f32.mxu0 0.0
  %3252 = vmatmul.mubr.f32.gmra.mxu0 %v3060
  %v3253 = vpop.f32.mrf.mxu0
  %v3254 = vadd.f32 0.0, %v3253
  %v3255 = vpop.f32.mrf.mxu0
  %3256 = vmatprep.mubr.f32.mxu0 0.0
  %3257 = vmatmul.mubr.f32.gmra.mxu0 %v3063
  %v3258 = vpop.f32.mrf.mxu0
  %v3259 = vadd.f32 0.0, %v3258
  %v3260 = vpop.f32.mrf.mxu0
  %3261 = vmatprep.mubr.f32.mxu0 0.0
  %3262 = vmatmul.mubr.f32.gmra.mxu0 %v3066
  %v3263 = vpop.f32.mrf.mxu0
  %v3264 = vadd.f32 0.0, %v3263
  %v3265 = vpop.f32.mrf.mxu0
  %3266 = vmatprep.mubr.f32.mxu0 0.0
  %3267 = vmatmul.mubr.f32.gmra.mxu0 %v3069
  %v3268 = vpop.f32.mrf.mxu0
  %v3269 = vadd.f32 0.0, %v3268
  %v3270 = vpop.f32.mrf.mxu0
  %3271 = vmatprep.mubr.f32.mxu0 0.0
  %3272 = vmatmul.mubr.f32.gmra.mxu0 %v3072
  %v3273 = vpop.f32.mrf.mxu0
  %v3274 = vadd.f32 0.0, %v3273
  %v3275 = vpop.f32.mrf.mxu0
  %3276 = vmatprep.mubr.f32.mxu0 0.0
  %3277 = vmatmul.mubr.f32.gmra.mxu0 %v3075
  %v3278 = vpop.f32.mrf.mxu0
  %v3279 = vadd.f32 0.0, %v3278
  %v3280 = vpop.f32.mrf.mxu0
  %3281 = vmatprep.mubr.f32.mxu0 0.0
  %3282 = vmatmul.mubr.f32.gmra.mxu0 %v3078
  %v3283 = vpop.f32.mrf.mxu0
  %v3284 = vadd.f32 0.0, %v3283
  %v3285 = vpop.f32.mrf.mxu0
  %3286 = vmatprep.mubr.f32.mxu0 0.0
  %3287 = vmatmul.mubr.f32.gmra.mxu0 %v3081
  %v3288 = vpop.f32.mrf.mxu0
  %v3289 = vadd.f32 0.0, %v3288
  %v3290 = vpop.f32.mrf.mxu0
  %3291 = vmatprep.mubr.f32.mxu0 0.0
  %3292 = vmatmul.mubr.f32.gmra.mxu0 %v3084
  %v3293 = vpop.f32.mrf.mxu0
  %v3294 = vadd.f32 0.0, %v3293
  %v3295 = vpop.f32.mrf.mxu0
  %3296 = vmatprep.mubr.f32.mxu0 0.0
  %3297 = vmatmul.mubr.f32.gmra.mxu0 %v3087
  %v3298 = vpop.f32.mrf.mxu0
  %v3299 = vadd.f32 0.0, %v3298
  %v3300 = vpop.f32.mrf.mxu0
  %3301 = vmatprep.mubr.f32.mxu0 0.0
  %3302 = vmatmul.mubr.f32.gmra.mxu0 %v3090
  %v3303 = vpop.f32.mrf.mxu0
  %v3304 = vadd.f32 0.0, %v3303
  %v3305 = vpop.f32.mrf.mxu0
  %3306 = vmatprep.mubr.f32.mxu0 0.0
  %3307 = vmatmul.mubr.f32.gmra.mxu0 %v3093
  %v3308 = vpop.f32.mrf.mxu0
  %v3309 = vadd.f32 0.0, %v3308
  %v3310 = vpop.f32.mrf.mxu0
  %3311 = vmatprep.mubr.f32.mxu0 0.0
  %3312 = vmatmul.mubr.f32.gmra.mxu0 %v3096
  %v3313 = vpop.f32.mrf.mxu0
  %v3314 = vadd.f32 0.0, %v3313
  %v3315 = vpop.f32.mrf.mxu0
  %3316 = vmatprep.mubr.f32.mxu0 0.0
  %3317 = vmatmul.mubr.f32.gmra.mxu0 %v3099
  %v3318 = vpop.f32.mrf.mxu0
  %v3319 = vadd.f32 0.0, %v3318
  %v3320 = vpop.f32.mrf.mxu0
  %3321 = vmatprep.mubr.f32.mxu0 0.0
  %3322 = vmatmul.mubr.f32.gmra.mxu0 %v3102
  %v3323 = vpop.f32.mrf.mxu0
  %v3324 = vadd.f32 0.0, %v3323
  %v3325 = vpop.f32.mrf.mxu0
  %3326 = vmatprep.mubr.f32.mxu0 0.0
  %3327 = vmatmul.mubr.f32.gmra.mxu0 %v3105
  %v3328 = vpop.f32.mrf.mxu0
  %v3329 = vadd.f32 0.0, %v3328
  %v3330 = vpop.f32.mrf.mxu0
  %3331 = vdwg.mxu0
  %v3332 = vld [vmem:[%s18] sm:$0xff]
  %v3333 = vld [vmem:[%s18 + $0x8] sm:$0xff]
  %v3334 = vld [vmem:[%s18 + $0x10] sm:$0x3]
  %v3335 = vld [vmem:[%s18 + $0x18] sm:$0x3]
  %v3336 = vld [vmem:[%s19] sm:$0xff]
  %v3337 = vld [vmem:[%s19 + $0x8] sm:$0x3]
  %3339 = vset.pattern.permute.xlu0 0
  %3340 = vperm.xlu0 %3339, %v3336
  %v3341 = vpop.permute.xlu0 %3340
  %3344 = vset.pattern.permute.xlu0 0
  %3345 = vperm.xlu0 %3344, %v3337
  %v3346 = vpop.permute.xlu0 %3345
  %3348 = vmatprep.subr.mxu0 0.0
  %3349 = vmatpush1.msra.mxu0 %v3249
  %3350 = vmatprep.subr.mxu0 0.0
  %3351 = vmatpush1.msra.mxu0 %v3244
  %3352 = vmatprep.subr.mxu0 0.0
  %3353 = vmatpush1.msra.mxu0 %v3239
  %3354 = vmatprep.subr.mxu0 0.0
  %3355 = vmatpush1.msra.mxu0 %v3234
  %3356 = vmatprep.subr.mxu0 0.0
  %3357 = vmatpush1.msra.mxu0 %v3229
  %3358 = vmatprep.subr.mxu0 0.0
  %3359 = vmatpush1.msra.mxu0 %v3224
  %3360 = vmatprep.subr.mxu0 0.0
  %3361 = vmatpush1.msra.mxu0 %v3219
  %3362 = vmatprep.subr.mxu0 0.0
  %3363 = vmatpush1.msra.mxu0 %v3214
  %3364 = vmatprep.subr.mxu0 0.0
  %3365 = vmatpush1.msra.mxu0 %v3209
  %3366 = vmatprep.subr.mxu0 0.0
  %3367 = vmatpush1.msra.mxu0 %v3204
  %3368 = vmatprep.subr.mxu0 0.0
  %3369 = vmatpush1.msra.mxu0 %v3199
  %3370 = vmatprep.subr.mxu0 0.0
  %3371 = vmatpush1.msra.mxu0 %v3194
  %3372 = vmatprep.subr.mxu0 0.0
  %3373 = vmatpush1.msra.mxu0 %v3189
  %3374 = vmatprep.subr.mxu0 0.0
  %3375 = vmatpush1.msra.mxu0 %v3184
  %3376 = vmatprep.subr.mxu0 0.0
  %3377 = vmatpush1.msra.mxu0 %v3179
  %3378 = vmatprep.subr.mxu0 0.0
  %3379 = vmatpush1.msra.mxu0 %v3174
  %3380 = vmatprep.subr.mxu0 0.0
  %3381 = vmatpush2.msra.mxu0 %v3329
  %3382 = vmatprep.subr.mxu0 0.0
  %3383 = vmatpush2.msra.mxu0 %v3324
  %3384 = vmatprep.subr.mxu0 0.0
  %3385 = vmatpush2.msra.mxu0 %v3319
  %3386 = vmatprep.subr.mxu0 0.0
  %3387 = vmatpush2.msra.mxu0 %v3314
  %3388 = vmatprep.subr.mxu0 0.0
  %3389 = vmatpush2.msra.mxu0 %v3309
  %3390 = vmatprep.subr.mxu0 0.0
  %3391 = vmatpush2.msra.mxu0 %v3304
  %3392 = vmatprep.subr.mxu0 0.0
  %3393 = vmatpush2.msra.mxu0 %v3299
  %3394 = vmatprep.subr.mxu0 0.0
  %3395 = vmatpush2.msra.mxu0 %v3294
  %3396 = vmatprep.subr.mxu0 0.0
  %3397 = vmatpush2.msra.mxu0 %v3289
  %3398 = vmatprep.subr.mxu0 0.0
  %3399 = vmatpush2.msra.mxu0 %v3284
  %3400 = vmatprep.subr.mxu0 0.0
  %3401 = vmatpush2.msra.mxu0 %v3279
  %3402 = vmatprep.subr.mxu0 0.0
  %3403 = vmatpush2.msra.mxu0 %v3274
  %3404 = vmatprep.subr.mxu0 0.0
  %3405 = vmatpush2.msra.mxu0 %v3269
  %3406 = vmatprep.subr.mxu0 0.0
  %3407 = vmatpush2.msra.mxu0 %v3264
  %3408 = vmatprep.subr.mxu0 0.0
  %3409 = vmatpush2.msra.mxu0 %v3259
  %3410 = vmatprep.subr.mxu0 0.0
  %3411 = vmatpush2.msra.mxu0 %v3254
  %3412 = vmatprep.mubr.f32.mxu0 %v3333
  %3413 = vmatmul.mubr.f32.gmra.mxu0 %v3332
  %v3414 = vpop.f32.mrf.mxu0
  %v3415 = vadd.f32 %v3341, %v3414
  %v3416 = vpop.f32.mrf.mxu0
  %3417 = vmatprep.mubr.f32.mxu0 %v3335
  %3418 = vmatmul.mubr.f32.gmra.mxu0 %v3334
  %v3419 = vpop.f32.mrf.mxu0
  %v3420 = vadd.f32 %v3346, %v3419
  %v3421 = vpop.f32.mrf.mxu0
  %3422 = vdwg.mxu0
  %vm3423 = vcmask 15360
  %3424 = vst.msk [vmem:[%s20] sm:$0xff] %vm3423, %v3415
  %vm3425 = vcmask 9216
  %3426 = vst.msk [vmem:[%s20 + $0x8] sm:$0x3] %vm3425, %v3420
  // Predicated region
  $region82: #{forward.1} parent=0 // pred_check
    _
  $region83: #{forward.1} parent=0 // pred_check_branch
    %3428 = sbr.rel (0) target = $region85
  $region84: #{forward.1} parent=0 // pred_region
    _
  $region85: #{forward.1} parent=0 // pred_fallthru
    _
  // Predicated region
  $region86: #{forward.1} parent=0 // pred_check
    _
  $region87: #{forward.1} parent=0 // pred_check_branch
    %3430 = sbr.rel (0) target = $region89
  $region88: #{forward.1} parent=0 // pred_region
    _
  $region89: #{forward.1} parent=0 // pred_fallthru
    _
  // Predicated region
  $region90: #{forward.1} parent=0 // pred_check
    _
  $region91: #{forward.1} parent=0 // pred_check_branch
    %3432 = sbr.rel (0) target = $region93
  $region92: #{forward.1} parent=0 // pred_region
    _
  $region93: #{forward.1} parent=0 // pred_fallthru
    _
  // Predicated region
  $region94: #{forward.1} parent=0 // pred_check
    _
  $region95: #{forward.1} parent=0 // pred_check_branch
    %3434 = sbr.rel (0) target = $region97
  $region96: #{forward.1} parent=0 // pred_region
    _
  $region97: #{forward.1} parent=0 // pred_fallthru
    _

</llo_original>
